<compile_context>
chip_gen: v6e
topology: v6e:2x2x1
jax: 0.10.0
libtpu: 0.0.40
codegen_flags: <defaults>
</compile_context>

<pallas_src>
import functools
import math

import jax
import jax.numpy as jnp
from jax.experimental import pallas as pl
from jax.experimental.pallas import tpu as pltpu


_VMEM_LIMIT = 48 * 1024 * 1024   # > default 16/32 MiB scoped, < v7x's 64 MiB physical
_LN_EPS = 1e-5                   # PyTorch nn.LayerNorm default


# ------------------------------- small helpers --------------------------------

def _round_up(x, m):
    return (x + m - 1) // m * m


def _pad2d(x, rows, cols):
    r, c = x.shape
    if r == rows and c == cols:
        return x
    return jnp.pad(x, ((0, rows - r), (0, cols - c)))


def _gelu_tanh(h):
    # tanh-form GELU: the tanh lowers to the EUP slot (otherwise idle while the
    # MXU drains), shortening the epilogue VALU bundle count.
    c = 0.7978845608028654  # sqrt(2/pi)
    return 0.5 * h * (1.0 + jnp.tanh(c * (h + 0.044715 * h * h * h)))


def _layernorm(h, gamma, beta, n_real):
    # h: (rows, n_pad) f32.  Padded columns of h are exactly zero (zero-padded
    # weights / bias / residual), so sums over the padded width equal sums over
    # the real width; a mask keeps the variance exact under padding.
    n_pad = h.shape[-1]
    inv_n = 1.0 / n_real
    mask = None
    if n_pad != n_real:
        col = jax.lax.broadcasted_iota(jnp.int32, h.shape, h.ndim - 1)
        mask = (col < n_real).astype(jnp.float32)
        h = h * mask
    mu = jnp.sum(h, axis=-1, keepdims=True) * inv_n
    xc = h - mu
    if mask is not None:
        xc = xc * mask
    var = jnp.sum(xc * xc, axis=-1, keepdims=True) * inv_n
    inv = jax.lax.rsqrt(var + _LN_EPS)
    return xc * inv * gamma + beta


# ------------------------------- Pallas kernels --------------------------------

def _matmul_kernel(x_ref, w_ref, b_ref, o_ref, acc_ref, *, activation):
    # o = act(x @ w + b), K-reduction on grid axis 2, f32 accumulator in VMEM.
    k = pl.program_id(2)

    @pl.when(k == 0)
    def _():
        acc_ref[...] = jnp.zeros_like(acc_ref)

    acc_ref[...] += jnp.dot(x_ref[...], w_ref[...],
                            preferred_element_type=jnp.float32)

    @pl.when(k == pl.num_programs(2) - 1)
    def _():
        h = acc_ref[...] + b_ref[...]
        if activation == "gelu":
            h = _gelu_tanh(h)
        o_ref[...] = h.astype(o_ref.dtype)


def _matmul_res_ln_kernel(x_ref, w_ref, b_ref, res_ref, g_ref, beta_ref,
                          o_ref, acc_ref, *, n_real):
    # o = LayerNorm(x @ w + b + res): residual-add + LN fused into the epilogue.
    k = pl.program_id(1)

    @pl.when(k == 0)
    def _():
        acc_ref[...] = jnp.zeros_like(acc_ref)

    acc_ref[...] += jnp.dot(x_ref[...], w_ref[...],
                            preferred_element_type=jnp.float32)

    @pl.when(k == pl.num_programs(1) - 1)
    def _():
        h = acc_ref[...] + b_ref[...] + res_ref[...].astype(jnp.float32)
        o_ref[...] = _layernorm(h, g_ref[...], beta_ref[...], n_real).astype(o_ref.dtype)


def _layernorm_kernel(x_ref, g_ref, b_ref, o_ref, *, n_real):
    x = x_ref[...].astype(jnp.float32)
    o_ref[...] = _layernorm(x, g_ref[...], b_ref[...], n_real).astype(o_ref.dtype)


def _attention_kernel(q_ref, k_ref, v_ref, o_ref, *, scale):
    # q,k,v: (bh_tile, L, d)  ->  softmax(q k^T * scale) v  per batched head.
    q = q_ref[...]
    k = k_ref[...]
    v = v_ref[...]
    s = jnp.einsum("bld,bmd->blm", q, k,
                   preferred_element_type=jnp.float32) * scale
    s = s - jnp.max(s, axis=-1, keepdims=True)
    p = jnp.exp(s)
    p = p * pl.reciprocal(jnp.sum(p, axis=-1, keepdims=True), approx=True)
    o_ref[...] = jnp.einsum("blm,bmd->bld", p.astype(v.dtype), v,
                            preferred_element_type=jnp.float32).astype(o_ref.dtype)


# ------------------------------ kernel wrappers --------------------------------

def pallas_linear(x, w, b, *, activation=None, out_dtype=jnp.bfloat16,
                  tm=512, tn=512, tk=1024):
    M, K = x.shape
    Kw, N = w.shape
    assert K == Kw
    tm = min(tm, _round_up(M, 8))
    tn = min(tn, _round_up(N, 128))
    tk = min(tk, _round_up(K, 128))
    Mp, Np, Kp = _round_up(M, tm), _round_up(N, tn), _round_up(K, tk)

    xp = _pad2d(x, Mp, Kp)
    wp = _pad2d(w, Kp, Np)
    bp = _pad2d(b.astype(jnp.float32).reshape(1, N), 1, Np)

    # TODO(synk): on v5e a deeper weight-stream pipeline (pipeline_mode=pl.Buffered(3)
    # on the w spec) and on v7x fp8 fc_out weights would help further; not applied
    # here to keep one portable code path.
    out = pl.pallas_call(
        functools.partial(_matmul_kernel, activation=activation),
        out_shape=jax.ShapeDtypeStruct((Mp, Np), out_dtype),
        grid_spec=pltpu.PrefetchScalarGridSpec(
            num_scalar_prefetch=0,
            grid=(Mp // tm, Np // tn, Kp // tk),
            in_specs=[pl.BlockSpec((tm, tk), lambda i, j, k: (i, k)),
                      pl.BlockSpec((tk, tn), lambda i, j, k: (k, j)),
                      pl.BlockSpec((1, tn), lambda i, j, k: (0, j))],
            out_specs=pl.BlockSpec((tm, tn), lambda i, j, k: (i, j)),
            scratch_shapes=[pltpu.VMEM((tm, tn), jnp.float32)]),
        compiler_params=pltpu.CompilerParams(
            dimension_semantics=("parallel", "parallel", "arbitrary"),
            vmem_limit_bytes=_VMEM_LIMIT),
        cost_estimate=pl.CostEstimate(
            flops=2 * M * N * K,
            transcendentals=(M * N if activation == "gelu" else 0),
            bytes_accessed=(M * K * x.dtype.itemsize + K * N * w.dtype.itemsize
                            + M * N * jnp.dtype(out_dtype).itemsize)),
    )(xp, wp, bp)
    if (Mp, Np) != (M, N):
        out = out[:M, :N]
    return out


def pallas_linear_res_ln(x, w, b, res, gamma, beta, *, out_dtype=jnp.bfloat16,
                         tm=256, tk=1024):
    M, K = x.shape
    Kw, N = w.shape
    assert K == Kw and res.shape == (M, N)
    Np = _round_up(N, 128)          # LayerNorm needs the full feature dim in one tile
    tk = min(tk, _round_up(K, 128))
    # Keep the full-feature-width-resident fused kernel safe on v7x's 64 MiB VMEM:
    # shrink tm / tk while the rough footprint (acc f32 + double-buffered res/out
    # bf16, all (tm,Np); double-buffered w bf16 (tk,Np)) is too large.
    while tm > 64 and tm * Np * (4 + 4 * 2) > (12 << 20):
        tm //= 2
    while tk > 256 and 2 * tk * Np * 2 > (16 << 20):
        tk //= 2
    tm = min(tm, _round_up(M, 8))
    Mp, Kp = _round_up(M, tm), _round_up(K, tk)

    xp = _pad2d(x, Mp, Kp)
    wp = _pad2d(w, Kp, Np)
    bp = _pad2d(b.astype(jnp.float32).reshape(1, N), 1, Np)
    rp = _pad2d(res, Mp, Np)
    gp = _pad2d(gamma.astype(jnp.float32).reshape(1, N), 1, Np)
    betap = _pad2d(beta.astype(jnp.float32).reshape(1, N), 1, Np)

    out = pl.pallas_call(
        functools.partial(_matmul_res_ln_kernel, n_real=N),
        out_shape=jax.ShapeDtypeStruct((Mp, Np), out_dtype),
        grid_spec=pltpu.PrefetchScalarGridSpec(
            num_scalar_prefetch=0,
            grid=(Mp // tm, Kp // tk),
            in_specs=[pl.BlockSpec((tm, tk), lambda i, k: (i, k)),
                      pl.BlockSpec((tk, Np), lambda i, k: (k, 0)),
                      pl.BlockSpec((1, Np), lambda i, k: (0, 0)),
                      pl.BlockSpec((tm, Np), lambda i, k: (i, 0)),
                      pl.BlockSpec((1, Np), lambda i, k: (0, 0)),
                      pl.BlockSpec((1, Np), lambda i, k: (0, 0))],
            out_specs=pl.BlockSpec((tm, Np), lambda i, k: (i, 0)),
            scratch_shapes=[pltpu.VMEM((tm, Np), jnp.float32)]),
        compiler_params=pltpu.CompilerParams(
            dimension_semantics=("parallel", "arbitrary"),
            vmem_limit_bytes=_VMEM_LIMIT),
        cost_estimate=pl.CostEstimate(
            flops=2 * M * N * K,
            transcendentals=0,
            bytes_accessed=(M * K * x.dtype.itemsize + K * N * w.dtype.itemsize
                            + 2 * M * N * res.dtype.itemsize)),
    )(xp, wp, bp, rp, gp, betap)
    if (Mp, Np) != (M, N):
        out = out[:M, :N]
    return out


def pallas_layernorm(x, gamma, beta, *, out_dtype=jnp.bfloat16, tm=512):
    M, N = x.shape
    tm = min(tm, _round_up(M, 8))
    Mp, Np = _round_up(M, tm), _round_up(N, 128)
    xp = _pad2d(x, Mp, Np)
    gp = _pad2d(gamma.astype(jnp.float32).reshape(1, N), 1, Np)
    bp = _pad2d(beta.astype(jnp.float32).reshape(1, N), 1, Np)
    out = pl.pallas_call(
        functools.partial(_layernorm_kernel, n_real=N),
        out_shape=jax.ShapeDtypeStruct((Mp, Np), out_dtype),
        grid_spec=pltpu.PrefetchScalarGridSpec(
            num_scalar_prefetch=0,
            grid=(Mp // tm,),
            in_specs=[pl.BlockSpec((tm, Np), lambda i: (i, 0)),
                      pl.BlockSpec((1, Np), lambda i: (0, 0)),
                      pl.BlockSpec((1, Np), lambda i: (0, 0))],
            out_specs=pl.BlockSpec((tm, Np), lambda i: (i, 0))),
        compiler_params=pltpu.CompilerParams(
            dimension_semantics=("parallel",),
            vmem_limit_bytes=_VMEM_LIMIT),
    )(xp, gp, bp)
    if (Mp, Np) != (M, N):
        out = out[:M, :N]
    return out


def pallas_attention(q, k, v, scale, *, bh_tile=256):
    BH, L, d = q.shape
    # True head dim kept as a full-extent last block dim (no 128-lane zero padding
    # -> no extra q/k/v/o HBM traffic); only the batched-head axis is tiled/padded.
    Lp = _round_up(L, 8)
    dp = _round_up(d, 128)   # VMEM-internal tile padding only, for the budget estimate
    per_bh_bytes = 4 * 2 * Lp * dp * 2 + 4 * Lp * Lp   # q/k/v/o double-buffered + scores
    bh_budget = (24 << 20) // max(per_bh_bytes, 1)
    bh_tile = max(8, min(bh_tile, bh_budget))
    bh_tile = min(bh_tile, _round_up(BH, 8))
    BHp = _round_up(BH, bh_tile)
    # Give v7x's two TensorCores >= 2 parallel blocks when there is enough work.
    if BHp // bh_tile == 1 and bh_tile >= 16:
        bh_tile //= 2
        BHp = _round_up(BH, bh_tile)

    def pad(t):
        if BHp == BH:
            return t
        return jnp.pad(t, ((0, BHp - BH), (0, 0), (0, 0)))

    qp, kp, vp = pad(q), pad(k), pad(v)
    spec = pl.BlockSpec((bh_tile, L, d), lambda i: (i, 0, 0))
    out = pl.pallas_call(
        functools.partial(_attention_kernel, scale=scale),
        out_shape=jax.ShapeDtypeStruct((BHp, L, d), q.dtype),
        grid_spec=pltpu.PrefetchScalarGridSpec(
            num_scalar_prefetch=0,
            grid=(BHp // bh_tile,),
            in_specs=[spec, spec, spec],
            out_specs=spec),
        compiler_params=pltpu.CompilerParams(
            dimension_semantics=("parallel",),
            vmem_limit_bytes=_VMEM_LIMIT),
    )(qp, kp, vp)
    if BHp != BH:
        out = out[:BH]
    return out


# --------------------------------- GPT forward ---------------------------------

def gpt_forward(tokens, params, *, heads):
    B, S = tokens.shape
    E = params["tok_emb"].shape[1]
    H = heads
    d = E // H

    # TODO(synk): embedding lookup is a data-dependent gather; kept in plain JAX glue.
    x = (params["tok_emb"][tokens]
         + params["pos_emb"][jnp.arange(S)][None, :, :]).astype(jnp.bfloat16)
    # dropout: eval-mode identity

    # nn.MultiheadAttention (batch_first=False) sees (L=B, N=S, E)
    L, N = B, S
    x_flat = x.reshape(L * N, E)
    for blk in params["blocks"]:
        # packed in-projection (q|k|v)
        qkv = pallas_linear(x_flat, blk["in_proj_w"], blk["in_proj_b"])   # (L*N, 3E)

        # TODO(synk): head split/merge kept as XLA glue, but collapsed to a single
        # transpose of the packed (L,N,3,H,d) tensor instead of three per layer.
        qkv_t = qkv.reshape(L, N, 3, H, d).transpose(2, 1, 3, 0, 4)       # (3,N,H,L,d)
        q = qkv_t[0].reshape(N * H, L, d)
        k = qkv_t[1].reshape(N * H, L, d)
        v = qkv_t[2].reshape(N * H, L, d)

        attn = pallas_attention(q, k, v, 1.0 / math.sqrt(d))             # (N*H, L, d)
        attn = attn.reshape(N, H, L, d).transpose(2, 0, 1, 3).reshape(L * N, E)

        # out-projection + residual + LayerNorm1 fused into one kernel
        x1 = pallas_linear_res_ln(attn, blk["out_proj_w"], blk["out_proj_b"],
                                  x_flat, blk["ln1_g"], blk["ln1_b"])

        # feed-forward: Linear+GELU (fused epilogue) -> Linear+residual+LN2 (fused)
        h = pallas_linear(x1, blk["ff1_w"], blk["ff1_b"], activation="gelu")
        x_flat = pallas_linear_res_ln(h, blk["ff2_w"], blk["ff2_b"],
                                      x1, blk["ln2_g"], blk["ln2_b"])

    xf = pallas_layernorm(x_flat, params["ln_f_g"], params["ln_f_b"])
    logits = pallas_linear(xf, params["fc_out_w"], params["fc_out_b"],
                           out_dtype=jnp.float32)
    return logits.reshape(B, S, -1)


# ------------------------------ parameter setup ---------------------------------

def init_params(key, vocab_size, embed_size, num_layers, heads, max_seq_len, ff_mult):
    keys = jax.random.split(key, 4 + num_layers)

    def normal(k, shape, scale=0.02):
        # weights: bf16 (MXU-native), stored pre-transposed as (K, N)
        return (scale * jax.random.normal(k, shape)).astype(jnp.bfloat16)

    E = embed_size
    F = ff_mult * E
    params = {
        "tok_emb": normal(keys[0], (vocab_size, E)),
        "pos_emb": normal(keys[1], (max_seq_len, E)),
        "ln_f_g": jnp.ones((E,), jnp.float32),
        "ln_f_b": jnp.zeros((E,), jnp.float32),
        "fc_out_w": normal(keys[2], (E, vocab_size)),     # (K, N)
        "fc_out_b": jnp.zeros((vocab_size,), jnp.float32),
        "blocks": [],
    }
    for i in range(num_layers):
        ks = jax.random.split(keys[4 + i], 4)
        params["blocks"].append({
            "in_proj_w": normal(ks[0], (E, 3 * E)),       # (K, N)
            "in_proj_b": jnp.zeros((3 * E,), jnp.float32),
            "out_proj_w": normal(ks[1], (E, E)),
            "out_proj_b": jnp.zeros((E,), jnp.float32),
            "ln1_g": jnp.ones((E,), jnp.float32),
            "ln1_b": jnp.zeros((E,), jnp.float32),
            "ln2_g": jnp.ones((E,), jnp.float32),
            "ln2_b": jnp.zeros((E,), jnp.float32),
            "ff1_w": normal(ks[2], (E, F)),
            "ff1_b": jnp.zeros((F,), jnp.float32),
            "ff2_w": normal(ks[3], (F, E)),
            "ff2_b": jnp.zeros((E,), jnp.float32),
        })
    return params


# ------------------------------------ main --------------------------------------

if __name__ == "__main__":
    vocab_size, embed_size, num_layers, heads, max_seq_len = 64, 32, 2, 4, 16
    batch, seq = 2, 8

    key = jax.random.PRNGKey(0)
    pkey, tkey = jax.random.split(key)
    params = init_params(pkey, vocab_size, embed_size, num_layers, heads,
                         max_seq_len, ff_mult=4)
    tokens = jax.random.randint(tkey, (batch, seq), 0, vocab_size, dtype=jnp.int32)

    fwd = jax.jit(functools.partial(gpt_forward, heads=heads))
    logits = jax.block_until_ready(fwd(tokens, params))

    assert logits.shape == (batch, seq, vocab_size), logits.shape
    assert bool(jnp.all(jnp.isfinite(logits)))
    print("KERNEL_OK")
</pallas_src>

<mosaic_0001>
module attributes {stable_mosaic.version = 11 : i64} {
  func.func @_matmul_kernel(%arg0: i32, %arg1: i32, %arg2: i32, %arg3: memref<16x128xbf16, #tpu.memory_space<vmem>>, %arg4: memref<128x128xbf16, #tpu.memory_space<vmem>>, %arg5: memref<1x128xf32, #tpu.memory_space<vmem>>, %arg6: memref<16x128xbf16, #tpu.memory_space<vmem>>, %arg7: memref<16x128xf32, #tpu.memory_space<vmem>>) attributes {dimension_semantics = [#tpu.dimension_semantics<parallel>, #tpu.dimension_semantics<parallel>, #tpu.dimension_semantics<arbitrary>], iteration_bounds = array<i64: 1, 1, 1>, scalar_prefetch = 0 : i64, scratch_operands = 1 : i64, tpu.core_type = #tpu.core_type<tc>, window_params = [{transform_indices = @transform_0, window_bounds = array<i64: 16, 128>}, {transform_indices = @transform_1, window_bounds = array<i64: 128, 128>}, {transform_indices = @transform_2, window_bounds = array<i64: 1, 128>}, {transform_indices = @transform_3, window_bounds = array<i64: 16, 128>}]} {
    %c0_i32 = arith.constant 0 : i32
    %0 = arith.cmpi eq, %arg2, %c0_i32 : i32
    %1 = arith.extui %0 : i1 to i32
    %c0_i32_0 = arith.constant 0 : i32
    %2 = arith.cmpi ne, %1, %c0_i32_0 : i32
    scf.if %2 {
      %cst_10 = arith.constant 0.000000e+00 : f32
      %12 = vector.broadcast %cst_10 : f32 to vector<16x128xf32>
      %c0_11 = arith.constant 0 : index
      %c0_12 = arith.constant 0 : index
      %13 = vector.load %arg7[%c0_11, %c0_12] : memref<16x128xf32, #tpu.memory_space<vmem>>, vector<16x128xf32>
      tpu.vector_store %arg7[%c0_11, %c0_12], %12 {strides = array<i32>} : memref<16x128xf32, #tpu.memory_space<vmem>>, vector<16x128xf32>,
    } else {
    }
    %c0 = arith.constant 0 : index
    %c0_1 = arith.constant 0 : index
    %3 = vector.load %arg7[%c0, %c0_1] : memref<16x128xf32, #tpu.memory_space<vmem>>, vector<16x128xf32>
    %c0_2 = arith.constant 0 : index
    %c0_3 = arith.constant 0 : index
    %4 = vector.load %arg3[%c0_2, %c0_3] : memref<16x128xbf16, #tpu.memory_space<vmem>>, vector<16x128xbf16>
    %c0_4 = arith.constant 0 : index
    %c0_5 = arith.constant 0 : index
    %5 = vector.load %arg4[%c0_4, %c0_5] : memref<128x128xbf16, #tpu.memory_space<vmem>>, vector<128x128xbf16>
    %cst = arith.constant dense<0.000000e+00> : vector<16x128xf32>
    %6 = tpu.matmul %4, %5, %cst {dimension_numbers = #tpu.dot_dimension_numbers<[1], [0], [0], [1], [0, 0, 1, 1], [], []>} : vector<16x128xbf16>, vector<128x128xbf16>, vector<16x128xf32> -> vector<16x128xf32>
    %7 = arith.addf %3, %6 : vector<16x128xf32>
    %c0_6 = arith.constant 0 : index
    %c0_7 = arith.constant 0 : index
    %8 = vector.load %arg7[%c0_6, %c0_7] : memref<16x128xf32, #tpu.memory_space<vmem>>, vector<16x128xf32>
    tpu.vector_store %arg7[%c0_6, %c0_7], %7 {strides = array<i32>} : memref<16x128xf32, #tpu.memory_space<vmem>>, vector<16x128xf32>,
    %c0_i32_8 = arith.constant 0 : i32
    %9 = arith.cmpi eq, %arg2, %c0_i32_8 : i32
    %10 = arith.extui %9 : i1 to i32
    %c0_i32_9 = arith.constant 0 : i32
    %11 = arith.cmpi ne, %10, %c0_i32_9 : i32
    scf.if %11 {
      %c0_10 = arith.constant 0 : index
      %c0_11 = arith.constant 0 : index
      %12 = vector.load %arg7[%c0_10, %c0_11] : memref<16x128xf32, #tpu.memory_space<vmem>>, vector<16x128xf32>
      %c0_12 = arith.constant 0 : index
      %c0_13 = arith.constant 0 : index
      %13 = vector.load %arg5[%c0_12, %c0_13] : memref<1x128xf32, #tpu.memory_space<vmem>>, vector<1x128xf32>
      %14 = vector.broadcast %13 : vector<1x128xf32> to vector<16x128xf32>
      %15 = arith.addf %12, %14 : vector<16x128xf32>
      %16 = arith.truncf %15 : vector<16x128xf32> to vector<16x128xbf16>
      %c0_14 = arith.constant 0 : index
      %c0_15 = arith.constant 0 : index
      %17 = vector.load %arg6[%c0_14, %c0_15] : memref<16x128xbf16, #tpu.memory_space<vmem>>, vector<16x128xbf16>
      tpu.vector_store %arg6[%c0_14, %c0_15], %16 {strides = array<i32>} : memref<16x128xbf16, #tpu.memory_space<vmem>>, vector<16x128xbf16>,
    } else {
    }
    return
  }
  func.func @transform_0(%arg0: i32, %arg1: i32, %arg2: i32) -> (i32, i32) {
    %c0_i32 = arith.constant 0 : i32
    return %arg0, %arg2 : i32, i32
  }
  func.func @transform_1(%arg0: i32, %arg1: i32, %arg2: i32) -> (i32, i32) {
    %c0_i32 = arith.constant 0 : i32
    return %arg2, %arg1 : i32, i32
  }
  func.func @transform_2(%arg0: i32, %arg1: i32, %arg2: i32) -> (i32, i32) {
    %c0_i32 = arith.constant 0 : i32
    %c0_i32_0 = arith.constant 0 : i32
    return %c0_i32, %arg1 : i32, i32
  }
  func.func @transform_3(%arg0: i32, %arg1: i32, %arg2: i32) -> (i32, i32) {
    %c0_i32 = arith.constant 0 : i32
    return %arg0, %arg1 : i32, i32
  }
}

module attributes {stable_mosaic.version = 11 : i64} {
  func.func @_attention_kernel(%arg0: i32, %arg1: memref<16x2x8xbf16, #tpu.memory_space<vmem>>, %arg2: memref<16x2x8xbf16, #tpu.memory_space<vmem>>, %arg3: memref<16x2x8xbf16, #tpu.memory_space<vmem>>, %arg4: memref<16x2x8xbf16, #tpu.memory_space<vmem>>) attributes {dimension_semantics = [#tpu.dimension_semantics<parallel>], iteration_bounds = array<i64: 2>, scalar_prefetch = 0 : i64, scratch_operands = 0 : i64, tpu.core_type = #tpu.core_type<tc>, window_params = [{transform_indices = @transform_0, window_bounds = array<i64: 16, 2, 8>}, {transform_indices = @transform_1, window_bounds = array<i64: 16, 2, 8>}, {transform_indices = @transform_2, window_bounds = array<i64: 16, 2, 8>}, {transform_indices = @transform_3, window_bounds = array<i64: 16, 2, 8>}]} {
    %c0 = arith.constant 0 : index
    %c0_0 = arith.constant 0 : index
    %c0_1 = arith.constant 0 : index
    %0 = vector.load %arg1[%c0, %c0_0, %c0_1] : memref<16x2x8xbf16, #tpu.memory_space<vmem>>, vector<16x2x8xbf16>
    %c0_2 = arith.constant 0 : index
    %c0_3 = arith.constant 0 : index
    %c0_4 = arith.constant 0 : index
    %1 = vector.load %arg2[%c0_2, %c0_3, %c0_4] : memref<16x2x8xbf16, #tpu.memory_space<vmem>>, vector<16x2x8xbf16>
    %c0_5 = arith.constant 0 : index
    %c0_6 = arith.constant 0 : index
    %c0_7 = arith.constant 0 : index
    %2 = vector.load %arg3[%c0_5, %c0_6, %c0_7] : memref<16x2x8xbf16, #tpu.memory_space<vmem>>, vector<16x2x8xbf16>
    "tpu.trace_start"() <{level = 10 : i32, message = "bld,bmd->blm"}> : () -> ()
    %cst = arith.constant dense<0.000000e+00> : vector<16x2x2xf32>
    %3 = tpu.matmul %0, %1, %cst {dimension_numbers = #tpu.dot_dimension_numbers<[2], [2], [1], [1], [0, 0, 0, 1, 1, 1], [0], [0]>} : vector<16x2x8xbf16>, vector<16x2x8xbf16>, vector<16x2x2xf32> -> vector<16x2x2xf32>
    "tpu.trace_stop"() : () -> ()
    %cst_8 = arith.constant 0.353553385 : f32
    %4 = vector.broadcast %cst_8 : f32 to vector<16x2x2xf32>
    %5 = arith.mulf %3, %4 : vector<16x2x2xf32>
    %cst_9 = arith.constant dense<0xFF800000> : vector<16x2xf32>
    %6 = vector.multi_reduction <maximumf>, %5, %cst_9 [2] : vector<16x2x2xf32> to vector<16x2xf32>
    %7 = vector.shape_cast %6 : vector<16x2xf32> to vector<16x2x1xf32>
    %8 = vector.broadcast %7 : vector<16x2x1xf32> to vector<16x2x2xf32>
    %9 = arith.subf %5, %8 : vector<16x2x2xf32>
    %10 = math.exp %9 : vector<16x2x2xf32>
    %cst_10 = arith.constant dense<0.000000e+00> : vector<16x2xf32>
    %11 = vector.multi_reduction <add>, %10, %cst_10 [2] : vector<16x2x2xf32> to vector<16x2xf32>
    %12 = vector.shape_cast %11 : vector<16x2xf32> to vector<16x2x1xf32>
    %13 = tpu.reciprocal %12 {approx = true} : vector<16x2x1xf32> -> vector<16x2x1xf32>
    %14 = vector.broadcast %13 : vector<16x2x1xf32> to vector<16x2x2xf32>
    %15 = arith.mulf %10, %14 : vector<16x2x2xf32>
    %16 = arith.truncf %15 : vector<16x2x2xf32> to vector<16x2x2xbf16>
    "tpu.trace_start"() <{level = 10 : i32, message = "blm,bmd->bld"}> : () -> ()
    %cst_11 = arith.constant dense<0.000000e+00> : vector<16x2x8xf32>
    %17 = tpu.matmul %16, %2, %cst_11 {dimension_numbers = #tpu.dot_dimension_numbers<[2], [1], [1], [2], [0, 0, 0, 1, 1, 2], [0], [0]>} : vector<16x2x2xbf16>, vector<16x2x8xbf16>, vector<16x2x8xf32> -> vector<16x2x8xf32>
    "tpu.trace_stop"() : () -> ()
    %18 = arith.truncf %17 : vector<16x2x8xf32> to vector<16x2x8xbf16>
    %c0_12 = arith.constant 0 : index
    %c0_13 = arith.constant 0 : index
    %c0_14 = arith.constant 0 : index
    %19 = vector.load %arg4[%c0_12, %c0_13, %c0_14] : memref<16x2x8xbf16, #tpu.memory_space<vmem>>, vector<16x2x8xbf16>
    tpu.vector_store %arg4[%c0_12, %c0_13, %c0_14], %18 {strides = array<i32>} : memref<16x2x8xbf16, #tpu.memory_space<vmem>>, vector<16x2x8xbf16>,
    return
  }
  func.func @transform_0(%arg0: i32) -> (i32, i32, i32) {
    %c0_i32 = arith.constant 0 : i32
    %c0_i32_0 = arith.constant 0 : i32
    %c0_i32_1 = arith.constant 0 : i32
    return %arg0, %c0_i32, %c0_i32_0 : i32, i32, i32
  }
  func.func @transform_1(%arg0: i32) -> (i32, i32, i32) {
    %c0_i32 = arith.constant 0 : i32
    %c0_i32_0 = arith.constant 0 : i32
    %c0_i32_1 = arith.constant 0 : i32
    return %arg0, %c0_i32, %c0_i32_0 : i32, i32, i32
  }
  func.func @transform_2(%arg0: i32) -> (i32, i32, i32) {
    %c0_i32 = arith.constant 0 : i32
    %c0_i32_0 = arith.constant 0 : i32
    %c0_i32_1 = arith.constant 0 : i32
    return %arg0, %c0_i32, %c0_i32_0 : i32, i32, i32
  }
  func.func @transform_3(%arg0: i32) -> (i32, i32, i32) {
    %c0_i32 = arith.constant 0 : i32
    %c0_i32_0 = arith.constant 0 : i32
    %c0_i32_1 = arith.constant 0 : i32
    return %arg0, %c0_i32, %c0_i32_0 : i32, i32, i32
  }
}

module attributes {stable_mosaic.version = 11 : i64} {
  func.func @_matmul_res_ln_kernel(%arg0: i32, %arg1: i32, %arg2: memref<16x128xbf16, #tpu.memory_space<vmem>>, %arg3: memref<128x128xbf16, #tpu.memory_space<vmem>>, %arg4: memref<1x128xf32, #tpu.memory_space<vmem>>, %arg5: memref<16x128xbf16, #tpu.memory_space<vmem>>, %arg6: memref<1x128xf32, #tpu.memory_space<vmem>>, %arg7: memref<1x128xf32, #tpu.memory_space<vmem>>, %arg8: memref<16x128xbf16, #tpu.memory_space<vmem>>, %arg9: memref<16x128xf32, #tpu.memory_space<vmem>>) attributes {dimension_semantics = [#tpu.dimension_semantics<parallel>, #tpu.dimension_semantics<arbitrary>], iteration_bounds = array<i64: 1, 1>, scalar_prefetch = 0 : i64, scratch_operands = 1 : i64, tpu.core_type = #tpu.core_type<tc>, window_params = [{transform_indices = @transform_0, window_bounds = array<i64: 16, 128>}, {transform_indices = @transform_1, window_bounds = array<i64: 128, 128>}, {pipeline_mode = #tpu.pipeline_mode<synchronous>, transform_indices = @transform_2, window_bounds = array<i64: 1, 128>}, {transform_indices = @transform_3, window_bounds = array<i64: 16, 128>}, {pipeline_mode = #tpu.pipeline_mode<synchronous>, transform_indices = @transform_4, window_bounds = array<i64: 1, 128>}, {pipeline_mode = #tpu.pipeline_mode<synchronous>, transform_indices = @transform_5, window_bounds = array<i64: 1, 128>}, {transform_indices = @transform_6, window_bounds = array<i64: 16, 128>}]} {
    %c0_i32 = arith.constant 0 : i32
    %0 = arith.cmpi eq, %arg1, %c0_i32 : i32
    %1 = arith.extui %0 : i1 to i32
    %c0_i32_0 = arith.constant 0 : i32
    %2 = arith.cmpi ne, %1, %c0_i32_0 : i32
    scf.if %2 {
      %cst_10 = arith.constant 0.000000e+00 : f32
      %12 = vector.broadcast %cst_10 : f32 to vector<16x128xf32>
      %c0_11 = arith.constant 0 : index
      %c0_12 = arith.constant 0 : index
      %13 = vector.load %arg9[%c0_11, %c0_12] : memref<16x128xf32, #tpu.memory_space<vmem>>, vector<16x128xf32>
      tpu.vector_store %arg9[%c0_11, %c0_12], %12 {strides = array<i32>} : memref<16x128xf32, #tpu.memory_space<vmem>>, vector<16x128xf32>,
    } else {
    }
    %c0 = arith.constant 0 : index
    %c0_1 = arith.constant 0 : index
    %3 = vector.load %arg9[%c0, %c0_1] : memref<16x128xf32, #tpu.memory_space<vmem>>, vector<16x128xf32>
    %c0_2 = arith.constant 0 : index
    %c0_3 = arith.constant 0 : index
    %4 = vector.load %arg2[%c0_2, %c0_3] : memref<16x128xbf16, #tpu.memory_space<vmem>>, vector<16x128xbf16>
    %c0_4 = arith.constant 0 : index
    %c0_5 = arith.constant 0 : index
    %5 = vector.load %arg3[%c0_4, %c0_5] : memref<128x128xbf16, #tpu.memory_space<vmem>>, vector<128x128xbf16>
    %cst = arith.constant dense<0.000000e+00> : vector<16x128xf32>
    %6 = tpu.matmul %4, %5, %cst {dimension_numbers = #tpu.dot_dimension_numbers<[1], [0], [0], [1], [0, 0, 1, 1], [], []>} : vector<16x128xbf16>, vector<128x128xbf16>, vector<16x128xf32> -> vector<16x128xf32>
    %7 = arith.addf %3, %6 : vector<16x128xf32>
    %c0_6 = arith.constant 0 : index
    %c0_7 = arith.constant 0 : index
    %8 = vector.load %arg9[%c0_6, %c0_7] : memref<16x128xf32, #tpu.memory_space<vmem>>, vector<16x128xf32>
    tpu.vector_store %arg9[%c0_6, %c0_7], %7 {strides = array<i32>} : memref<16x128xf32, #tpu.memory_space<vmem>>, vector<16x128xf32>,
    %c0_i32_8 = arith.constant 0 : i32
    %9 = arith.cmpi eq, %arg1, %c0_i32_8 : i32
    %10 = arith.extui %9 : i1 to i32
    %c0_i32_9 = arith.constant 0 : i32
    %11 = arith.cmpi ne, %10, %c0_i32_9 : i32
    scf.if %11 {
      %c0_10 = arith.constant 0 : index
      %c0_11 = arith.constant 0 : index
      %12 = vector.load %arg9[%c0_10, %c0_11] : memref<16x128xf32, #tpu.memory_space<vmem>>, vector<16x128xf32>
      %c0_12 = arith.constant 0 : index
      %c0_13 = arith.constant 0 : index
      %13 = vector.load %arg4[%c0_12, %c0_13] : memref<1x128xf32, #tpu.memory_space<vmem>>, vector<1x128xf32>
      %14 = vector.broadcast %13 : vector<1x128xf32> to vector<16x128xf32>
      %15 = arith.addf %12, %14 : vector<16x128xf32>
      %c0_14 = arith.constant 0 : index
      %c0_15 = arith.constant 0 : index
      %16 = vector.load %arg5[%c0_14, %c0_15] : memref<16x128xbf16, #tpu.memory_space<vmem>>, vector<16x128xbf16>
      %17 = arith.extf %16 : vector<16x128xbf16> to vector<16x128xf32>
      %18 = arith.addf %15, %17 : vector<16x128xf32>
      %c0_16 = arith.constant 0 : index
      %c0_17 = arith.constant 0 : index
      %19 = vector.load %arg6[%c0_16, %c0_17] : memref<1x128xf32, #tpu.memory_space<vmem>>, vector<1x128xf32>
      %c0_18 = arith.constant 0 : index
      %c0_19 = arith.constant 0 : index
      %20 = vector.load %arg7[%c0_18, %c0_19] : memref<1x128xf32, #tpu.memory_space<vmem>>, vector<1x128xf32>
      %21 = tpu.iota {dimensions = array<i32: 1>} : vector<16x128xi32>
      %c32_i32 = arith.constant 32 : i32
      %22 = vector.broadcast %c32_i32 : i32 to vector<16x128xi32>
      %23 = arith.cmpi slt, %21, %22 : vector<16x128xi32>
      %24 = arith.extui %23 : vector<16x128xi1> to vector<16x128xi32>
      %25 = arith.sitofp %24 : vector<16x128xi32> to vector<16x128xf32>
      %26 = arith.mulf %18, %25 : vector<16x128xf32>
      %cst_20 = arith.constant dense<0.000000e+00> : vector<16xf32>
      %27 = vector.multi_reduction <add>, %26, %cst_20 [1] : vector<16x128xf32> to vector<16xf32>
      %28 = vector.shape_cast %27 : vector<16xf32> to vector<16x1xf32>
      %cst_21 = arith.constant 3.125000e-02 : f32
      %29 = vector.broadcast %cst_21 : f32 to vector<16x1xf32>
      %30 = arith.mulf %28, %29 : vector<16x1xf32>
      %31 = vector.broadcast %30 : vector<16x1xf32> to vector<16x128xf32>
      %32 = arith.subf %26, %31 : vector<16x128xf32>
      %33 = arith.mulf %32, %25 : vector<16x128xf32>
      %34 = arith.mulf %33, %33 : vector<16x128xf32>
      %cst_22 = arith.constant dense<0.000000e+00> : vector<16xf32>
      %35 = vector.multi_reduction <add>, %34, %cst_22 [1] : vector<16x128xf32> to vector<16xf32>
      %36 = vector.shape_cast %35 : vector<16xf32> to vector<16x1xf32>
      %cst_23 = arith.constant 3.125000e-02 : f32
      %37 = vector.broadcast %cst_23 : f32 to vector<16x1xf32>
      %38 = arith.mulf %36, %37 : vector<16x1xf32>
      %cst_24 = arith.constant 9.99999974E-6 : f32
      %39 = vector.broadcast %cst_24 : f32 to vector<16x1xf32>
      %40 = arith.addf %38, %39 : vector<16x1xf32>
      %41 = math.rsqrt %40 : vector<16x1xf32>
      %42 = vector.broadcast %41 : vector<16x1xf32> to vector<16x128xf32>
      %43 = arith.mulf %33, %42 : vector<16x128xf32>
      %44 = vector.broadcast %19 : vector<1x128xf32> to vector<16x128xf32>
      %45 = arith.mulf %43, %44 : vector<16x128xf32>
      %46 = vector.broadcast %20 : vector<1x128xf32> to vector<16x128xf32>
      %47 = arith.addf %45, %46 : vector<16x128xf32>
      %48 = arith.truncf %47 : vector<16x128xf32> to vector<16x128xbf16>
      %c0_25 = arith.constant 0 : index
      %c0_26 = arith.constant 0 : index
      %49 = vector.load %arg8[%c0_25, %c0_26] : memref<16x128xbf16, #tpu.memory_space<vmem>>, vector<16x128xbf16>
      tpu.vector_store %arg8[%c0_25, %c0_26], %48 {strides = array<i32>} : memref<16x128xbf16, #tpu.memory_space<vmem>>, vector<16x128xbf16>,
    } else {
    }
    return
  }
  func.func @transform_0(%arg0: i32, %arg1: i32) -> (i32, i32) {
    %c0_i32 = arith.constant 0 : i32
    return %arg0, %arg1 : i32, i32
  }
  func.func @transform_1(%arg0: i32, %arg1: i32) -> (i32, i32) {
    %c0_i32 = arith.constant 0 : i32
    %c0_i32_0 = arith.constant 0 : i32
    return %arg1, %c0_i32 : i32, i32
  }
  func.func @transform_2(%arg0: i32, %arg1: i32) -> (i32, i32) {
    %c0_i32 = arith.constant 0 : i32
    %c0_i32_0 = arith.constant 0 : i32
    %c0_i32_1 = arith.constant 0 : i32
    return %c0_i32, %c0_i32_0 : i32, i32
  }
  func.func @transform_3(%arg0: i32, %arg1: i32) -> (i32, i32) {
    %c0_i32 = arith.constant 0 : i32
    %c0_i32_0 = arith.constant 0 : i32
    return %arg0, %c0_i32 : i32, i32
  }
  func.func @transform_4(%arg0: i32, %arg1: i32) -> (i32, i32) {
    %c0_i32 = arith.constant 0 : i32
    %c0_i32_0 = arith.constant 0 : i32
    %c0_i32_1 = arith.constant 0 : i32
    return %c0_i32, %c0_i32_0 : i32, i32
  }
  func.func @transform_5(%arg0: i32, %arg1: i32) -> (i32, i32) {
    %c0_i32 = arith.constant 0 : i32
    %c0_i32_0 = arith.constant 0 : i32
    %c0_i32_1 = arith.constant 0 : i32
    return %c0_i32, %c0_i32_0 : i32, i32
  }
  func.func @transform_6(%arg0: i32, %arg1: i32) -> (i32, i32) {
    %c0_i32 = arith.constant 0 : i32
    %c0_i32_0 = arith.constant 0 : i32
    return %arg0, %c0_i32 : i32, i32
  }
}

module attributes {stable_mosaic.version = 11 : i64} {
  func.func @_matmul_kernel(%arg0: i32, %arg1: i32, %arg2: i32, %arg3: memref<16x128xbf16, #tpu.memory_space<vmem>>, %arg4: memref<128x128xbf16, #tpu.memory_space<vmem>>, %arg5: memref<1x128xf32, #tpu.memory_space<vmem>>, %arg6: memref<16x128xbf16, #tpu.memory_space<vmem>>, %arg7: memref<16x128xf32, #tpu.memory_space<vmem>>) attributes {dimension_semantics = [#tpu.dimension_semantics<parallel>, #tpu.dimension_semantics<parallel>, #tpu.dimension_semantics<arbitrary>], iteration_bounds = array<i64: 1, 1, 1>, scalar_prefetch = 0 : i64, scratch_operands = 1 : i64, tpu.core_type = #tpu.core_type<tc>, window_params = [{transform_indices = @transform_0, window_bounds = array<i64: 16, 128>}, {transform_indices = @transform_1, window_bounds = array<i64: 128, 128>}, {transform_indices = @transform_2, window_bounds = array<i64: 1, 128>}, {transform_indices = @transform_3, window_bounds = array<i64: 16, 128>}]} {
    %c0_i32 = arith.constant 0 : i32
    %0 = arith.cmpi eq, %arg2, %c0_i32 : i32
    %1 = arith.extui %0 : i1 to i32
    %c0_i32_0 = arith.constant 0 : i32
    %2 = arith.cmpi ne, %1, %c0_i32_0 : i32
    scf.if %2 {
      %cst_10 = arith.constant 0.000000e+00 : f32
      %12 = vector.broadcast %cst_10 : f32 to vector<16x128xf32>
      %c0_11 = arith.constant 0 : index
      %c0_12 = arith.constant 0 : index
      %13 = vector.load %arg7[%c0_11, %c0_12] : memref<16x128xf32, #tpu.memory_space<vmem>>, vector<16x128xf32>
      tpu.vector_store %arg7[%c0_11, %c0_12], %12 {strides = array<i32>} : memref<16x128xf32, #tpu.memory_space<vmem>>, vector<16x128xf32>,
    } else {
    }
    %c0 = arith.constant 0 : index
    %c0_1 = arith.constant 0 : index
    %3 = vector.load %arg7[%c0, %c0_1] : memref<16x128xf32, #tpu.memory_space<vmem>>, vector<16x128xf32>
    %c0_2 = arith.constant 0 : index
    %c0_3 = arith.constant 0 : index
    %4 = vector.load %arg3[%c0_2, %c0_3] : memref<16x128xbf16, #tpu.memory_space<vmem>>, vector<16x128xbf16>
    %c0_4 = arith.constant 0 : index
    %c0_5 = arith.constant 0 : index
    %5 = vector.load %arg4[%c0_4, %c0_5] : memref<128x128xbf16, #tpu.memory_space<vmem>>, vector<128x128xbf16>
    %cst = arith.constant dense<0.000000e+00> : vector<16x128xf32>
    %6 = tpu.matmul %4, %5, %cst {dimension_numbers = #tpu.dot_dimension_numbers<[1], [0], [0], [1], [0, 0, 1, 1], [], []>} : vector<16x128xbf16>, vector<128x128xbf16>, vector<16x128xf32> -> vector<16x128xf32>
    %7 = arith.addf %3, %6 : vector<16x128xf32>
    %c0_6 = arith.constant 0 : index
    %c0_7 = arith.constant 0 : index
    %8 = vector.load %arg7[%c0_6, %c0_7] : memref<16x128xf32, #tpu.memory_space<vmem>>, vector<16x128xf32>
    tpu.vector_store %arg7[%c0_6, %c0_7], %7 {strides = array<i32>} : memref<16x128xf32, #tpu.memory_space<vmem>>, vector<16x128xf32>,
    %c0_i32_8 = arith.constant 0 : i32
    %9 = arith.cmpi eq, %arg2, %c0_i32_8 : i32
    %10 = arith.extui %9 : i1 to i32
    %c0_i32_9 = arith.constant 0 : i32
    %11 = arith.cmpi ne, %10, %c0_i32_9 : i32
    scf.if %11 {
      %c0_10 = arith.constant 0 : index
      %c0_11 = arith.constant 0 : index
      %12 = vector.load %arg7[%c0_10, %c0_11] : memref<16x128xf32, #tpu.memory_space<vmem>>, vector<16x128xf32>
      %c0_12 = arith.constant 0 : index
      %c0_13 = arith.constant 0 : index
      %13 = vector.load %arg5[%c0_12, %c0_13] : memref<1x128xf32, #tpu.memory_space<vmem>>, vector<1x128xf32>
      %14 = vector.broadcast %13 : vector<1x128xf32> to vector<16x128xf32>
      %15 = arith.addf %12, %14 : vector<16x128xf32>
      %cst_14 = arith.constant 5.000000e-01 : f32
      %16 = vector.broadcast %cst_14 : f32 to vector<16x128xf32>
      %17 = arith.mulf %16, %15 : vector<16x128xf32>
      %cst_15 = arith.constant 4.471500e-02 : f32
      %18 = vector.broadcast %cst_15 : f32 to vector<16x128xf32>
      %19 = arith.mulf %18, %15 : vector<16x128xf32>
      %20 = arith.mulf %19, %15 : vector<16x128xf32>
      %21 = arith.mulf %20, %15 : vector<16x128xf32>
      %22 = arith.addf %15, %21 : vector<16x128xf32>
      %cst_16 = arith.constant 0.797884583 : f32
      %23 = vector.broadcast %cst_16 : f32 to vector<16x128xf32>
      %24 = arith.mulf %23, %22 : vector<16x128xf32>
      %25 = math.tanh %24 : vector<16x128xf32>
      %cst_17 = arith.constant 1.000000e+00 : f32
      %26 = vector.broadcast %cst_17 : f32 to vector<16x128xf32>
      %27 = arith.addf %26, %25 : vector<16x128xf32>
      %28 = arith.mulf %17, %27 : vector<16x128xf32>
      %29 = arith.truncf %28 : vector<16x128xf32> to vector<16x128xbf16>
      %c0_18 = arith.constant 0 : index
      %c0_19 = arith.constant 0 : index
      %30 = vector.load %arg6[%c0_18, %c0_19] : memref<16x128xbf16, #tpu.memory_space<vmem>>, vector<16x128xbf16>
      tpu.vector_store %arg6[%c0_18, %c0_19], %29 {strides = array<i32>} : memref<16x128xbf16, #tpu.memory_space<vmem>>, vector<16x128xbf16>,
    } else {
    }
    return
  }
  func.func @transform_0(%arg0: i32, %arg1: i32, %arg2: i32) -> (i32, i32) {
    %c0_i32 = arith.constant 0 : i32
    return %arg0, %arg2 : i32, i32
  }
  func.func @transform_1(%arg0: i32, %arg1: i32, %arg2: i32) -> (i32, i32) {
    %c0_i32 = arith.constant 0 : i32
    return %arg2, %arg1 : i32, i32
  }
  func.func @transform_2(%arg0: i32, %arg1: i32, %arg2: i32) -> (i32, i32) {
    %c0_i32 = arith.constant 0 : i32
    %c0_i32_0 = arith.constant 0 : i32
    return %c0_i32, %arg1 : i32, i32
  }
  func.func @transform_3(%arg0: i32, %arg1: i32, %arg2: i32) -> (i32, i32) {
    %c0_i32 = arith.constant 0 : i32
    return %arg0, %arg1 : i32, i32
  }
}

module attributes {stable_mosaic.version = 11 : i64} {
  func.func @_matmul_res_ln_kernel(%arg0: i32, %arg1: i32, %arg2: memref<16x128xbf16, #tpu.memory_space<vmem>>, %arg3: memref<128x128xbf16, #tpu.memory_space<vmem>>, %arg4: memref<1x128xf32, #tpu.memory_space<vmem>>, %arg5: memref<16x128xbf16, #tpu.memory_space<vmem>>, %arg6: memref<1x128xf32, #tpu.memory_space<vmem>>, %arg7: memref<1x128xf32, #tpu.memory_space<vmem>>, %arg8: memref<16x128xbf16, #tpu.memory_space<vmem>>, %arg9: memref<16x128xf32, #tpu.memory_space<vmem>>) attributes {dimension_semantics = [#tpu.dimension_semantics<parallel>, #tpu.dimension_semantics<arbitrary>], iteration_bounds = array<i64: 1, 1>, scalar_prefetch = 0 : i64, scratch_operands = 1 : i64, tpu.core_type = #tpu.core_type<tc>, window_params = [{transform_indices = @transform_0, window_bounds = array<i64: 16, 128>}, {transform_indices = @transform_1, window_bounds = array<i64: 128, 128>}, {pipeline_mode = #tpu.pipeline_mode<synchronous>, transform_indices = @transform_2, window_bounds = array<i64: 1, 128>}, {transform_indices = @transform_3, window_bounds = array<i64: 16, 128>}, {pipeline_mode = #tpu.pipeline_mode<synchronous>, transform_indices = @transform_4, window_bounds = array<i64: 1, 128>}, {pipeline_mode = #tpu.pipeline_mode<synchronous>, transform_indices = @transform_5, window_bounds = array<i64: 1, 128>}, {transform_indices = @transform_6, window_bounds = array<i64: 16, 128>}]} {
    %c0_i32 = arith.constant 0 : i32
    %0 = arith.cmpi eq, %arg1, %c0_i32 : i32
    %1 = arith.extui %0 : i1 to i32
    %c0_i32_0 = arith.constant 0 : i32
    %2 = arith.cmpi ne, %1, %c0_i32_0 : i32
    scf.if %2 {
      %cst_10 = arith.constant 0.000000e+00 : f32
      %12 = vector.broadcast %cst_10 : f32 to vector<16x128xf32>
      %c0_11 = arith.constant 0 : index
      %c0_12 = arith.constant 0 : index
      %13 = vector.load %arg9[%c0_11, %c0_12] : memref<16x128xf32, #tpu.memory_space<vmem>>, vector<16x128xf32>
      tpu.vector_store %arg9[%c0_11, %c0_12], %12 {strides = array<i32>} : memref<16x128xf32, #tpu.memory_space<vmem>>, vector<16x128xf32>,
    } else {
    }
    %c0 = arith.constant 0 : index
    %c0_1 = arith.constant 0 : index
    %3 = vector.load %arg9[%c0, %c0_1] : memref<16x128xf32, #tpu.memory_space<vmem>>, vector<16x128xf32>
    %c0_2 = arith.constant 0 : index
    %c0_3 = arith.constant 0 : index
    %4 = vector.load %arg2[%c0_2, %c0_3] : memref<16x128xbf16, #tpu.memory_space<vmem>>, vector<16x128xbf16>
    %c0_4 = arith.constant 0 : index
    %c0_5 = arith.constant 0 : index
    %5 = vector.load %arg3[%c0_4, %c0_5] : memref<128x128xbf16, #tpu.memory_space<vmem>>, vector<128x128xbf16>
    %cst = arith.constant dense<0.000000e+00> : vector<16x128xf32>
    %6 = tpu.matmul %4, %5, %cst {dimension_numbers = #tpu.dot_dimension_numbers<[1], [0], [0], [1], [0, 0, 1, 1], [], []>} : vector<16x128xbf16>, vector<128x128xbf16>, vector<16x128xf32> -> vector<16x128xf32>
    %7 = arith.addf %3, %6 : vector<16x128xf32>
    %c0_6 = arith.constant 0 : index
    %c0_7 = arith.constant 0 : index
    %8 = vector.load %arg9[%c0_6, %c0_7] : memref<16x128xf32, #tpu.memory_space<vmem>>, vector<16x128xf32>
    tpu.vector_store %arg9[%c0_6, %c0_7], %7 {strides = array<i32>} : memref<16x128xf32, #tpu.memory_space<vmem>>, vector<16x128xf32>,
    %c0_i32_8 = arith.constant 0 : i32
    %9 = arith.cmpi eq, %arg1, %c0_i32_8 : i32
    %10 = arith.extui %9 : i1 to i32
    %c0_i32_9 = arith.constant 0 : i32
    %11 = arith.cmpi ne, %10, %c0_i32_9 : i32
    scf.if %11 {
      %c0_10 = arith.constant 0 : index
      %c0_11 = arith.constant 0 : index
      %12 = vector.load %arg9[%c0_10, %c0_11] : memref<16x128xf32, #tpu.memory_space<vmem>>, vector<16x128xf32>
      %c0_12 = arith.constant 0 : index
      %c0_13 = arith.constant 0 : index
      %13 = vector.load %arg4[%c0_12, %c0_13] : memref<1x128xf32, #tpu.memory_space<vmem>>, vector<1x128xf32>
      %14 = vector.broadcast %13 : vector<1x128xf32> to vector<16x128xf32>
      %15 = arith.addf %12, %14 : vector<16x128xf32>
      %c0_14 = arith.constant 0 : index
      %c0_15 = arith.constant 0 : index
      %16 = vector.load %arg5[%c0_14, %c0_15] : memref<16x128xbf16, #tpu.memory_space<vmem>>, vector<16x128xbf16>
      %17 = arith.extf %16 : vector<16x128xbf16> to vector<16x128xf32>
      %18 = arith.addf %15, %17 : vector<16x128xf32>
      %c0_16 = arith.constant 0 : index
      %c0_17 = arith.constant 0 : index
      %19 = vector.load %arg6[%c0_16, %c0_17] : memref<1x128xf32, #tpu.memory_space<vmem>>, vector<1x128xf32>
      %c0_18 = arith.constant 0 : index
      %c0_19 = arith.constant 0 : index
      %20 = vector.load %arg7[%c0_18, %c0_19] : memref<1x128xf32, #tpu.memory_space<vmem>>, vector<1x128xf32>
      %21 = tpu.iota {dimensions = array<i32: 1>} : vector<16x128xi32>
      %c32_i32 = arith.constant 32 : i32
      %22 = vector.broadcast %c32_i32 : i32 to vector<16x128xi32>
      %23 = arith.cmpi slt, %21, %22 : vector<16x128xi32>
      %24 = arith.extui %23 : vector<16x128xi1> to vector<16x128xi32>
      %25 = arith.sitofp %24 : vector<16x128xi32> to vector<16x128xf32>
      %26 = arith.mulf %18, %25 : vector<16x128xf32>
      %cst_20 = arith.constant dense<0.000000e+00> : vector<16xf32>
      %27 = vector.multi_reduction <add>, %26, %cst_20 [1] : vector<16x128xf32> to vector<16xf32>
      %28 = vector.shape_cast %27 : vector<16xf32> to vector<16x1xf32>
      %cst_21 = arith.constant 3.125000e-02 : f32
      %29 = vector.broadcast %cst_21 : f32 to vector<16x1xf32>
      %30 = arith.mulf %28, %29 : vector<16x1xf32>
      %31 = vector.broadcast %30 : vector<16x1xf32> to vector<16x128xf32>
      %32 = arith.subf %26, %31 : vector<16x128xf32>
      %33 = arith.mulf %32, %25 : vector<16x128xf32>
      %34 = arith.mulf %33, %33 : vector<16x128xf32>
      %cst_22 = arith.constant dense<0.000000e+00> : vector<16xf32>
      %35 = vector.multi_reduction <add>, %34, %cst_22 [1] : vector<16x128xf32> to vector<16xf32>
      %36 = vector.shape_cast %35 : vector<16xf32> to vector<16x1xf32>
      %cst_23 = arith.constant 3.125000e-02 : f32
      %37 = vector.broadcast %cst_23 : f32 to vector<16x1xf32>
      %38 = arith.mulf %36, %37 : vector<16x1xf32>
      %cst_24 = arith.constant 9.99999974E-6 : f32
      %39 = vector.broadcast %cst_24 : f32 to vector<16x1xf32>
      %40 = arith.addf %38, %39 : vector<16x1xf32>
      %41 = math.rsqrt %40 : vector<16x1xf32>
      %42 = vector.broadcast %41 : vector<16x1xf32> to vector<16x128xf32>
      %43 = arith.mulf %33, %42 : vector<16x128xf32>
      %44 = vector.broadcast %19 : vector<1x128xf32> to vector<16x128xf32>
      %45 = arith.mulf %43, %44 : vector<16x128xf32>
      %46 = vector.broadcast %20 : vector<1x128xf32> to vector<16x128xf32>
      %47 = arith.addf %45, %46 : vector<16x128xf32>
      %48 = arith.truncf %47 : vector<16x128xf32> to vector<16x128xbf16>
      %c0_25 = arith.constant 0 : index
      %c0_26 = arith.constant 0 : index
      %49 = vector.load %arg8[%c0_25, %c0_26] : memref<16x128xbf16, #tpu.memory_space<vmem>>, vector<16x128xbf16>
      tpu.vector_store %arg8[%c0_25, %c0_26], %48 {strides = array<i32>} : memref<16x128xbf16, #tpu.memory_space<vmem>>, vector<16x128xbf16>,
    } else {
    }
    return
  }
  func.func @transform_0(%arg0: i32, %arg1: i32) -> (i32, i32) {
    %c0_i32 = arith.constant 0 : i32
    return %arg0, %arg1 : i32, i32
  }
  func.func @transform_1(%arg0: i32, %arg1: i32) -> (i32, i32) {
    %c0_i32 = arith.constant 0 : i32
    %c0_i32_0 = arith.constant 0 : i32
    return %arg1, %c0_i32 : i32, i32
  }
  func.func @transform_2(%arg0: i32, %arg1: i32) -> (i32, i32) {
    %c0_i32 = arith.constant 0 : i32
    %c0_i32_0 = arith.constant 0 : i32
    %c0_i32_1 = arith.constant 0 : i32
    return %c0_i32, %c0_i32_0 : i32, i32
  }
  func.func @transform_3(%arg0: i32, %arg1: i32) -> (i32, i32) {
    %c0_i32 = arith.constant 0 : i32
    %c0_i32_0 = arith.constant 0 : i32
    return %arg0, %c0_i32 : i32, i32
  }
  func.func @transform_4(%arg0: i32, %arg1: i32) -> (i32, i32) {
    %c0_i32 = arith.constant 0 : i32
    %c0_i32_0 = arith.constant 0 : i32
    %c0_i32_1 = arith.constant 0 : i32
    return %c0_i32, %c0_i32_0 : i32, i32
  }
  func.func @transform_5(%arg0: i32, %arg1: i32) -> (i32, i32) {
    %c0_i32 = arith.constant 0 : i32
    %c0_i32_0 = arith.constant 0 : i32
    %c0_i32_1 = arith.constant 0 : i32
    return %c0_i32, %c0_i32_0 : i32, i32
  }
  func.func @transform_6(%arg0: i32, %arg1: i32) -> (i32, i32) {
    %c0_i32 = arith.constant 0 : i32
    %c0_i32_0 = arith.constant 0 : i32
    return %arg0, %c0_i32 : i32, i32
  }
}

module attributes {stable_mosaic.version = 11 : i64} {
  func.func @_matmul_kernel(%arg0: i32, %arg1: i32, %arg2: i32, %arg3: memref<16x128xbf16, #tpu.memory_space<vmem>>, %arg4: memref<128x128xbf16, #tpu.memory_space<vmem>>, %arg5: memref<1x128xf32, #tpu.memory_space<vmem>>, %arg6: memref<16x128xf32, #tpu.memory_space<vmem>>, %arg7: memref<16x128xf32, #tpu.memory_space<vmem>>) attributes {dimension_semantics = [#tpu.dimension_semantics<parallel>, #tpu.dimension_semantics<parallel>, #tpu.dimension_semantics<arbitrary>], iteration_bounds = array<i64: 1, 1, 1>, scalar_prefetch = 0 : i64, scratch_operands = 1 : i64, tpu.core_type = #tpu.core_type<tc>, window_params = [{transform_indices = @transform_0, window_bounds = array<i64: 16, 128>}, {transform_indices = @transform_1, window_bounds = array<i64: 128, 128>}, {transform_indices = @transform_2, window_bounds = array<i64: 1, 128>}, {transform_indices = @transform_3, window_bounds = array<i64: 16, 128>}]} {
    %c0_i32 = arith.constant 0 : i32
    %0 = arith.cmpi eq, %arg2, %c0_i32 : i32
    %1 = arith.extui %0 : i1 to i32
    %c0_i32_0 = arith.constant 0 : i32
    %2 = arith.cmpi ne, %1, %c0_i32_0 : i32
    scf.if %2 {
      %cst_10 = arith.constant 0.000000e+00 : f32
      %12 = vector.broadcast %cst_10 : f32 to vector<16x128xf32>
      %c0_11 = arith.constant 0 : index
      %c0_12 = arith.constant 0 : index
      %13 = vector.load %arg7[%c0_11, %c0_12] : memref<16x128xf32, #tpu.memory_space<vmem>>, vector<16x128xf32>
      tpu.vector_store %arg7[%c0_11, %c0_12], %12 {strides = array<i32>} : memref<16x128xf32, #tpu.memory_space<vmem>>, vector<16x128xf32>,
    } else {
    }
    %c0 = arith.constant 0 : index
    %c0_1 = arith.constant 0 : index
    %3 = vector.load %arg7[%c0, %c0_1] : memref<16x128xf32, #tpu.memory_space<vmem>>, vector<16x128xf32>
    %c0_2 = arith.constant 0 : index
    %c0_3 = arith.constant 0 : index
    %4 = vector.load %arg3[%c0_2, %c0_3] : memref<16x128xbf16, #tpu.memory_space<vmem>>, vector<16x128xbf16>
    %c0_4 = arith.constant 0 : index
    %c0_5 = arith.constant 0 : index
    %5 = vector.load %arg4[%c0_4, %c0_5] : memref<128x128xbf16, #tpu.memory_space<vmem>>, vector<128x128xbf16>
    %cst = arith.constant dense<0.000000e+00> : vector<16x128xf32>
    %6 = tpu.matmul %4, %5, %cst {dimension_numbers = #tpu.dot_dimension_numbers<[1], [0], [0], [1], [0, 0, 1, 1], [], []>} : vector<16x128xbf16>, vector<128x128xbf16>, vector<16x128xf32> -> vector<16x128xf32>
    %7 = arith.addf %3, %6 : vector<16x128xf32>
    %c0_6 = arith.constant 0 : index
    %c0_7 = arith.constant 0 : index
    %8 = vector.load %arg7[%c0_6, %c0_7] : memref<16x128xf32, #tpu.memory_space<vmem>>, vector<16x128xf32>
    tpu.vector_store %arg7[%c0_6, %c0_7], %7 {strides = array<i32>} : memref<16x128xf32, #tpu.memory_space<vmem>>, vector<16x128xf32>,
    %c0_i32_8 = arith.constant 0 : i32
    %9 = arith.cmpi eq, %arg2, %c0_i32_8 : i32
    %10 = arith.extui %9 : i1 to i32
    %c0_i32_9 = arith.constant 0 : i32
    %11 = arith.cmpi ne, %10, %c0_i32_9 : i32
    scf.if %11 {
      %c0_10 = arith.constant 0 : index
      %c0_11 = arith.constant 0 : index
      %12 = vector.load %arg7[%c0_10, %c0_11] : memref<16x128xf32, #tpu.memory_space<vmem>>, vector<16x128xf32>
      %c0_12 = arith.constant 0 : index
      %c0_13 = arith.constant 0 : index
      %13 = vector.load %arg5[%c0_12, %c0_13] : memref<1x128xf32, #tpu.memory_space<vmem>>, vector<1x128xf32>
      %14 = vector.broadcast %13 : vector<1x128xf32> to vector<16x128xf32>
      %15 = arith.addf %12, %14 : vector<16x128xf32>
      %c0_14 = arith.constant 0 : index
      %c0_15 = arith.constant 0 : index
      %16 = vector.load %arg6[%c0_14, %c0_15] : memref<16x128xf32, #tpu.memory_space<vmem>>, vector<16x128xf32>
      tpu.vector_store %arg6[%c0_14, %c0_15], %15 {strides = array<i32>} : memref<16x128xf32, #tpu.memory_space<vmem>>, vector<16x128xf32>,
    } else {
    }
    return
  }
  func.func @transform_0(%arg0: i32, %arg1: i32, %arg2: i32) -> (i32, i32) {
    %c0_i32 = arith.constant 0 : i32
    return %arg0, %arg2 : i32, i32
  }
  func.func @transform_1(%arg0: i32, %arg1: i32, %arg2: i32) -> (i32, i32) {
    %c0_i32 = arith.constant 0 : i32
    return %arg2, %arg1 : i32, i32
  }
  func.func @transform_2(%arg0: i32, %arg1: i32, %arg2: i32) -> (i32, i32) {
    %c0_i32 = arith.constant 0 : i32
    %c0_i32_0 = arith.constant 0 : i32
    return %c0_i32, %arg1 : i32, i32
  }
  func.func @transform_3(%arg0: i32, %arg1: i32, %arg2: i32) -> (i32, i32) {
    %c0_i32 = arith.constant 0 : i32
    return %arg0, %arg1 : i32, i32
  }
}

module attributes {stable_mosaic.version = 11 : i64} {
  func.func @_layernorm_kernel(%arg0: i32, %arg1: memref<16x128xbf16, #tpu.memory_space<vmem>>, %arg2: memref<1x128xf32, #tpu.memory_space<vmem>>, %arg3: memref<1x128xf32, #tpu.memory_space<vmem>>, %arg4: memref<16x128xbf16, #tpu.memory_space<vmem>>) attributes {dimension_semantics = [#tpu.dimension_semantics<parallel>], iteration_bounds = array<i64: 1>, scalar_prefetch = 0 : i64, scratch_operands = 0 : i64, tpu.core_type = #tpu.core_type<tc>, window_params = [{transform_indices = @transform_0, window_bounds = array<i64: 16, 128>}, {pipeline_mode = #tpu.pipeline_mode<synchronous>, transform_indices = @transform_1, window_bounds = array<i64: 1, 128>}, {pipeline_mode = #tpu.pipeline_mode<synchronous>, transform_indices = @transform_2, window_bounds = array<i64: 1, 128>}, {transform_indices = @transform_3, window_bounds = array<i64: 16, 128>}]} {
    %c0 = arith.constant 0 : index
    %c0_0 = arith.constant 0 : index
    %0 = vector.load %arg1[%c0, %c0_0] : memref<16x128xbf16, #tpu.memory_space<vmem>>, vector<16x128xbf16>
    %1 = arith.extf %0 : vector<16x128xbf16> to vector<16x128xf32>
    %c0_1 = arith.constant 0 : index
    %c0_2 = arith.constant 0 : index
    %2 = vector.load %arg2[%c0_1, %c0_2] : memref<1x128xf32, #tpu.memory_space<vmem>>, vector<1x128xf32>
    %c0_3 = arith.constant 0 : index
    %c0_4 = arith.constant 0 : index
    %3 = vector.load %arg3[%c0_3, %c0_4] : memref<1x128xf32, #tpu.memory_space<vmem>>, vector<1x128xf32>
    %4 = tpu.iota {dimensions = array<i32: 1>} : vector<16x128xi32>
    %c32_i32 = arith.constant 32 : i32
    %5 = vector.broadcast %c32_i32 : i32 to vector<16x128xi32>
    %6 = arith.cmpi slt, %4, %5 : vector<16x128xi32>
    %7 = arith.extui %6 : vector<16x128xi1> to vector<16x128xi32>
    %8 = arith.sitofp %7 : vector<16x128xi32> to vector<16x128xf32>
    %9 = arith.mulf %1, %8 : vector<16x128xf32>
    %cst = arith.constant dense<0.000000e+00> : vector<16xf32>
    %10 = vector.multi_reduction <add>, %9, %cst [1] : vector<16x128xf32> to vector<16xf32>
    %11 = vector.shape_cast %10 : vector<16xf32> to vector<16x1xf32>
    %cst_5 = arith.constant 3.125000e-02 : f32
    %12 = vector.broadcast %cst_5 : f32 to vector<16x1xf32>
    %13 = arith.mulf %11, %12 : vector<16x1xf32>
    %14 = vector.broadcast %13 : vector<16x1xf32> to vector<16x128xf32>
    %15 = arith.subf %9, %14 : vector<16x128xf32>
    %16 = arith.mulf %15, %8 : vector<16x128xf32>
    %17 = arith.mulf %16, %16 : vector<16x128xf32>
    %cst_6 = arith.constant dense<0.000000e+00> : vector<16xf32>
    %18 = vector.multi_reduction <add>, %17, %cst_6 [1] : vector<16x128xf32> to vector<16xf32>
    %19 = vector.shape_cast %18 : vector<16xf32> to vector<16x1xf32>
    %cst_7 = arith.constant 3.125000e-02 : f32
    %20 = vector.broadcast %cst_7 : f32 to vector<16x1xf32>
    %21 = arith.mulf %19, %20 : vector<16x1xf32>
    %cst_8 = arith.constant 9.99999974E-6 : f32
    %22 = vector.broadcast %cst_8 : f32 to vector<16x1xf32>
    %23 = arith.addf %21, %22 : vector<16x1xf32>
    %24 = math.rsqrt %23 : vector<16x1xf32>
    %25 = vector.broadcast %24 : vector<16x1xf32> to vector<16x128xf32>
    %26 = arith.mulf %16, %25 : vector<16x128xf32>
    %27 = vector.broadcast %2 : vector<1x128xf32> to vector<16x128xf32>
    %28 = arith.mulf %26, %27 : vector<16x128xf32>
    %29 = vector.broadcast %3 : vector<1x128xf32> to vector<16x128xf32>
    %30 = arith.addf %28, %29 : vector<16x128xf32>
    %31 = arith.truncf %30 : vector<16x128xf32> to vector<16x128xbf16>
    %c0_9 = arith.constant 0 : index
    %c0_10 = arith.constant 0 : index
    %32 = vector.load %arg4[%c0_9, %c0_10] : memref<16x128xbf16, #tpu.memory_space<vmem>>, vector<16x128xbf16>
    tpu.vector_store %arg4[%c0_9, %c0_10], %31 {strides = array<i32>} : memref<16x128xbf16, #tpu.memory_space<vmem>>, vector<16x128xbf16>,
    return
  }
  func.func @transform_0(%arg0: i32) -> (i32, i32) {
    %c0_i32 = arith.constant 0 : i32
    %c0_i32_0 = arith.constant 0 : i32
    return %arg0, %c0_i32 : i32, i32
  }
  func.func @transform_1(%arg0: i32) -> (i32, i32) {
    %c0_i32 = arith.constant 0 : i32
    %c0_i32_0 = arith.constant 0 : i32
    %c0_i32_1 = arith.constant 0 : i32
    return %c0_i32, %c0_i32_0 : i32, i32
  }
  func.func @transform_2(%arg0: i32) -> (i32, i32) {
    %c0_i32 = arith.constant 0 : i32
    %c0_i32_0 = arith.constant 0 : i32
    %c0_i32_1 = arith.constant 0 : i32
    return %c0_i32, %c0_i32_0 : i32, i32
  }
  func.func @transform_3(%arg0: i32) -> (i32, i32) {
    %c0_i32 = arith.constant 0 : i32
    %c0_i32_0 = arith.constant 0 : i32
    return %arg0, %c0_i32 : i32, i32
  }
}

</mosaic_0001>

<llo_original>
// kernel: gpt_forward.15
$region0: #{gpt_forward.15}
  #allocation0 [shape = 'u32[]', space=smem, size = 0x4, offset = 0x4, fixed_abs, tag = 'smem constant byte address 0x4 - core index']
  #allocation1 [shape = 'u32[144,128]{1,0:T(1,128)}', space=vmem, size = 0x12000, scoped, tag = 'internal scratch']
  #allocation2 [shape = 'f32[16,128]{1,0:T(8,128)}', space=vmem, size = 0x2000, scoped, tag = 'scratch operand']
  %s0 = inlined_call_operand.vmem [shape: bf16[16,128], index: 0, kind: input, shape index: {}]
  %s1 = inlined_call_operand.vmem [shape: bf16[128,128], index: 1, kind: input, shape index: {}]
  %s2 = inlined_call_operand.vmem [shape: f32[1,128], index: 2, kind: input, shape index: {}]
  %s3 = inlined_call_operand.vmem [shape: bf16[16,128], index: 3, kind: output, shape index: {}]
  %s4 = sld [smem:[#allocation0]]
  $region30: #{gpt_forward.15} parent=0
    _
  %s6 = ssub.s32 1, %s4
  %s7 = scalar_select 0, %s6, %s4
  // Predicated region
  $region2: #{gpt_forward.15} parent=0 // pred_check
    _
  $region3: #{gpt_forward.15} parent=0 // pred_check_branch
    %9 = sbr.rel (0) target = $region5
  $region4: #{gpt_forward.15} parent=0 // pred_region
    _
  $region5: #{gpt_forward.15} parent=0 // pred_fallthru
    _
  // Predicated region
  $region6: #{gpt_forward.15} parent=0 // pred_check
    _
  $region7: #{gpt_forward.15} parent=0 // pred_check_branch
    %11 = sbr.rel (0) target = $region9
  $region8: #{gpt_forward.15} parent=0 // pred_region
    _
  $region9: #{gpt_forward.15} parent=0 // pred_fallthru
    _
  // Predicated region
  $region10: #{gpt_forward.15} parent=0 // pred_check
    _
  $region11: #{gpt_forward.15} parent=0 // pred_check_branch
    %13 = sbr.rel (0) target = $region13
  $region12: #{gpt_forward.15} parent=0 // pred_region
    _
  $region13: #{gpt_forward.15} parent=0 // pred_fallthru
    _
  %p15 = scmp.eq.s32.totalorder 0, 0
  // Predicated region
  $region14: #{gpt_forward.15} parent=0 // pred_check
    %p16 = pneg %p15
  $region15: #{gpt_forward.15} parent=0 // pred_check_branch
    %18 = sbr.rel (%p16) target = $region17
  $region16: #{gpt_forward.15} parent=0 // pred_region
    %19 = vst [vmem:[#allocation2] sm:$0xff] 0.0
    %20 = vst [vmem:[#allocation2 + $0x8] sm:$0xff] 0.0
  $region17: #{gpt_forward.15} parent=0 // pred_fallthru
    _
  %v21 = vld [vmem:[#allocation2] sm:$0xff]
  %v22 = vld [vmem:[#allocation2 + $0x8] sm:$0xff]
  %v23 = vld [vmem:[%s0] sm:$0xf]
  %v24 = vld [vmem:[%s0 + $0x4] sm:$0xf]
  %v25 = vld [vmem:[%s1] sm:$0xf]
  %v26 = vld [vmem:[%s1 + $0x4] sm:$0xf]
  %v27 = vld [vmem:[%s1 + $0x8] sm:$0xf]
  %v28 = vld [vmem:[%s1 + $0xc] sm:$0xf]
  %v29 = vld [vmem:[%s1 + $0x10] sm:$0xf]
  %v30 = vld [vmem:[%s1 + $0x14] sm:$0xf]
  %v31 = vld [vmem:[%s1 + $0x18] sm:$0xf]
  %v32 = vld [vmem:[%s1 + $0x1c] sm:$0xf]
  %v33 = vld [vmem:[%s1 + $0x20] sm:$0xf]
  %v34 = vld [vmem:[%s1 + $0x24] sm:$0xf]
  %v35 = vld [vmem:[%s1 + $0x28] sm:$0xf]
  %v36 = vld [vmem:[%s1 + $0x2c] sm:$0xf]
  %v37 = vld [vmem:[%s1 + $0x30] sm:$0xf]
  %v38 = vld [vmem:[%s1 + $0x34] sm:$0xf]
  %v39 = vld [vmem:[%s1 + $0x38] sm:$0xf]
  %v40 = vld [vmem:[%s1 + $0x3c] sm:$0xf]
  %v43 = vunpack.c.l.b16 %v23
  %v44 = vunpack.c.l.b16 %v24
  %v45 = vpack.c.b16 %v44, %v43
  %v63 = vunpack.c.l.b16 %v25
  %v64 = vunpack.c.l.b16 %v26
  %v65 = vunpack.c.l.b16 %v27
  %v66 = vunpack.c.l.b16 %v28
  %v67 = vunpack.c.l.b16 %v29
  %v68 = vunpack.c.l.b16 %v30
  %v69 = vunpack.c.l.b16 %v31
  %v70 = vunpack.c.l.b16 %v32
  %v71 = vunpack.c.l.b16 %v33
  %v72 = vunpack.c.l.b16 %v34
  %v73 = vunpack.c.l.b16 %v35
  %v74 = vunpack.c.l.b16 %v36
  %v75 = vunpack.c.l.b16 %v37
  %v76 = vunpack.c.l.b16 %v38
  %v77 = vunpack.c.l.b16 %v39
  %v78 = vunpack.c.l.b16 %v40
  %v79 = vpack.c.b16 %v64, %v63
  %v80 = vpack.c.b16 %v66, %v65
  %v81 = vpack.c.b16 %v68, %v67
  %v82 = vpack.c.b16 %v70, %v69
  %v83 = vpack.c.b16 %v72, %v71
  %v84 = vpack.c.b16 %v74, %v73
  %v85 = vpack.c.b16 %v76, %v75
  %v86 = vpack.c.b16 %v78, %v77
  %95 = vmatprep.subr.bf16.mxu0 0
  %96 = vmatpush1.bf16.msra.mxu0 %v86
  %97 = vmatprep.subr.bf16.mxu0 0
  %98 = vmatpush1.bf16.msra.mxu0 %v85
  %99 = vmatprep.subr.bf16.mxu0 0
  %100 = vmatpush1.bf16.msra.mxu0 %v84
  %101 = vmatprep.subr.bf16.mxu0 0
  %102 = vmatpush1.bf16.msra.mxu0 %v83
  %103 = vmatprep.subr.bf16.mxu0 0
  %104 = vmatpush1.bf16.msra.mxu0 %v82
  %105 = vmatprep.subr.bf16.mxu0 0
  %106 = vmatpush1.bf16.msra.mxu0 %v81
  %107 = vmatprep.subr.bf16.mxu0 0
  %108 = vmatpush1.bf16.msra.mxu0 %v80
  %109 = vmatprep.subr.bf16.mxu0 0
  %110 = vmatpush1.bf16.msra.mxu0 %v79
  %111 = vmatprep.subr.bf16.mxu0 0
  %112 = vmatpush2.bf16.msra.mxu0 0
  %113 = vmatprep.subr.bf16.mxu0 0
  %114 = vmatpush2.bf16.msra.mxu0 0
  %115 = vmatprep.subr.bf16.mxu0 0
  %116 = vmatpush2.bf16.msra.mxu0 0
  %117 = vmatprep.subr.bf16.mxu0 0
  %118 = vmatpush2.bf16.msra.mxu0 0
  %119 = vmatprep.subr.bf16.mxu0 0
  %120 = vmatpush2.bf16.msra.mxu0 0
  %121 = vmatprep.subr.bf16.mxu0 0
  %122 = vmatpush2.bf16.msra.mxu0 0
  %123 = vmatprep.subr.bf16.mxu0 0
  %124 = vmatpush2.bf16.msra.mxu0 0
  %125 = vmatprep.subr.bf16.mxu0 0
  %126 = vmatpush2.bf16.msra.mxu0 0
  %127 = vmatprep.mubr.bf16.mxu0 0
  %128 = vmatmul.mubr.bf16.gmra.mxu0 %v45
  %v129 = vpop.f32.mrf.mxu0
  %v130 = vadd.f32 0.0, %v129
  %v131 = vpop.f32.mrf.mxu0
  %v132 = vpop.f32.mrf.mxu0
  %v133 = vadd.f32 0.0, %v132
  %v134 = vpop.f32.mrf.mxu0
  %135 = vdwg.mxu0
  %v136 = vadd.f32 %v21, %v130
  %v137 = vadd.f32 %v22, %v133
  %138 = vst [vmem:[#allocation2] sm:$0xff] %v136
  %139 = vst [vmem:[#allocation2 + $0x8] sm:$0xff] %v137
  // Predicated region
  $region18: #{gpt_forward.15} parent=0 // pred_check
    %p140 = pneg %p15
  $region19: #{gpt_forward.15} parent=0 // pred_check_branch
    %142 = sbr.rel (%p140) target = $region21
  $region20: #{gpt_forward.15} parent=0 // pred_region
    %v143 = vld [vmem:[#allocation2] sm:$0xff]
    %v144 = vld [vmem:[#allocation2 + $0x8] sm:$0xff]
    %v145 = vld [vmem:[%s2] sm:$0x1]
    %v147 = vlaneseq
    %v148 = vshrl.u32 %v147, 7
    %v149 = vsub.s32 0, %v148
    %v150 = vrot.slane %v145, %v149
    %v152 = vadd.f32 %v143, %v150
    %v153 = vadd.f32 %v144, %v150
    %v154 = vmul.f32 %v152, 0.5
    %v155 = vmul.f32 %v153, 0.5
    %v156 = vmul.f32 %v152, 0.044715
    %v157 = vmul.f32 %v153, 0.044715
    %v158 = vmul.f32 %v156, %v152
    %v159 = vmul.f32 %v157, %v153
    %v160 = vmul.f32 %v158, %v152
    %v161 = vmul.f32 %v159, %v153
    %v162 = vadd.f32 %v152, %v160
    %v163 = vadd.f32 %v153, %v161
    %v164 = vmul.f32 %v162, 0.7978846
    %v165 = vmul.f32 %v163, 0.7978846
    %v166 = vtanh.pop %v164
    %v167 = vtanh.pop %v165
    %v168 = vadd.f32 %v166, 1.0
    %v169 = vadd.f32 %v167, 1.0
    %v170 = vmul.f32 %v154, %v168
    %v171 = vmul.f32 %v155, %v169
    %v172 = vpack.c.bf16 %v171, %v170
    %v174 = vunpack.c.l.b16 %v172
    %v175 = vunpack.c.h.b16 %v172
    %v176 = vpack.c.b16 %v174, %v174
    %v177 = vpack.c.b16 %v175, %v175
    %180 = vst [vmem:[%s3] sm:$0xf] %v176
    %181 = vst [vmem:[%s3 + $0x4] sm:$0xf] %v177
  $region21: #{gpt_forward.15} parent=0 // pred_fallthru
    _
  // Predicated region
  $region22: #{gpt_forward.15} parent=0 // pred_check
    _
  $region23: #{gpt_forward.15} parent=0 // pred_check_branch
    %183 = sbr.rel (0) target = $region25
  $region24: #{gpt_forward.15} parent=0 // pred_region
    _
  $region25: #{gpt_forward.15} parent=0 // pred_fallthru
    _
  // Predicated region
  $region26: #{gpt_forward.15} parent=0 // pred_check
    _
  $region27: #{gpt_forward.15} parent=0 // pred_check_branch
    %185 = sbr.rel (0) target = $region29
  $region28: #{gpt_forward.15} parent=0 // pred_region
    _
  $region29: #{gpt_forward.15} parent=0 // pred_fallthru
    _

// kernel: gpt_forward.14
$region0: #{gpt_forward.14}
  #allocation0 [shape = 'u32[]', space=smem, size = 0x4, offset = 0x4, fixed_abs, tag = 'smem constant byte address 0x4 - core index']
  #allocation1 [shape = 'u32[144,128]{1,0:T(1,128)}', space=vmem, size = 0x12000, scoped, tag = 'internal scratch']
  #allocation2 [shape = 'f32[16,128]{1,0:T(8,128)}', space=vmem, size = 0x2000, scoped, tag = 'scratch operand']
  %s0 = inlined_call_operand.vmem [shape: bf16[16,128], index: 0, kind: input, shape index: {}]
  %s1 = inlined_call_operand.vmem [shape: bf16[128,128], index: 1, kind: input, shape index: {}]
  %s2 = inlined_call_operand.vmem [shape: f32[1,128], index: 2, kind: input, shape index: {}]
  %s3 = inlined_call_operand.vmem [shape: bf16[16,128], index: 3, kind: input, shape index: {}]
  %s4 = inlined_call_operand.vmem [shape: f32[1,128], index: 4, kind: input, shape index: {}]
  %s5 = inlined_call_operand.vmem [shape: f32[1,128], index: 5, kind: input, shape index: {}]
  %s6 = inlined_call_operand.vmem [shape: bf16[16,128], index: 6, kind: output, shape index: {}]
  %s7 = sld [smem:[#allocation0]]
  $region42: #{gpt_forward.14} parent=0
    _
  %s9 = ssub.s32 1, %s7
  %s10 = scalar_select 0, %s9, %s7
  // Predicated region
  $region2: #{gpt_forward.14} parent=0 // pred_check
    _
  $region3: #{gpt_forward.14} parent=0 // pred_check_branch
    %12 = sbr.rel (0) target = $region5
  $region4: #{gpt_forward.14} parent=0 // pred_region
    _
  $region5: #{gpt_forward.14} parent=0 // pred_fallthru
    _
  // Predicated region
  $region6: #{gpt_forward.14} parent=0 // pred_check
    _
  $region7: #{gpt_forward.14} parent=0 // pred_check_branch
    %14 = sbr.rel (0) target = $region9
  $region8: #{gpt_forward.14} parent=0 // pred_region
    _
  $region9: #{gpt_forward.14} parent=0 // pred_fallthru
    _
  // Predicated region
  $region10: #{gpt_forward.14} parent=0 // pred_check
    _
  $region11: #{gpt_forward.14} parent=0 // pred_check_branch
    %16 = sbr.rel (0) target = $region13
  $region12: #{gpt_forward.14} parent=0 // pred_region
    _
  $region13: #{gpt_forward.14} parent=0 // pred_fallthru
    _
  // Predicated region
  $region14: #{gpt_forward.14} parent=0 // pred_check
    _
  $region15: #{gpt_forward.14} parent=0 // pred_check_branch
    %18 = sbr.rel (0) target = $region17
  $region16: #{gpt_forward.14} parent=0 // pred_region
    _
  $region17: #{gpt_forward.14} parent=0 // pred_fallthru
    _
  // Predicated region
  $region18: #{gpt_forward.14} parent=0 // pred_check
    _
  $region19: #{gpt_forward.14} parent=0 // pred_check_branch
    %20 = sbr.rel (0) target = $region21
  $region20: #{gpt_forward.14} parent=0 // pred_region
    _
  $region21: #{gpt_forward.14} parent=0 // pred_fallthru
    _
  // Predicated region
  $region22: #{gpt_forward.14} parent=0 // pred_check
    _
  $region23: #{gpt_forward.14} parent=0 // pred_check_branch
    %22 = sbr.rel (0) target = $region25
  $region24: #{gpt_forward.14} parent=0 // pred_region
    _
  $region25: #{gpt_forward.14} parent=0 // pred_fallthru
    _
  %p24 = scmp.eq.s32.totalorder 0, 0
  // Predicated region
  $region26: #{gpt_forward.14} parent=0 // pred_check
    %p25 = pneg %p24
  $region27: #{gpt_forward.14} parent=0 // pred_check_branch
    %27 = sbr.rel (%p25) target = $region29
  $region28: #{gpt_forward.14} parent=0 // pred_region
    %28 = vst [vmem:[#allocation2] sm:$0xff] 0.0
    %29 = vst [vmem:[#allocation2 + $0x8] sm:$0xff] 0.0
  $region29: #{gpt_forward.14} parent=0 // pred_fallthru
    _
  %v30 = vld [vmem:[#allocation2] sm:$0xff]
  %v31 = vld [vmem:[#allocation2 + $0x8] sm:$0xff]
  %v32 = vld [vmem:[%s0] sm:$0xf]
  %v33 = vld [vmem:[%s0 + $0x4] sm:$0xf]
  %v34 = vld [vmem:[%s1] sm:$0xf]
  %v35 = vld [vmem:[%s1 + $0x4] sm:$0xf]
  %v36 = vld [vmem:[%s1 + $0x8] sm:$0xf]
  %v37 = vld [vmem:[%s1 + $0xc] sm:$0xf]
  %v38 = vld [vmem:[%s1 + $0x10] sm:$0xf]
  %v39 = vld [vmem:[%s1 + $0x14] sm:$0xf]
  %v40 = vld [vmem:[%s1 + $0x18] sm:$0xf]
  %v41 = vld [vmem:[%s1 + $0x1c] sm:$0xf]
  %v42 = vld [vmem:[%s1 + $0x20] sm:$0xf]
  %v43 = vld [vmem:[%s1 + $0x24] sm:$0xf]
  %v44 = vld [vmem:[%s1 + $0x28] sm:$0xf]
  %v45 = vld [vmem:[%s1 + $0x2c] sm:$0xf]
  %v46 = vld [vmem:[%s1 + $0x30] sm:$0xf]
  %v47 = vld [vmem:[%s1 + $0x34] sm:$0xf]
  %v48 = vld [vmem:[%s1 + $0x38] sm:$0xf]
  %v49 = vld [vmem:[%s1 + $0x3c] sm:$0xf]
  %v52 = vunpack.c.l.b16 %v32
  %v53 = vunpack.c.l.b16 %v33
  %v54 = vpack.c.b16 %v53, %v52
  %v72 = vunpack.c.l.b16 %v34
  %v73 = vunpack.c.l.b16 %v35
  %v74 = vunpack.c.l.b16 %v36
  %v75 = vunpack.c.l.b16 %v37
  %v76 = vunpack.c.l.b16 %v38
  %v77 = vunpack.c.l.b16 %v39
  %v78 = vunpack.c.l.b16 %v40
  %v79 = vunpack.c.l.b16 %v41
  %v80 = vunpack.c.l.b16 %v42
  %v81 = vunpack.c.l.b16 %v43
  %v82 = vunpack.c.l.b16 %v44
  %v83 = vunpack.c.l.b16 %v45
  %v84 = vunpack.c.l.b16 %v46
  %v85 = vunpack.c.l.b16 %v47
  %v86 = vunpack.c.l.b16 %v48
  %v87 = vunpack.c.l.b16 %v49
  %v88 = vpack.c.b16 %v73, %v72
  %v89 = vpack.c.b16 %v75, %v74
  %v90 = vpack.c.b16 %v77, %v76
  %v91 = vpack.c.b16 %v79, %v78
  %v92 = vpack.c.b16 %v81, %v80
  %v93 = vpack.c.b16 %v83, %v82
  %v94 = vpack.c.b16 %v85, %v84
  %v95 = vpack.c.b16 %v87, %v86
  %104 = vmatprep.subr.bf16.mxu0 0
  %105 = vmatpush1.bf16.msra.mxu0 %v95
  %106 = vmatprep.subr.bf16.mxu0 0
  %107 = vmatpush1.bf16.msra.mxu0 %v94
  %108 = vmatprep.subr.bf16.mxu0 0
  %109 = vmatpush1.bf16.msra.mxu0 %v93
  %110 = vmatprep.subr.bf16.mxu0 0
  %111 = vmatpush1.bf16.msra.mxu0 %v92
  %112 = vmatprep.subr.bf16.mxu0 0
  %113 = vmatpush1.bf16.msra.mxu0 %v91
  %114 = vmatprep.subr.bf16.mxu0 0
  %115 = vmatpush1.bf16.msra.mxu0 %v90
  %116 = vmatprep.subr.bf16.mxu0 0
  %117 = vmatpush1.bf16.msra.mxu0 %v89
  %118 = vmatprep.subr.bf16.mxu0 0
  %119 = vmatpush1.bf16.msra.mxu0 %v88
  %120 = vmatprep.subr.bf16.mxu0 0
  %121 = vmatpush2.bf16.msra.mxu0 0
  %122 = vmatprep.subr.bf16.mxu0 0
  %123 = vmatpush2.bf16.msra.mxu0 0
  %124 = vmatprep.subr.bf16.mxu0 0
  %125 = vmatpush2.bf16.msra.mxu0 0
  %126 = vmatprep.subr.bf16.mxu0 0
  %127 = vmatpush2.bf16.msra.mxu0 0
  %128 = vmatprep.subr.bf16.mxu0 0
  %129 = vmatpush2.bf16.msra.mxu0 0
  %130 = vmatprep.subr.bf16.mxu0 0
  %131 = vmatpush2.bf16.msra.mxu0 0
  %132 = vmatprep.subr.bf16.mxu0 0
  %133 = vmatpush2.bf16.msra.mxu0 0
  %134 = vmatprep.subr.bf16.mxu0 0
  %135 = vmatpush2.bf16.msra.mxu0 0
  %136 = vmatprep.mubr.bf16.mxu0 0
  %137 = vmatmul.mubr.bf16.gmra.mxu0 %v54
  %v138 = vpop.f32.mrf.mxu0
  %v139 = vadd.f32 0.0, %v138
  %v140 = vpop.f32.mrf.mxu0
  %v141 = vpop.f32.mrf.mxu0
  %v142 = vadd.f32 0.0, %v141
  %v143 = vpop.f32.mrf.mxu0
  %144 = vdwg.mxu0
  %v145 = vadd.f32 %v30, %v139
  %v146 = vadd.f32 %v31, %v142
  %147 = vst [vmem:[#allocation2] sm:$0xff] %v145
  %148 = vst [vmem:[#allocation2 + $0x8] sm:$0xff] %v146
  // Predicated region
  $region30: #{gpt_forward.14} parent=0 // pred_check
    %p149 = pneg %p24
  $region31: #{gpt_forward.14} parent=0 // pred_check_branch
    %151 = sbr.rel (%p149) target = $region33
  $region32: #{gpt_forward.14} parent=0 // pred_region
    %v152 = vld [vmem:[#allocation2] sm:$0xff]
    %v153 = vld [vmem:[#allocation2 + $0x8] sm:$0xff]
    %v154 = vld [vmem:[%s2] sm:$0x1]
    %v156 = vlaneseq
    %v157 = vshrl.u32 %v156, 7
    %v158 = vsub.s32 0, %v157
    %v159 = vrot.slane %v154, %v158
    %v161 = vadd.f32 %v152, %v159
    %v162 = vadd.f32 %v153, %v159
    %v163 = vld [vmem:[%s3] sm:$0xf]
    %v164 = vld [vmem:[%s3 + $0x4] sm:$0xf]
    %v165 = vunpack.c.l.bf16 %v163
    %v166 = vunpack.c.l.bf16 %v164
    %v167 = vadd.f32 %v161, %v165
    %v168 = vadd.f32 %v162, %v166
    %v169 = vld [vmem:[%s4] sm:$0x1]
    %v170 = vld [vmem:[%s5] sm:$0x1]
    %v171 = vlaneseq
    %v172 = vand.u32 %v171, 127
    %vm173 = vcmp.lt.s32.totalorder %v172, 32
    %v174 = vsel %vm173, 1, 0
    %v175 = vcvt.s32.f32 %v174
    %v176 = vmul.f32 %v167, %v175
    %v177 = vmul.f32 %v168, %v175
    %178 = vadd.xlane.f32.xlu0 %v176
    %v179 = vpop.xlane.xlu0 %178
    %180 = vadd.xlane.f32.xlu0 %v177
    %v181 = vpop.xlane.xlu0 %180
    %v182 = vmul.f32 %v179, 0.03125
    %v183 = vmul.f32 %v181, 0.03125
    %v184 = vsub.f32 %v176, %v182
    %v185 = vsub.f32 %v177, %v183
    %v186 = vmul.f32 %v184, %v175
    %v187 = vmul.f32 %v185, %v175
    %v188 = vmul.f32 %v186, %v186
    %v189 = vmul.f32 %v187, %v187
    %190 = vadd.xlane.f32.xlu0 %v188
    %v191 = vpop.xlane.xlu0 %190
    %192 = vadd.xlane.f32.xlu0 %v189
    %v193 = vpop.xlane.xlu0 %192
    %v194 = vmul.f32 %v191, 0.03125
    %v195 = vmul.f32 %v193, 0.03125
    %v196 = vadd.f32 %v194, 1e-05
    %v197 = vadd.f32 %v195, 1e-05
    %v198 = vrsqrt.pop %v196
    %v199 = vrsqrt.pop %v197
    %v200 = vmul.f32 %v186, %v198
    %v201 = vmul.f32 %v187, %v199
    %v203 = vlaneseq
    %v204 = vshrl.u32 %v203, 7
    %v205 = vsub.s32 0, %v204
    %v206 = vrot.slane %v169, %v205
    %v208 = vmul.f32 %v200, %v206
    %v209 = vmul.f32 %v201, %v206
    %v211 = vlaneseq
    %v212 = vshrl.u32 %v211, 7
    %v213 = vsub.s32 0, %v212
    %v214 = vrot.slane %v170, %v213
    %v216 = vadd.f32 %v208, %v214
    %v217 = vadd.f32 %v209, %v214
    %v218 = vpack.c.bf16 %v217, %v216
    %v220 = vunpack.c.l.b16 %v218
    %v221 = vunpack.c.h.b16 %v218
    %v222 = vpack.c.b16 %v220, %v220
    %v223 = vpack.c.b16 %v221, %v221
    %226 = vst [vmem:[%s6] sm:$0xf] %v222
    %227 = vst [vmem:[%s6 + $0x4] sm:$0xf] %v223
  $region33: #{gpt_forward.14} parent=0 // pred_fallthru
    _
  // Predicated region
  $region34: #{gpt_forward.14} parent=0 // pred_check
    _
  $region35: #{gpt_forward.14} parent=0 // pred_check_branch
    %229 = sbr.rel (0) target = $region37
  $region36: #{gpt_forward.14} parent=0 // pred_region
    _
  $region37: #{gpt_forward.14} parent=0 // pred_fallthru
    _
  // Predicated region
  $region38: #{gpt_forward.14} parent=0 // pred_check
    _
  $region39: #{gpt_forward.14} parent=0 // pred_check_branch
    %231 = sbr.rel (0) target = $region41
  $region40: #{gpt_forward.14} parent=0 // pred_region
    _
  $region41: #{gpt_forward.14} parent=0 // pred_fallthru
    _

// kernel: gpt_forward.12
$region0: #{gpt_forward.12}
  #allocation0 [shape = 'u32[]', space=smem, size = 0x4, offset = 0x4, fixed_abs, tag = 'smem constant byte address 0x4 - core index']
  #allocation1 [shape = 'u32[144,128]{1,0:T(1,128)}', space=vmem, size = 0x12000, scoped, tag = 'internal scratch']
  #allocation2 [shape = 'f32[16,128]{1,0:T(8,128)}', space=vmem, size = 0x2000, scoped, tag = 'scratch operand']
  %s0 = inlined_call_operand.vmem [shape: bf16[16,128], index: 0, kind: input, shape index: {}]
  %s1 = inlined_call_operand.vmem [shape: bf16[128,128], index: 1, kind: input, shape index: {}]
  %s2 = inlined_call_operand.vmem [shape: f32[1,128], index: 2, kind: input, shape index: {}]
  %s3 = inlined_call_operand.vmem [shape: bf16[16,128], index: 3, kind: output, shape index: {}]
  %s4 = sld [smem:[#allocation0]]
  $region30: #{gpt_forward.12} parent=0
    _
  %s6 = ssub.s32 1, %s4
  %s7 = scalar_select 0, %s6, %s4
  // Predicated region
  $region2: #{gpt_forward.12} parent=0 // pred_check
    _
  $region3: #{gpt_forward.12} parent=0 // pred_check_branch
    %9 = sbr.rel (0) target = $region5
  $region4: #{gpt_forward.12} parent=0 // pred_region
    _
  $region5: #{gpt_forward.12} parent=0 // pred_fallthru
    _
  // Predicated region
  $region6: #{gpt_forward.12} parent=0 // pred_check
    _
  $region7: #{gpt_forward.12} parent=0 // pred_check_branch
    %11 = sbr.rel (0) target = $region9
  $region8: #{gpt_forward.12} parent=0 // pred_region
    _
  $region9: #{gpt_forward.12} parent=0 // pred_fallthru
    _
  // Predicated region
  $region10: #{gpt_forward.12} parent=0 // pred_check
    _
  $region11: #{gpt_forward.12} parent=0 // pred_check_branch
    %13 = sbr.rel (0) target = $region13
  $region12: #{gpt_forward.12} parent=0 // pred_region
    _
  $region13: #{gpt_forward.12} parent=0 // pred_fallthru
    _
  %p15 = scmp.eq.s32.totalorder 0, 0
  // Predicated region
  $region14: #{gpt_forward.12} parent=0 // pred_check
    %p16 = pneg %p15
  $region15: #{gpt_forward.12} parent=0 // pred_check_branch
    %18 = sbr.rel (%p16) target = $region17
  $region16: #{gpt_forward.12} parent=0 // pred_region
    %19 = vst [vmem:[#allocation2] sm:$0xff] 0.0
    %20 = vst [vmem:[#allocation2 + $0x8] sm:$0xff] 0.0
  $region17: #{gpt_forward.12} parent=0 // pred_fallthru
    _
  %v21 = vld [vmem:[#allocation2] sm:$0xff]
  %v22 = vld [vmem:[#allocation2 + $0x8] sm:$0xff]
  %v23 = vld [vmem:[%s0] sm:$0xf]
  %v24 = vld [vmem:[%s0 + $0x4] sm:$0xf]
  %v25 = vld [vmem:[%s1] sm:$0xf]
  %v26 = vld [vmem:[%s1 + $0x4] sm:$0xf]
  %v27 = vld [vmem:[%s1 + $0x8] sm:$0xf]
  %v28 = vld [vmem:[%s1 + $0xc] sm:$0xf]
  %v29 = vld [vmem:[%s1 + $0x10] sm:$0xf]
  %v30 = vld [vmem:[%s1 + $0x14] sm:$0xf]
  %v31 = vld [vmem:[%s1 + $0x18] sm:$0xf]
  %v32 = vld [vmem:[%s1 + $0x1c] sm:$0xf]
  %v33 = vld [vmem:[%s1 + $0x20] sm:$0xf]
  %v34 = vld [vmem:[%s1 + $0x24] sm:$0xf]
  %v35 = vld [vmem:[%s1 + $0x28] sm:$0xf]
  %v36 = vld [vmem:[%s1 + $0x2c] sm:$0xf]
  %v37 = vld [vmem:[%s1 + $0x30] sm:$0xf]
  %v38 = vld [vmem:[%s1 + $0x34] sm:$0xf]
  %v39 = vld [vmem:[%s1 + $0x38] sm:$0xf]
  %v40 = vld [vmem:[%s1 + $0x3c] sm:$0xf]
  %v43 = vunpack.c.l.b16 %v23
  %v44 = vunpack.c.l.b16 %v24
  %v45 = vpack.c.b16 %v44, %v43
  %v63 = vunpack.c.l.b16 %v25
  %v64 = vunpack.c.l.b16 %v26
  %v65 = vunpack.c.l.b16 %v27
  %v66 = vunpack.c.l.b16 %v28
  %v67 = vunpack.c.l.b16 %v29
  %v68 = vunpack.c.l.b16 %v30
  %v69 = vunpack.c.l.b16 %v31
  %v70 = vunpack.c.l.b16 %v32
  %v71 = vunpack.c.l.b16 %v33
  %v72 = vunpack.c.l.b16 %v34
  %v73 = vunpack.c.l.b16 %v35
  %v74 = vunpack.c.l.b16 %v36
  %v75 = vunpack.c.l.b16 %v37
  %v76 = vunpack.c.l.b16 %v38
  %v77 = vunpack.c.l.b16 %v39
  %v78 = vunpack.c.l.b16 %v40
  %v79 = vpack.c.b16 %v64, %v63
  %v80 = vpack.c.b16 %v66, %v65
  %v81 = vpack.c.b16 %v68, %v67
  %v82 = vpack.c.b16 %v70, %v69
  %v83 = vpack.c.b16 %v72, %v71
  %v84 = vpack.c.b16 %v74, %v73
  %v85 = vpack.c.b16 %v76, %v75
  %v86 = vpack.c.b16 %v78, %v77
  %95 = vmatprep.subr.bf16.mxu0 0
  %96 = vmatpush1.bf16.msra.mxu0 %v86
  %97 = vmatprep.subr.bf16.mxu0 0
  %98 = vmatpush1.bf16.msra.mxu0 %v85
  %99 = vmatprep.subr.bf16.mxu0 0
  %100 = vmatpush1.bf16.msra.mxu0 %v84
  %101 = vmatprep.subr.bf16.mxu0 0
  %102 = vmatpush1.bf16.msra.mxu0 %v83
  %103 = vmatprep.subr.bf16.mxu0 0
  %104 = vmatpush1.bf16.msra.mxu0 %v82
  %105 = vmatprep.subr.bf16.mxu0 0
  %106 = vmatpush1.bf16.msra.mxu0 %v81
  %107 = vmatprep.subr.bf16.mxu0 0
  %108 = vmatpush1.bf16.msra.mxu0 %v80
  %109 = vmatprep.subr.bf16.mxu0 0
  %110 = vmatpush1.bf16.msra.mxu0 %v79
  %111 = vmatprep.subr.bf16.mxu0 0
  %112 = vmatpush2.bf16.msra.mxu0 0
  %113 = vmatprep.subr.bf16.mxu0 0
  %114 = vmatpush2.bf16.msra.mxu0 0
  %115 = vmatprep.subr.bf16.mxu0 0
  %116 = vmatpush2.bf16.msra.mxu0 0
  %117 = vmatprep.subr.bf16.mxu0 0
  %118 = vmatpush2.bf16.msra.mxu0 0
  %119 = vmatprep.subr.bf16.mxu0 0
  %120 = vmatpush2.bf16.msra.mxu0 0
  %121 = vmatprep.subr.bf16.mxu0 0
  %122 = vmatpush2.bf16.msra.mxu0 0
  %123 = vmatprep.subr.bf16.mxu0 0
  %124 = vmatpush2.bf16.msra.mxu0 0
  %125 = vmatprep.subr.bf16.mxu0 0
  %126 = vmatpush2.bf16.msra.mxu0 0
  %127 = vmatprep.mubr.bf16.mxu0 0
  %128 = vmatmul.mubr.bf16.gmra.mxu0 %v45
  %v129 = vpop.f32.mrf.mxu0
  %v130 = vadd.f32 0.0, %v129
  %v131 = vpop.f32.mrf.mxu0
  %v132 = vpop.f32.mrf.mxu0
  %v133 = vadd.f32 0.0, %v132
  %v134 = vpop.f32.mrf.mxu0
  %135 = vdwg.mxu0
  %v136 = vadd.f32 %v21, %v130
  %v137 = vadd.f32 %v22, %v133
  %138 = vst [vmem:[#allocation2] sm:$0xff] %v136
  %139 = vst [vmem:[#allocation2 + $0x8] sm:$0xff] %v137
  // Predicated region
  $region18: #{gpt_forward.12} parent=0 // pred_check
    %p140 = pneg %p15
  $region19: #{gpt_forward.12} parent=0 // pred_check_branch
    %142 = sbr.rel (%p140) target = $region21
  $region20: #{gpt_forward.12} parent=0 // pred_region
    %v143 = vld [vmem:[#allocation2] sm:$0xff]
    %v144 = vld [vmem:[#allocation2 + $0x8] sm:$0xff]
    %v145 = vld [vmem:[%s2] sm:$0x1]
    %v147 = vlaneseq
    %v148 = vshrl.u32 %v147, 7
    %v149 = vsub.s32 0, %v148
    %v150 = vrot.slane %v145, %v149
    %v152 = vadd.f32 %v143, %v150
    %v153 = vadd.f32 %v144, %v150
    %v154 = vpack.c.bf16 %v153, %v152
    %v156 = vunpack.c.l.b16 %v154
    %v157 = vunpack.c.h.b16 %v154
    %v158 = vpack.c.b16 %v156, %v156
    %v159 = vpack.c.b16 %v157, %v157
    %162 = vst [vmem:[%s3] sm:$0xf] %v158
    %163 = vst [vmem:[%s3 + $0x4] sm:$0xf] %v159
  $region21: #{gpt_forward.12} parent=0 // pred_fallthru
    _
  // Predicated region
  $region22: #{gpt_forward.12} parent=0 // pred_check
    _
  $region23: #{gpt_forward.12} parent=0 // pred_check_branch
    %165 = sbr.rel (0) target = $region25
  $region24: #{gpt_forward.12} parent=0 // pred_region
    _
  $region25: #{gpt_forward.12} parent=0 // pred_fallthru
    _
  // Predicated region
  $region26: #{gpt_forward.12} parent=0 // pred_check
    _
  $region27: #{gpt_forward.12} parent=0 // pred_check_branch
    %167 = sbr.rel (0) target = $region29
  $region28: #{gpt_forward.12} parent=0 // pred_region
    _
  $region29: #{gpt_forward.12} parent=0 // pred_fallthru
    _

// kernel: gpt_forward.13
$region0: #{gpt_forward.13}
  #allocation0 [shape = 'u32[]', space=smem, size = 0x4, offset = 0x4, fixed_abs, tag = 'smem constant byte address 0x4 - core index']
  #allocation1 [shape = 'u32[144,128]{1,0:T(1,128)}', space=vmem, size = 0x12000, scoped, tag = 'internal scratch']
  %s0 = inlined_call_operand.vmem [shape: bf16[32,2,8], index: 0, kind: input, shape index: {}]
  %s1 = inlined_call_operand.vmem [shape: bf16[32,2,8], index: 1, kind: input, shape index: {}]
  %s2 = inlined_call_operand.vmem [shape: bf16[32,2,8], index: 2, kind: input, shape index: {}]
  %s3 = inlined_call_operand.vmem [shape: bf16[32,2,8], index: 3, kind: output, shape index: {}]
  %s4 = sld [smem:[#allocation0]]
  $region45: #{gpt_forward.13} parent=0
    _
  %s6 = ssub.s32 1, %s4
  %s7 = scalar_select 0, %s6, %s4
  loop: start=0, step=1, limit=4
  $region2: #{gpt_forward.13} parent=0 // loop_pre_header
    _
  $region3: #{gpt_forward.13} parent=0 // loop_header
    %s9 = sphi 0, %s13
    %p10 = scmp.ge.s32.totalorder %s9, 4
    %s19 = sphi 0, %s21
    %s22 = sphi 0, %s19
    %s23 = sphi 0, %s22
    %s39 = sphi 0, %s23
    %s45 = sphi 0, %s47
    %s48 = sphi 0, %s45
    %s49 = sphi 0, %s48
    %s65 = sphi 0, %s49
    %s71 = sphi 0, %s73
    %s74 = sphi 0, %s71
    %s75 = sphi 0, %s74
    %s91 = sphi 0, %s75
    %s97 = sphi 0, %s99
    %s100 = sphi 0, %s97
    %s101 = sphi 0, %s100
    %s117 = sphi 0, %s101
  $region4: #{gpt_forward.13} parent=0 // loop_header_branch
    %12 = sbr.rel (%p10) target = $region8
  $region5: #{gpt_forward.13} parent=0 // loop_body
    %s14 = ssub.s32 %s9, 1
    %s15 = ssub.s32 %s9, 2
    %s16 = sadd.s32 %s9, 1
    %s17 = ssub.s32 %s9, %s16
    %p18 = scmp.eq.s32.totalorder %s17, 0
    %s20 = sadd.s32 %s19, 1
    %s21 = scalar_select %p18, %s19, %s20
    %p24 = pneg %p18
    %p25 = scmp.eq.s32.totalorder %s9, 1
    %p26 = por %p24, %p25
    %p27 = scmp.ne.s32.totalorder %s19, %s22
    %p28 = scmp.eq.s32.totalorder %s9, 0
    %p29 = por %p27, %p28
    %p30 = scmp.ne.s32.totalorder %s19, %s22
    %p31 = scmp.eq.s32.totalorder %s14, 1
    %p32 = por %p30, %p31
    %p33 = scmp.ne.s32.totalorder %s22, %s23
    %p34 = scmp.eq.s32.totalorder %s14, 0
    %p35 = por %p33, %p34
    %p36 = scmp.ne.s32.totalorder %s22, %s23
    %p37 = scmp.eq.s32.totalorder %s15, 1
    %p38 = por %p36, %p37
    %p40 = scmp.ne.s32.totalorder %s23, %s39
    %p41 = scmp.eq.s32.totalorder %s15, 0
    %p42 = por %p40, %p41
    %s43 = ssub.s32 %s9, %s16
    %p44 = scmp.eq.s32.totalorder %s43, 0
    %s46 = sadd.s32 %s45, 1
    %s47 = scalar_select %p44, %s45, %s46
    %p50 = pneg %p44
    %p51 = scmp.eq.s32.totalorder %s9, 1
    %p52 = por %p50, %p51
    %p53 = scmp.ne.s32.totalorder %s45, %s48
    %p54 = scmp.eq.s32.totalorder %s9, 0
    %p55 = por %p53, %p54
    %p56 = scmp.ne.s32.totalorder %s45, %s48
    %p57 = scmp.eq.s32.totalorder %s14, 1
    %p58 = por %p56, %p57
    %p59 = scmp.ne.s32.totalorder %s48, %s49
    %p60 = scmp.eq.s32.totalorder %s14, 0
    %p61 = por %p59, %p60
    %p62 = scmp.ne.s32.totalorder %s48, %s49
    %p63 = scmp.eq.s32.totalorder %s15, 1
    %p64 = por %p62, %p63
    %p66 = scmp.ne.s32.totalorder %s49, %s65
    %p67 = scmp.eq.s32.totalorder %s15, 0
    %p68 = por %p66, %p67
    %s69 = ssub.s32 %s9, %s16
    %p70 = scmp.eq.s32.totalorder %s69, 0
    %s72 = sadd.s32 %s71, 1
    %s73 = scalar_select %p70, %s71, %s72
    %p76 = pneg %p70
    %p77 = scmp.eq.s32.totalorder %s9, 1
    %p78 = por %p76, %p77
    %p79 = scmp.ne.s32.totalorder %s71, %s74
    %p80 = scmp.eq.s32.totalorder %s9, 0
    %p81 = por %p79, %p80
    %p82 = scmp.ne.s32.totalorder %s71, %s74
    %p83 = scmp.eq.s32.totalorder %s14, 1
    %p84 = por %p82, %p83
    %p85 = scmp.ne.s32.totalorder %s74, %s75
    %p86 = scmp.eq.s32.totalorder %s14, 0
    %p87 = por %p85, %p86
    %p88 = scmp.ne.s32.totalorder %s74, %s75
    %p89 = scmp.eq.s32.totalorder %s15, 1
    %p90 = por %p88, %p89
    %p92 = scmp.ne.s32.totalorder %s75, %s91
    %p93 = scmp.eq.s32.totalorder %s15, 0
    %p94 = por %p92, %p93
    %s95 = ssub.s32 %s9, %s16
    %p96 = scmp.eq.s32.totalorder %s95, 0
    %s98 = sadd.s32 %s97, 1
    %s99 = scalar_select %p96, %s97, %s98
    %p102 = pneg %p96
    %p103 = scmp.eq.s32.totalorder %s9, 1
    %p104 = por %p102, %p103
    %p105 = scmp.ne.s32.totalorder %s97, %s100
    %p106 = scmp.eq.s32.totalorder %s9, 0
    %p107 = por %p105, %p106
    %p108 = scmp.ne.s32.totalorder %s97, %s100
    %p109 = scmp.eq.s32.totalorder %s14, 1
    %p110 = por %p108, %p109
    %p111 = scmp.ne.s32.totalorder %s100, %s101
    %p112 = scmp.eq.s32.totalorder %s14, 0
    %p113 = por %p111, %p112
    %p114 = scmp.ne.s32.totalorder %s100, %s101
    %p115 = scmp.eq.s32.totalorder %s15, 1
    %p116 = por %p114, %p115
    %p118 = scmp.ne.s32.totalorder %s101, %s117
    %p119 = scmp.eq.s32.totalorder %s15, 0
    %p120 = por %p118, %p119
    %p121 = scmp.le.s32.totalorder 1, %s9
    %p122 = scmp.lt.s32.totalorder %s9, 3
    %p123 = pnand %p121, %p122
    %p124 = pneg %p123
    // Predicated region
    $region9: #{gpt_forward.13} parent=5 // pred_check
      _
    $region10: #{gpt_forward.13} parent=5 // pred_check_branch
      %126 = sbr.rel (%p123) target = $region12
    $region11: #{gpt_forward.13} parent=5 // pred_region
      %s127 = ssub.s32 %s9, 1
    $region12: #{gpt_forward.13} parent=5 // pred_fallthru
      _
    %p128 = scmp.lt.s32.totalorder %s9, 2
    // Predicated region
    $region13: #{gpt_forward.13} parent=5 // pred_check
      %p129 = pneg %p128
    $region14: #{gpt_forward.13} parent=5 // pred_check_branch
      %131 = sbr.rel (%p129) target = $region16
    $region15: #{gpt_forward.13} parent=5 // pred_region
      // Predicated region
      $region17: #{gpt_forward.13} parent=15 // pred_check
        %p132 = pneg %p29
      $region18: #{gpt_forward.13} parent=15 // pred_check_branch
        %134 = sbr.rel (%p132) target = $region20
      $region19: #{gpt_forward.13} parent=15 // pred_region
        %s135 = smul.u32 16, %s9
        %p136 = scmp.lt.s32.totalorder %s135, 31
        %s137 = scalar_select %p136, %s135, 31
        %s138 = scalar_lea.vmem %s0, %s137
        %s139 = smul.u32 16, %s9
      $region20: #{gpt_forward.13} parent=15 // pred_fallthru
        _
      // Predicated region
      $region21: #{gpt_forward.13} parent=15 // pred_check
        %p140 = pneg %p55
      $region22: #{gpt_forward.13} parent=15 // pred_check_branch
        %142 = sbr.rel (%p140) target = $region24
      $region23: #{gpt_forward.13} parent=15 // pred_region
        %s143 = smul.u32 16, %s9
        %p144 = scmp.lt.s32.totalorder %s143, 31
        %s145 = scalar_select %p144, %s143, 31
        %s146 = scalar_lea.vmem %s1, %s145
        %s147 = smul.u32 16, %s9
      $region24: #{gpt_forward.13} parent=15 // pred_fallthru
        _
      // Predicated region
      $region25: #{gpt_forward.13} parent=15 // pred_check
        %p148 = pneg %p81
      $region26: #{gpt_forward.13} parent=15 // pred_check_branch
        %150 = sbr.rel (%p148) target = $region28
      $region27: #{gpt_forward.13} parent=15 // pred_region
        %s151 = smul.u32 16, %s9
        %p152 = scmp.lt.s32.totalorder %s151, 31
        %s153 = scalar_select %p152, %s151, 31
        %s154 = scalar_lea.vmem %s2, %s153
        %s155 = smul.u32 16, %s9
      $region28: #{gpt_forward.13} parent=15 // pred_fallthru
        _
    $region16: #{gpt_forward.13} parent=5 // pred_fallthru
      _
    %p156 = scmp.le.s32.totalorder 1, %s9
    %p157 = scmp.lt.s32.totalorder %s9, 3
    %p158 = pnand %p156, %p157
    %p159 = pneg %p158
    // Predicated region
    $region29: #{gpt_forward.13} parent=5 // pred_check
      _
    $region30: #{gpt_forward.13} parent=5 // pred_check_branch
      %161 = sbr.rel (%p158) target = $region32
    $region31: #{gpt_forward.13} parent=5 // pred_region
      %s162 = ssub.s32 %s9, 1
      %s163 = smul.u32 16, %s14
      %p164 = scmp.lt.s32.totalorder %s163, 31
      %s165 = scalar_select %p164, %s163, 31
      %s166 = scalar_lea.vmem %s0, %s165
      %p167 = pneg %p35
      %p168 = pneg %p32
      %s169 = smul.u32 16, %s14
      %p170 = scmp.lt.s32.totalorder %s169, 31
      %s171 = scalar_select %p170, %s169, 31
      %s172 = scalar_lea.vmem %s1, %s171
      %p173 = pneg %p61
      %p174 = pneg %p58
      %s175 = smul.u32 16, %s14
      %p176 = scmp.lt.s32.totalorder %s175, 31
      %s177 = scalar_select %p176, %s175, 31
      %s178 = scalar_lea.vmem %s2, %s177
      %p179 = pneg %p87
      %p180 = pneg %p84
      %p181 = pneg %p113
      %p182 = pneg %p110
      %s183 = smul.u32 16, %s14
      %p184 = scmp.lt.s32.totalorder %s183, 31
      %s185 = scalar_select %p184, %s183, 31
      %s186 = scalar_lea.vmem %s3, %s185
      %s187 = smul.u32 16, %s14
      %p188 = scmp.lt.s32.totalorder %s187, 31
      %s189 = scalar_select %p188, %s187, 31
      %s190 = scalar_lea.vmem %s0, %s189
      %s191 = smul.u32 16, %s14
      %s192 = smul.u32 16, %s14
      %p193 = scmp.lt.s32.totalorder %s192, 31
      %s194 = scalar_select %p193, %s192, 31
      %s195 = scalar_lea.vmem %s1, %s194
      %s196 = smul.u32 16, %s14
      %s197 = smul.u32 16, %s14
      %p198 = scmp.lt.s32.totalorder %s197, 31
      %s199 = scalar_select %p198, %s197, 31
      %s200 = scalar_lea.vmem %s2, %s199
      %s201 = smul.u32 16, %s14
      %s202 = smul.u32 16, %s14
      %p203 = scmp.lt.s32.totalorder %s202, 31
      %s204 = scalar_select %p203, %s202, 31
      %s205 = scalar_lea.vmem %s3, %s204
      %s206 = smul.u32 16, %s14
      %v208 = vld [vmem:[%s190] sm:$0x1]
      %v209 = vld [vmem:[%s190 + $0x1] sm:$0x1]
      %v210 = vld [vmem:[%s190 + $0x2] sm:$0x1]
      %v211 = vld [vmem:[%s190 + $0x3] sm:$0x1]
      %v212 = vld [vmem:[%s190 + $0x4] sm:$0x1]
      %v213 = vld [vmem:[%s190 + $0x5] sm:$0x1]
      %v214 = vld [vmem:[%s190 + $0x6] sm:$0x1]
      %v215 = vld [vmem:[%s190 + $0x7] sm:$0x1]
      %v216 = vld [vmem:[%s190 + $0x8] sm:$0x1]
      %v217 = vld [vmem:[%s190 + $0x9] sm:$0x1]
      %v218 = vld [vmem:[%s190 + $0xa] sm:$0x1]
      %v219 = vld [vmem:[%s190 + $0xb] sm:$0x1]
      %v220 = vld [vmem:[%s190 + $0xc] sm:$0x1]
      %v221 = vld [vmem:[%s190 + $0xd] sm:$0x1]
      %v222 = vld [vmem:[%s190 + $0xe] sm:$0x1]
      %v223 = vld [vmem:[%s190 + $0xf] sm:$0x1]
      %v224 = vld [vmem:[%s195] sm:$0x1]
      %v225 = vld [vmem:[%s195 + $0x1] sm:$0x1]
      %v226 = vld [vmem:[%s195 + $0x2] sm:$0x1]
      %v227 = vld [vmem:[%s195 + $0x3] sm:$0x1]
      %v228 = vld [vmem:[%s195 + $0x4] sm:$0x1]
      %v229 = vld [vmem:[%s195 + $0x5] sm:$0x1]
      %v230 = vld [vmem:[%s195 + $0x6] sm:$0x1]
      %v231 = vld [vmem:[%s195 + $0x7] sm:$0x1]
      %v232 = vld [vmem:[%s195 + $0x8] sm:$0x1]
      %v233 = vld [vmem:[%s195 + $0x9] sm:$0x1]
      %v234 = vld [vmem:[%s195 + $0xa] sm:$0x1]
      %v235 = vld [vmem:[%s195 + $0xb] sm:$0x1]
      %v236 = vld [vmem:[%s195 + $0xc] sm:$0x1]
      %v237 = vld [vmem:[%s195 + $0xd] sm:$0x1]
      %v238 = vld [vmem:[%s195 + $0xe] sm:$0x1]
      %v239 = vld [vmem:[%s195 + $0xf] sm:$0x1]
      %v240 = vld [vmem:[%s200] sm:$0x1]
      %v241 = vld [vmem:[%s200 + $0x1] sm:$0x1]
      %v242 = vld [vmem:[%s200 + $0x2] sm:$0x1]
      %v243 = vld [vmem:[%s200 + $0x3] sm:$0x1]
      %v244 = vld [vmem:[%s200 + $0x4] sm:$0x1]
      %v245 = vld [vmem:[%s200 + $0x5] sm:$0x1]
      %v246 = vld [vmem:[%s200 + $0x6] sm:$0x1]
      %v247 = vld [vmem:[%s200 + $0x7] sm:$0x1]
      %v248 = vld [vmem:[%s200 + $0x8] sm:$0x1]
      %v249 = vld [vmem:[%s200 + $0x9] sm:$0x1]
      %v250 = vld [vmem:[%s200 + $0xa] sm:$0x1]
      %v251 = vld [vmem:[%s200 + $0xb] sm:$0x1]
      %v252 = vld [vmem:[%s200 + $0xc] sm:$0x1]
      %v253 = vld [vmem:[%s200 + $0xd] sm:$0x1]
      %v254 = vld [vmem:[%s200 + $0xe] sm:$0x1]
      %v255 = vld [vmem:[%s200 + $0xf] sm:$0x1]
      %vm256 = vcmask 64512
      %v258 = vsel %vm256, %v208, 0
      %v261 = vsel %vm256, %v224, 0
      %263 = vmatprep.subr.bf16.mxu0 0
      %264 = vmatpush1.bf16.xpose.msra.mxu0 0
      %265 = vmatprep.subr.bf16.mxu0 0
      %266 = vmatpush1.bf16.xpose.msra.mxu0 0
      %267 = vmatprep.subr.bf16.mxu0 0
      %268 = vmatpush1.bf16.xpose.msra.mxu0 0
      %269 = vmatprep.subr.bf16.mxu0 0
      %270 = vmatpush1.bf16.xpose.msra.mxu0 0
      %271 = vmatprep.subr.bf16.mxu0 0
      %272 = vmatpush1.bf16.xpose.msra.mxu0 0
      %273 = vmatprep.subr.bf16.mxu0 0
      %274 = vmatpush1.bf16.xpose.msra.mxu0 0
      %275 = vmatprep.subr.bf16.mxu0 0
      %276 = vmatpush1.bf16.xpose.msra.mxu0 0
      %277 = vmatprep.subr.bf16.mxu0 0
      %278 = vmatpush1.bf16.xpose.msra.mxu0 %v261
      %279 = vmatprep.subr.bf16.mxu0 0
      %280 = vmatpush2.bf16.xpose.msra.mxu0 0
      %281 = vmatprep.subr.bf16.mxu0 0
      %282 = vmatpush2.bf16.xpose.msra.mxu0 0
      %283 = vmatprep.subr.bf16.mxu0 0
      %284 = vmatpush2.bf16.xpose.msra.mxu0 0
      %285 = vmatprep.subr.bf16.mxu0 0
      %286 = vmatpush2.bf16.xpose.msra.mxu0 0
      %287 = vmatprep.subr.bf16.mxu0 0
      %288 = vmatpush2.bf16.xpose.msra.mxu0 0
      %289 = vmatprep.subr.bf16.mxu0 0
      %290 = vmatpush2.bf16.xpose.msra.mxu0 0
      %291 = vmatprep.subr.bf16.mxu0 0
      %292 = vmatpush2.bf16.xpose.msra.mxu0 0
      %293 = vmatprep.subr.bf16.mxu0 0
      %294 = vmatpush2.bf16.xpose.msra.mxu0 0
      %295 = vmatprep.mubr.bf16.mxu0 0
      %296 = vmatmul.mubr.bf16.gmra.mxu0 %v258
      %v297 = vpop.f32.mrf.mxu0
      %v298 = vadd.f32 0.0, %v297
      %v299 = vpop.f32.mrf.mxu0
      %v300 = vpop.f32.mrf.mxu0
      %v301 = vpop.f32.mrf.mxu0
      %302 = vdwg.mxu0
      %v304 = vsel %vm256, %v209, 0
      %v307 = vsel %vm256, %v225, 0
      %309 = vmatprep.subr.bf16.mxu0 0
      %310 = vmatpush1.bf16.xpose.msra.mxu0 0
      %311 = vmatprep.subr.bf16.mxu0 0
      %312 = vmatpush1.bf16.xpose.msra.mxu0 0
      %313 = vmatprep.subr.bf16.mxu0 0
      %314 = vmatpush1.bf16.xpose.msra.mxu0 0
      %315 = vmatprep.subr.bf16.mxu0 0
      %316 = vmatpush1.bf16.xpose.msra.mxu0 0
      %317 = vmatprep.subr.bf16.mxu0 0
      %318 = vmatpush1.bf16.xpose.msra.mxu0 0
      %319 = vmatprep.subr.bf16.mxu0 0
      %320 = vmatpush1.bf16.xpose.msra.mxu0 0
      %321 = vmatprep.subr.bf16.mxu0 0
      %322 = vmatpush1.bf16.xpose.msra.mxu0 0
      %323 = vmatprep.subr.bf16.mxu0 0
      %324 = vmatpush1.bf16.xpose.msra.mxu0 %v307
      %325 = vmatprep.subr.bf16.mxu0 0
      %326 = vmatpush2.bf16.xpose.msra.mxu0 0
      %327 = vmatprep.subr.bf16.mxu0 0
      %328 = vmatpush2.bf16.xpose.msra.mxu0 0
      %329 = vmatprep.subr.bf16.mxu0 0
      %330 = vmatpush2.bf16.xpose.msra.mxu0 0
      %331 = vmatprep.subr.bf16.mxu0 0
      %332 = vmatpush2.bf16.xpose.msra.mxu0 0
      %333 = vmatprep.subr.bf16.mxu0 0
      %334 = vmatpush2.bf16.xpose.msra.mxu0 0
      %335 = vmatprep.subr.bf16.mxu0 0
      %336 = vmatpush2.bf16.xpose.msra.mxu0 0
      %337 = vmatprep.subr.bf16.mxu0 0
      %338 = vmatpush2.bf16.xpose.msra.mxu0 0
      %339 = vmatprep.subr.bf16.mxu0 0
      %340 = vmatpush2.bf16.xpose.msra.mxu0 0
      %341 = vmatprep.mubr.bf16.mxu0 0
      %342 = vmatmul.mubr.bf16.gmra.mxu0 %v304
      %v343 = vpop.f32.mrf.mxu0
      %v344 = vadd.f32 0.0, %v343
      %v345 = vpop.f32.mrf.mxu0
      %v346 = vpop.f32.mrf.mxu0
      %v347 = vpop.f32.mrf.mxu0
      %348 = vdwg.mxu0
      %v350 = vsel %vm256, %v210, 0
      %v353 = vsel %vm256, %v226, 0
      %355 = vmatprep.subr.bf16.mxu0 0
      %356 = vmatpush1.bf16.xpose.msra.mxu0 0
      %357 = vmatprep.subr.bf16.mxu0 0
      %358 = vmatpush1.bf16.xpose.msra.mxu0 0
      %359 = vmatprep.subr.bf16.mxu0 0
      %360 = vmatpush1.bf16.xpose.msra.mxu0 0
      %361 = vmatprep.subr.bf16.mxu0 0
      %362 = vmatpush1.bf16.xpose.msra.mxu0 0
      %363 = vmatprep.subr.bf16.mxu0 0
      %364 = vmatpush1.bf16.xpose.msra.mxu0 0
      %365 = vmatprep.subr.bf16.mxu0 0
      %366 = vmatpush1.bf16.xpose.msra.mxu0 0
      %367 = vmatprep.subr.bf16.mxu0 0
      %368 = vmatpush1.bf16.xpose.msra.mxu0 0
      %369 = vmatprep.subr.bf16.mxu0 0
      %370 = vmatpush1.bf16.xpose.msra.mxu0 %v353
      %371 = vmatprep.subr.bf16.mxu0 0
      %372 = vmatpush2.bf16.xpose.msra.mxu0 0
      %373 = vmatprep.subr.bf16.mxu0 0
      %374 = vmatpush2.bf16.xpose.msra.mxu0 0
      %375 = vmatprep.subr.bf16.mxu0 0
      %376 = vmatpush2.bf16.xpose.msra.mxu0 0
      %377 = vmatprep.subr.bf16.mxu0 0
      %378 = vmatpush2.bf16.xpose.msra.mxu0 0
      %379 = vmatprep.subr.bf16.mxu0 0
      %380 = vmatpush2.bf16.xpose.msra.mxu0 0
      %381 = vmatprep.subr.bf16.mxu0 0
      %382 = vmatpush2.bf16.xpose.msra.mxu0 0
      %383 = vmatprep.subr.bf16.mxu0 0
      %384 = vmatpush2.bf16.xpose.msra.mxu0 0
      %385 = vmatprep.subr.bf16.mxu0 0
      %386 = vmatpush2.bf16.xpose.msra.mxu0 0
      %387 = vmatprep.mubr.bf16.mxu0 0
      %388 = vmatmul.mubr.bf16.gmra.mxu0 %v350
      %v389 = vpop.f32.mrf.mxu0
      %v390 = vadd.f32 0.0, %v389
      %v391 = vpop.f32.mrf.mxu0
      %v392 = vpop.f32.mrf.mxu0
      %v393 = vpop.f32.mrf.mxu0
      %394 = vdwg.mxu0
      %v396 = vsel %vm256, %v211, 0
      %v399 = vsel %vm256, %v227, 0
      %401 = vmatprep.subr.bf16.mxu0 0
      %402 = vmatpush1.bf16.xpose.msra.mxu0 0
      %403 = vmatprep.subr.bf16.mxu0 0
      %404 = vmatpush1.bf16.xpose.msra.mxu0 0
      %405 = vmatprep.subr.bf16.mxu0 0
      %406 = vmatpush1.bf16.xpose.msra.mxu0 0
      %407 = vmatprep.subr.bf16.mxu0 0
      %408 = vmatpush1.bf16.xpose.msra.mxu0 0
      %409 = vmatprep.subr.bf16.mxu0 0
      %410 = vmatpush1.bf16.xpose.msra.mxu0 0
      %411 = vmatprep.subr.bf16.mxu0 0
      %412 = vmatpush1.bf16.xpose.msra.mxu0 0
      %413 = vmatprep.subr.bf16.mxu0 0
      %414 = vmatpush1.bf16.xpose.msra.mxu0 0
      %415 = vmatprep.subr.bf16.mxu0 0
      %416 = vmatpush1.bf16.xpose.msra.mxu0 %v399
      %417 = vmatprep.subr.bf16.mxu0 0
      %418 = vmatpush2.bf16.xpose.msra.mxu0 0
      %419 = vmatprep.subr.bf16.mxu0 0
      %420 = vmatpush2.bf16.xpose.msra.mxu0 0
      %421 = vmatprep.subr.bf16.mxu0 0
      %422 = vmatpush2.bf16.xpose.msra.mxu0 0
      %423 = vmatprep.subr.bf16.mxu0 0
      %424 = vmatpush2.bf16.xpose.msra.mxu0 0
      %425 = vmatprep.subr.bf16.mxu0 0
      %426 = vmatpush2.bf16.xpose.msra.mxu0 0
      %427 = vmatprep.subr.bf16.mxu0 0
      %428 = vmatpush2.bf16.xpose.msra.mxu0 0
      %429 = vmatprep.subr.bf16.mxu0 0
      %430 = vmatpush2.bf16.xpose.msra.mxu0 0
      %431 = vmatprep.subr.bf16.mxu0 0
      %432 = vmatpush2.bf16.xpose.msra.mxu0 0
      %433 = vmatprep.mubr.bf16.mxu0 0
      %434 = vmatmul.mubr.bf16.gmra.mxu0 %v396
      %v435 = vpop.f32.mrf.mxu0
      %v436 = vadd.f32 0.0, %v435
      %v437 = vpop.f32.mrf.mxu0
      %v438 = vpop.f32.mrf.mxu0
      %v439 = vpop.f32.mrf.mxu0
      %440 = vdwg.mxu0
      %v442 = vsel %vm256, %v212, 0
      %v445 = vsel %vm256, %v228, 0
      %447 = vmatprep.subr.bf16.mxu0 0
      %448 = vmatpush1.bf16.xpose.msra.mxu0 0
      %449 = vmatprep.subr.bf16.mxu0 0
      %450 = vmatpush1.bf16.xpose.msra.mxu0 0
      %451 = vmatprep.subr.bf16.mxu0 0
      %452 = vmatpush1.bf16.xpose.msra.mxu0 0
      %453 = vmatprep.subr.bf16.mxu0 0
      %454 = vmatpush1.bf16.xpose.msra.mxu0 0
      %455 = vmatprep.subr.bf16.mxu0 0
      %456 = vmatpush1.bf16.xpose.msra.mxu0 0
      %457 = vmatprep.subr.bf16.mxu0 0
      %458 = vmatpush1.bf16.xpose.msra.mxu0 0
      %459 = vmatprep.subr.bf16.mxu0 0
      %460 = vmatpush1.bf16.xpose.msra.mxu0 0
      %461 = vmatprep.subr.bf16.mxu0 0
      %462 = vmatpush1.bf16.xpose.msra.mxu0 %v445
      %463 = vmatprep.subr.bf16.mxu0 0
      %464 = vmatpush2.bf16.xpose.msra.mxu0 0
      %465 = vmatprep.subr.bf16.mxu0 0
      %466 = vmatpush2.bf16.xpose.msra.mxu0 0
      %467 = vmatprep.subr.bf16.mxu0 0
      %468 = vmatpush2.bf16.xpose.msra.mxu0 0
      %469 = vmatprep.subr.bf16.mxu0 0
      %470 = vmatpush2.bf16.xpose.msra.mxu0 0
      %471 = vmatprep.subr.bf16.mxu0 0
      %472 = vmatpush2.bf16.xpose.msra.mxu0 0
      %473 = vmatprep.subr.bf16.mxu0 0
      %474 = vmatpush2.bf16.xpose.msra.mxu0 0
      %475 = vmatprep.subr.bf16.mxu0 0
      %476 = vmatpush2.bf16.xpose.msra.mxu0 0
      %477 = vmatprep.subr.bf16.mxu0 0
      %478 = vmatpush2.bf16.xpose.msra.mxu0 0
      %479 = vmatprep.mubr.bf16.mxu0 0
      %480 = vmatmul.mubr.bf16.gmra.mxu0 %v442
      %v481 = vpop.f32.mrf.mxu0
      %v482 = vadd.f32 0.0, %v481
      %v483 = vpop.f32.mrf.mxu0
      %v484 = vpop.f32.mrf.mxu0
      %v485 = vpop.f32.mrf.mxu0
      %486 = vdwg.mxu0
      %v488 = vsel %vm256, %v213, 0
      %v491 = vsel %vm256, %v229, 0
      %493 = vmatprep.subr.bf16.mxu0 0
      %494 = vmatpush1.bf16.xpose.msra.mxu0 0
      %495 = vmatprep.subr.bf16.mxu0 0
      %496 = vmatpush1.bf16.xpose.msra.mxu0 0
      %497 = vmatprep.subr.bf16.mxu0 0
      %498 = vmatpush1.bf16.xpose.msra.mxu0 0
      %499 = vmatprep.subr.bf16.mxu0 0
      %500 = vmatpush1.bf16.xpose.msra.mxu0 0
      %501 = vmatprep.subr.bf16.mxu0 0
      %502 = vmatpush1.bf16.xpose.msra.mxu0 0
      %503 = vmatprep.subr.bf16.mxu0 0
      %504 = vmatpush1.bf16.xpose.msra.mxu0 0
      %505 = vmatprep.subr.bf16.mxu0 0
      %506 = vmatpush1.bf16.xpose.msra.mxu0 0
      %507 = vmatprep.subr.bf16.mxu0 0
      %508 = vmatpush1.bf16.xpose.msra.mxu0 %v491
      %509 = vmatprep.subr.bf16.mxu0 0
      %510 = vmatpush2.bf16.xpose.msra.mxu0 0
      %511 = vmatprep.subr.bf16.mxu0 0
      %512 = vmatpush2.bf16.xpose.msra.mxu0 0
      %513 = vmatprep.subr.bf16.mxu0 0
      %514 = vmatpush2.bf16.xpose.msra.mxu0 0
      %515 = vmatprep.subr.bf16.mxu0 0
      %516 = vmatpush2.bf16.xpose.msra.mxu0 0
      %517 = vmatprep.subr.bf16.mxu0 0
      %518 = vmatpush2.bf16.xpose.msra.mxu0 0
      %519 = vmatprep.subr.bf16.mxu0 0
      %520 = vmatpush2.bf16.xpose.msra.mxu0 0
      %521 = vmatprep.subr.bf16.mxu0 0
      %522 = vmatpush2.bf16.xpose.msra.mxu0 0
      %523 = vmatprep.subr.bf16.mxu0 0
      %524 = vmatpush2.bf16.xpose.msra.mxu0 0
      %525 = vmatprep.mubr.bf16.mxu0 0
      %526 = vmatmul.mubr.bf16.gmra.mxu0 %v488
      %v527 = vpop.f32.mrf.mxu0
      %v528 = vadd.f32 0.0, %v527
      %v529 = vpop.f32.mrf.mxu0
      %v530 = vpop.f32.mrf.mxu0
      %v531 = vpop.f32.mrf.mxu0
      %532 = vdwg.mxu0
      %v534 = vsel %vm256, %v214, 0
      %v537 = vsel %vm256, %v230, 0
      %539 = vmatprep.subr.bf16.mxu0 0
      %540 = vmatpush1.bf16.xpose.msra.mxu0 0
      %541 = vmatprep.subr.bf16.mxu0 0
      %542 = vmatpush1.bf16.xpose.msra.mxu0 0
      %543 = vmatprep.subr.bf16.mxu0 0
      %544 = vmatpush1.bf16.xpose.msra.mxu0 0
      %545 = vmatprep.subr.bf16.mxu0 0
      %546 = vmatpush1.bf16.xpose.msra.mxu0 0
      %547 = vmatprep.subr.bf16.mxu0 0
      %548 = vmatpush1.bf16.xpose.msra.mxu0 0
      %549 = vmatprep.subr.bf16.mxu0 0
      %550 = vmatpush1.bf16.xpose.msra.mxu0 0
      %551 = vmatprep.subr.bf16.mxu0 0
      %552 = vmatpush1.bf16.xpose.msra.mxu0 0
      %553 = vmatprep.subr.bf16.mxu0 0
      %554 = vmatpush1.bf16.xpose.msra.mxu0 %v537
      %555 = vmatprep.subr.bf16.mxu0 0
      %556 = vmatpush2.bf16.xpose.msra.mxu0 0
      %557 = vmatprep.subr.bf16.mxu0 0
      %558 = vmatpush2.bf16.xpose.msra.mxu0 0
      %559 = vmatprep.subr.bf16.mxu0 0
      %560 = vmatpush2.bf16.xpose.msra.mxu0 0
      %561 = vmatprep.subr.bf16.mxu0 0
      %562 = vmatpush2.bf16.xpose.msra.mxu0 0
      %563 = vmatprep.subr.bf16.mxu0 0
      %564 = vmatpush2.bf16.xpose.msra.mxu0 0
      %565 = vmatprep.subr.bf16.mxu0 0
      %566 = vmatpush2.bf16.xpose.msra.mxu0 0
      %567 = vmatprep.subr.bf16.mxu0 0
      %568 = vmatpush2.bf16.xpose.msra.mxu0 0
      %569 = vmatprep.subr.bf16.mxu0 0
      %570 = vmatpush2.bf16.xpose.msra.mxu0 0
      %571 = vmatprep.mubr.bf16.mxu0 0
      %572 = vmatmul.mubr.bf16.gmra.mxu0 %v534
      %v573 = vpop.f32.mrf.mxu0
      %v574 = vadd.f32 0.0, %v573
      %v575 = vpop.f32.mrf.mxu0
      %v576 = vpop.f32.mrf.mxu0
      %v577 = vpop.f32.mrf.mxu0
      %578 = vdwg.mxu0
      %v580 = vsel %vm256, %v215, 0
      %v583 = vsel %vm256, %v231, 0
      %585 = vmatprep.subr.bf16.mxu0 0
      %586 = vmatpush1.bf16.xpose.msra.mxu0 0
      %587 = vmatprep.subr.bf16.mxu0 0
      %588 = vmatpush1.bf16.xpose.msra.mxu0 0
      %589 = vmatprep.subr.bf16.mxu0 0
      %590 = vmatpush1.bf16.xpose.msra.mxu0 0
      %591 = vmatprep.subr.bf16.mxu0 0
      %592 = vmatpush1.bf16.xpose.msra.mxu0 0
      %593 = vmatprep.subr.bf16.mxu0 0
      %594 = vmatpush1.bf16.xpose.msra.mxu0 0
      %595 = vmatprep.subr.bf16.mxu0 0
      %596 = vmatpush1.bf16.xpose.msra.mxu0 0
      %597 = vmatprep.subr.bf16.mxu0 0
      %598 = vmatpush1.bf16.xpose.msra.mxu0 0
      %599 = vmatprep.subr.bf16.mxu0 0
      %600 = vmatpush1.bf16.xpose.msra.mxu0 %v583
      %601 = vmatprep.subr.bf16.mxu0 0
      %602 = vmatpush2.bf16.xpose.msra.mxu0 0
      %603 = vmatprep.subr.bf16.mxu0 0
      %604 = vmatpush2.bf16.xpose.msra.mxu0 0
      %605 = vmatprep.subr.bf16.mxu0 0
      %606 = vmatpush2.bf16.xpose.msra.mxu0 0
      %607 = vmatprep.subr.bf16.mxu0 0
      %608 = vmatpush2.bf16.xpose.msra.mxu0 0
      %609 = vmatprep.subr.bf16.mxu0 0
      %610 = vmatpush2.bf16.xpose.msra.mxu0 0
      %611 = vmatprep.subr.bf16.mxu0 0
      %612 = vmatpush2.bf16.xpose.msra.mxu0 0
      %613 = vmatprep.subr.bf16.mxu0 0
      %614 = vmatpush2.bf16.xpose.msra.mxu0 0
      %615 = vmatprep.subr.bf16.mxu0 0
      %616 = vmatpush2.bf16.xpose.msra.mxu0 0
      %617 = vmatprep.mubr.bf16.mxu0 0
      %618 = vmatmul.mubr.bf16.gmra.mxu0 %v580
      %v619 = vpop.f32.mrf.mxu0
      %v620 = vadd.f32 0.0, %v619
      %v621 = vpop.f32.mrf.mxu0
      %v622 = vpop.f32.mrf.mxu0
      %v623 = vpop.f32.mrf.mxu0
      %624 = vdwg.mxu0
      %v626 = vsel %vm256, %v216, 0
      %v629 = vsel %vm256, %v232, 0
      %631 = vmatprep.subr.bf16.mxu0 0
      %632 = vmatpush1.bf16.xpose.msra.mxu0 0
      %633 = vmatprep.subr.bf16.mxu0 0
      %634 = vmatpush1.bf16.xpose.msra.mxu0 0
      %635 = vmatprep.subr.bf16.mxu0 0
      %636 = vmatpush1.bf16.xpose.msra.mxu0 0
      %637 = vmatprep.subr.bf16.mxu0 0
      %638 = vmatpush1.bf16.xpose.msra.mxu0 0
      %639 = vmatprep.subr.bf16.mxu0 0
      %640 = vmatpush1.bf16.xpose.msra.mxu0 0
      %641 = vmatprep.subr.bf16.mxu0 0
      %642 = vmatpush1.bf16.xpose.msra.mxu0 0
      %643 = vmatprep.subr.bf16.mxu0 0
      %644 = vmatpush1.bf16.xpose.msra.mxu0 0
      %645 = vmatprep.subr.bf16.mxu0 0
      %646 = vmatpush1.bf16.xpose.msra.mxu0 %v629
      %647 = vmatprep.subr.bf16.mxu0 0
      %648 = vmatpush2.bf16.xpose.msra.mxu0 0
      %649 = vmatprep.subr.bf16.mxu0 0
      %650 = vmatpush2.bf16.xpose.msra.mxu0 0
      %651 = vmatprep.subr.bf16.mxu0 0
      %652 = vmatpush2.bf16.xpose.msra.mxu0 0
      %653 = vmatprep.subr.bf16.mxu0 0
      %654 = vmatpush2.bf16.xpose.msra.mxu0 0
      %655 = vmatprep.subr.bf16.mxu0 0
      %656 = vmatpush2.bf16.xpose.msra.mxu0 0
      %657 = vmatprep.subr.bf16.mxu0 0
      %658 = vmatpush2.bf16.xpose.msra.mxu0 0
      %659 = vmatprep.subr.bf16.mxu0 0
      %660 = vmatpush2.bf16.xpose.msra.mxu0 0
      %661 = vmatprep.subr.bf16.mxu0 0
      %662 = vmatpush2.bf16.xpose.msra.mxu0 0
      %663 = vmatprep.mubr.bf16.mxu0 0
      %664 = vmatmul.mubr.bf16.gmra.mxu0 %v626
      %v665 = vpop.f32.mrf.mxu0
      %v666 = vadd.f32 0.0, %v665
      %v667 = vpop.f32.mrf.mxu0
      %v668 = vpop.f32.mrf.mxu0
      %v669 = vpop.f32.mrf.mxu0
      %670 = vdwg.mxu0
      %v672 = vsel %vm256, %v217, 0
      %v675 = vsel %vm256, %v233, 0
      %677 = vmatprep.subr.bf16.mxu0 0
      %678 = vmatpush1.bf16.xpose.msra.mxu0 0
      %679 = vmatprep.subr.bf16.mxu0 0
      %680 = vmatpush1.bf16.xpose.msra.mxu0 0
      %681 = vmatprep.subr.bf16.mxu0 0
      %682 = vmatpush1.bf16.xpose.msra.mxu0 0
      %683 = vmatprep.subr.bf16.mxu0 0
      %684 = vmatpush1.bf16.xpose.msra.mxu0 0
      %685 = vmatprep.subr.bf16.mxu0 0
      %686 = vmatpush1.bf16.xpose.msra.mxu0 0
      %687 = vmatprep.subr.bf16.mxu0 0
      %688 = vmatpush1.bf16.xpose.msra.mxu0 0
      %689 = vmatprep.subr.bf16.mxu0 0
      %690 = vmatpush1.bf16.xpose.msra.mxu0 0
      %691 = vmatprep.subr.bf16.mxu0 0
      %692 = vmatpush1.bf16.xpose.msra.mxu0 %v675
      %693 = vmatprep.subr.bf16.mxu0 0
      %694 = vmatpush2.bf16.xpose.msra.mxu0 0
      %695 = vmatprep.subr.bf16.mxu0 0
      %696 = vmatpush2.bf16.xpose.msra.mxu0 0
      %697 = vmatprep.subr.bf16.mxu0 0
      %698 = vmatpush2.bf16.xpose.msra.mxu0 0
      %699 = vmatprep.subr.bf16.mxu0 0
      %700 = vmatpush2.bf16.xpose.msra.mxu0 0
      %701 = vmatprep.subr.bf16.mxu0 0
      %702 = vmatpush2.bf16.xpose.msra.mxu0 0
      %703 = vmatprep.subr.bf16.mxu0 0
      %704 = vmatpush2.bf16.xpose.msra.mxu0 0
      %705 = vmatprep.subr.bf16.mxu0 0
      %706 = vmatpush2.bf16.xpose.msra.mxu0 0
      %707 = vmatprep.subr.bf16.mxu0 0
      %708 = vmatpush2.bf16.xpose.msra.mxu0 0
      %709 = vmatprep.mubr.bf16.mxu0 0
      %710 = vmatmul.mubr.bf16.gmra.mxu0 %v672
      %v711 = vpop.f32.mrf.mxu0
      %v712 = vadd.f32 0.0, %v711
      %v713 = vpop.f32.mrf.mxu0
      %v714 = vpop.f32.mrf.mxu0
      %v715 = vpop.f32.mrf.mxu0
      %716 = vdwg.mxu0
      %v718 = vsel %vm256, %v218, 0
      %v721 = vsel %vm256, %v234, 0
      %723 = vmatprep.subr.bf16.mxu0 0
      %724 = vmatpush1.bf16.xpose.msra.mxu0 0
      %725 = vmatprep.subr.bf16.mxu0 0
      %726 = vmatpush1.bf16.xpose.msra.mxu0 0
      %727 = vmatprep.subr.bf16.mxu0 0
      %728 = vmatpush1.bf16.xpose.msra.mxu0 0
      %729 = vmatprep.subr.bf16.mxu0 0
      %730 = vmatpush1.bf16.xpose.msra.mxu0 0
      %731 = vmatprep.subr.bf16.mxu0 0
      %732 = vmatpush1.bf16.xpose.msra.mxu0 0
      %733 = vmatprep.subr.bf16.mxu0 0
      %734 = vmatpush1.bf16.xpose.msra.mxu0 0
      %735 = vmatprep.subr.bf16.mxu0 0
      %736 = vmatpush1.bf16.xpose.msra.mxu0 0
      %737 = vmatprep.subr.bf16.mxu0 0
      %738 = vmatpush1.bf16.xpose.msra.mxu0 %v721
      %739 = vmatprep.subr.bf16.mxu0 0
      %740 = vmatpush2.bf16.xpose.msra.mxu0 0
      %741 = vmatprep.subr.bf16.mxu0 0
      %742 = vmatpush2.bf16.xpose.msra.mxu0 0
      %743 = vmatprep.subr.bf16.mxu0 0
      %744 = vmatpush2.bf16.xpose.msra.mxu0 0
      %745 = vmatprep.subr.bf16.mxu0 0
      %746 = vmatpush2.bf16.xpose.msra.mxu0 0
      %747 = vmatprep.subr.bf16.mxu0 0
      %748 = vmatpush2.bf16.xpose.msra.mxu0 0
      %749 = vmatprep.subr.bf16.mxu0 0
      %750 = vmatpush2.bf16.xpose.msra.mxu0 0
      %751 = vmatprep.subr.bf16.mxu0 0
      %752 = vmatpush2.bf16.xpose.msra.mxu0 0
      %753 = vmatprep.subr.bf16.mxu0 0
      %754 = vmatpush2.bf16.xpose.msra.mxu0 0
      %755 = vmatprep.mubr.bf16.mxu0 0
      %756 = vmatmul.mubr.bf16.gmra.mxu0 %v718
      %v757 = vpop.f32.mrf.mxu0
      %v758 = vadd.f32 0.0, %v757
      %v759 = vpop.f32.mrf.mxu0
      %v760 = vpop.f32.mrf.mxu0
      %v761 = vpop.f32.mrf.mxu0
      %762 = vdwg.mxu0
      %v764 = vsel %vm256, %v219, 0
      %v767 = vsel %vm256, %v235, 0
      %769 = vmatprep.subr.bf16.mxu0 0
      %770 = vmatpush1.bf16.xpose.msra.mxu0 0
      %771 = vmatprep.subr.bf16.mxu0 0
      %772 = vmatpush1.bf16.xpose.msra.mxu0 0
      %773 = vmatprep.subr.bf16.mxu0 0
      %774 = vmatpush1.bf16.xpose.msra.mxu0 0
      %775 = vmatprep.subr.bf16.mxu0 0
      %776 = vmatpush1.bf16.xpose.msra.mxu0 0
      %777 = vmatprep.subr.bf16.mxu0 0
      %778 = vmatpush1.bf16.xpose.msra.mxu0 0
      %779 = vmatprep.subr.bf16.mxu0 0
      %780 = vmatpush1.bf16.xpose.msra.mxu0 0
      %781 = vmatprep.subr.bf16.mxu0 0
      %782 = vmatpush1.bf16.xpose.msra.mxu0 0
      %783 = vmatprep.subr.bf16.mxu0 0
      %784 = vmatpush1.bf16.xpose.msra.mxu0 %v767
      %785 = vmatprep.subr.bf16.mxu0 0
      %786 = vmatpush2.bf16.xpose.msra.mxu0 0
      %787 = vmatprep.subr.bf16.mxu0 0
      %788 = vmatpush2.bf16.xpose.msra.mxu0 0
      %789 = vmatprep.subr.bf16.mxu0 0
      %790 = vmatpush2.bf16.xpose.msra.mxu0 0
      %791 = vmatprep.subr.bf16.mxu0 0
      %792 = vmatpush2.bf16.xpose.msra.mxu0 0
      %793 = vmatprep.subr.bf16.mxu0 0
      %794 = vmatpush2.bf16.xpose.msra.mxu0 0
      %795 = vmatprep.subr.bf16.mxu0 0
      %796 = vmatpush2.bf16.xpose.msra.mxu0 0
      %797 = vmatprep.subr.bf16.mxu0 0
      %798 = vmatpush2.bf16.xpose.msra.mxu0 0
      %799 = vmatprep.subr.bf16.mxu0 0
      %800 = vmatpush2.bf16.xpose.msra.mxu0 0
      %801 = vmatprep.mubr.bf16.mxu0 0
      %802 = vmatmul.mubr.bf16.gmra.mxu0 %v764
      %v803 = vpop.f32.mrf.mxu0
      %v804 = vadd.f32 0.0, %v803
      %v805 = vpop.f32.mrf.mxu0
      %v806 = vpop.f32.mrf.mxu0
      %v807 = vpop.f32.mrf.mxu0
      %808 = vdwg.mxu0
      %v810 = vsel %vm256, %v220, 0
      %v813 = vsel %vm256, %v236, 0
      %815 = vmatprep.subr.bf16.mxu0 0
      %816 = vmatpush1.bf16.xpose.msra.mxu0 0
      %817 = vmatprep.subr.bf16.mxu0 0
      %818 = vmatpush1.bf16.xpose.msra.mxu0 0
      %819 = vmatprep.subr.bf16.mxu0 0
      %820 = vmatpush1.bf16.xpose.msra.mxu0 0
      %821 = vmatprep.subr.bf16.mxu0 0
      %822 = vmatpush1.bf16.xpose.msra.mxu0 0
      %823 = vmatprep.subr.bf16.mxu0 0
      %824 = vmatpush1.bf16.xpose.msra.mxu0 0
      %825 = vmatprep.subr.bf16.mxu0 0
      %826 = vmatpush1.bf16.xpose.msra.mxu0 0
      %827 = vmatprep.subr.bf16.mxu0 0
      %828 = vmatpush1.bf16.xpose.msra.mxu0 0
      %829 = vmatprep.subr.bf16.mxu0 0
      %830 = vmatpush1.bf16.xpose.msra.mxu0 %v813
      %831 = vmatprep.subr.bf16.mxu0 0
      %832 = vmatpush2.bf16.xpose.msra.mxu0 0
      %833 = vmatprep.subr.bf16.mxu0 0
      %834 = vmatpush2.bf16.xpose.msra.mxu0 0
      %835 = vmatprep.subr.bf16.mxu0 0
      %836 = vmatpush2.bf16.xpose.msra.mxu0 0
      %837 = vmatprep.subr.bf16.mxu0 0
      %838 = vmatpush2.bf16.xpose.msra.mxu0 0
      %839 = vmatprep.subr.bf16.mxu0 0
      %840 = vmatpush2.bf16.xpose.msra.mxu0 0
      %841 = vmatprep.subr.bf16.mxu0 0
      %842 = vmatpush2.bf16.xpose.msra.mxu0 0
      %843 = vmatprep.subr.bf16.mxu0 0
      %844 = vmatpush2.bf16.xpose.msra.mxu0 0
      %845 = vmatprep.subr.bf16.mxu0 0
      %846 = vmatpush2.bf16.xpose.msra.mxu0 0
      %847 = vmatprep.mubr.bf16.mxu0 0
      %848 = vmatmul.mubr.bf16.gmra.mxu0 %v810
      %v849 = vpop.f32.mrf.mxu0
      %v850 = vadd.f32 0.0, %v849
      %v851 = vpop.f32.mrf.mxu0
      %v852 = vpop.f32.mrf.mxu0
      %v853 = vpop.f32.mrf.mxu0
      %854 = vdwg.mxu0
      %v856 = vsel %vm256, %v221, 0
      %v859 = vsel %vm256, %v237, 0
      %861 = vmatprep.subr.bf16.mxu0 0
      %862 = vmatpush1.bf16.xpose.msra.mxu0 0
      %863 = vmatprep.subr.bf16.mxu0 0
      %864 = vmatpush1.bf16.xpose.msra.mxu0 0
      %865 = vmatprep.subr.bf16.mxu0 0
      %866 = vmatpush1.bf16.xpose.msra.mxu0 0
      %867 = vmatprep.subr.bf16.mxu0 0
      %868 = vmatpush1.bf16.xpose.msra.mxu0 0
      %869 = vmatprep.subr.bf16.mxu0 0
      %870 = vmatpush1.bf16.xpose.msra.mxu0 0
      %871 = vmatprep.subr.bf16.mxu0 0
      %872 = vmatpush1.bf16.xpose.msra.mxu0 0
      %873 = vmatprep.subr.bf16.mxu0 0
      %874 = vmatpush1.bf16.xpose.msra.mxu0 0
      %875 = vmatprep.subr.bf16.mxu0 0
      %876 = vmatpush1.bf16.xpose.msra.mxu0 %v859
      %877 = vmatprep.subr.bf16.mxu0 0
      %878 = vmatpush2.bf16.xpose.msra.mxu0 0
      %879 = vmatprep.subr.bf16.mxu0 0
      %880 = vmatpush2.bf16.xpose.msra.mxu0 0
      %881 = vmatprep.subr.bf16.mxu0 0
      %882 = vmatpush2.bf16.xpose.msra.mxu0 0
      %883 = vmatprep.subr.bf16.mxu0 0
      %884 = vmatpush2.bf16.xpose.msra.mxu0 0
      %885 = vmatprep.subr.bf16.mxu0 0
      %886 = vmatpush2.bf16.xpose.msra.mxu0 0
      %887 = vmatprep.subr.bf16.mxu0 0
      %888 = vmatpush2.bf16.xpose.msra.mxu0 0
      %889 = vmatprep.subr.bf16.mxu0 0
      %890 = vmatpush2.bf16.xpose.msra.mxu0 0
      %891 = vmatprep.subr.bf16.mxu0 0
      %892 = vmatpush2.bf16.xpose.msra.mxu0 0
      %893 = vmatprep.mubr.bf16.mxu0 0
      %894 = vmatmul.mubr.bf16.gmra.mxu0 %v856
      %v895 = vpop.f32.mrf.mxu0
      %v896 = vadd.f32 0.0, %v895
      %v897 = vpop.f32.mrf.mxu0
      %v898 = vpop.f32.mrf.mxu0
      %v899 = vpop.f32.mrf.mxu0
      %900 = vdwg.mxu0
      %v902 = vsel %vm256, %v222, 0
      %v905 = vsel %vm256, %v238, 0
      %907 = vmatprep.subr.bf16.mxu0 0
      %908 = vmatpush1.bf16.xpose.msra.mxu0 0
      %909 = vmatprep.subr.bf16.mxu0 0
      %910 = vmatpush1.bf16.xpose.msra.mxu0 0
      %911 = vmatprep.subr.bf16.mxu0 0
      %912 = vmatpush1.bf16.xpose.msra.mxu0 0
      %913 = vmatprep.subr.bf16.mxu0 0
      %914 = vmatpush1.bf16.xpose.msra.mxu0 0
      %915 = vmatprep.subr.bf16.mxu0 0
      %916 = vmatpush1.bf16.xpose.msra.mxu0 0
      %917 = vmatprep.subr.bf16.mxu0 0
      %918 = vmatpush1.bf16.xpose.msra.mxu0 0
      %919 = vmatprep.subr.bf16.mxu0 0
      %920 = vmatpush1.bf16.xpose.msra.mxu0 0
      %921 = vmatprep.subr.bf16.mxu0 0
      %922 = vmatpush1.bf16.xpose.msra.mxu0 %v905
      %923 = vmatprep.subr.bf16.mxu0 0
      %924 = vmatpush2.bf16.xpose.msra.mxu0 0
      %925 = vmatprep.subr.bf16.mxu0 0
      %926 = vmatpush2.bf16.xpose.msra.mxu0 0
      %927 = vmatprep.subr.bf16.mxu0 0
      %928 = vmatpush2.bf16.xpose.msra.mxu0 0
      %929 = vmatprep.subr.bf16.mxu0 0
      %930 = vmatpush2.bf16.xpose.msra.mxu0 0
      %931 = vmatprep.subr.bf16.mxu0 0
      %932 = vmatpush2.bf16.xpose.msra.mxu0 0
      %933 = vmatprep.subr.bf16.mxu0 0
      %934 = vmatpush2.bf16.xpose.msra.mxu0 0
      %935 = vmatprep.subr.bf16.mxu0 0
      %936 = vmatpush2.bf16.xpose.msra.mxu0 0
      %937 = vmatprep.subr.bf16.mxu0 0
      %938 = vmatpush2.bf16.xpose.msra.mxu0 0
      %939 = vmatprep.mubr.bf16.mxu0 0
      %940 = vmatmul.mubr.bf16.gmra.mxu0 %v902
      %v941 = vpop.f32.mrf.mxu0
      %v942 = vadd.f32 0.0, %v941
      %v943 = vpop.f32.mrf.mxu0
      %v944 = vpop.f32.mrf.mxu0
      %v945 = vpop.f32.mrf.mxu0
      %946 = vdwg.mxu0
      %v948 = vsel %vm256, %v223, 0
      %v951 = vsel %vm256, %v239, 0
      %953 = vmatprep.subr.bf16.mxu0 0
      %954 = vmatpush1.bf16.xpose.msra.mxu0 0
      %955 = vmatprep.subr.bf16.mxu0 0
      %956 = vmatpush1.bf16.xpose.msra.mxu0 0
      %957 = vmatprep.subr.bf16.mxu0 0
      %958 = vmatpush1.bf16.xpose.msra.mxu0 0
      %959 = vmatprep.subr.bf16.mxu0 0
      %960 = vmatpush1.bf16.xpose.msra.mxu0 0
      %961 = vmatprep.subr.bf16.mxu0 0
      %962 = vmatpush1.bf16.xpose.msra.mxu0 0
      %963 = vmatprep.subr.bf16.mxu0 0
      %964 = vmatpush1.bf16.xpose.msra.mxu0 0
      %965 = vmatprep.subr.bf16.mxu0 0
      %966 = vmatpush1.bf16.xpose.msra.mxu0 0
      %967 = vmatprep.subr.bf16.mxu0 0
      %968 = vmatpush1.bf16.xpose.msra.mxu0 %v951
      %969 = vmatprep.subr.bf16.mxu0 0
      %970 = vmatpush2.bf16.xpose.msra.mxu0 0
      %971 = vmatprep.subr.bf16.mxu0 0
      %972 = vmatpush2.bf16.xpose.msra.mxu0 0
      %973 = vmatprep.subr.bf16.mxu0 0
      %974 = vmatpush2.bf16.xpose.msra.mxu0 0
      %975 = vmatprep.subr.bf16.mxu0 0
      %976 = vmatpush2.bf16.xpose.msra.mxu0 0
      %977 = vmatprep.subr.bf16.mxu0 0
      %978 = vmatpush2.bf16.xpose.msra.mxu0 0
      %979 = vmatprep.subr.bf16.mxu0 0
      %980 = vmatpush2.bf16.xpose.msra.mxu0 0
      %981 = vmatprep.subr.bf16.mxu0 0
      %982 = vmatpush2.bf16.xpose.msra.mxu0 0
      %983 = vmatprep.subr.bf16.mxu0 0
      %984 = vmatpush2.bf16.xpose.msra.mxu0 0
      %985 = vmatprep.mubr.bf16.mxu0 0
      %986 = vmatmul.mubr.bf16.gmra.mxu0 %v948
      %v987 = vpop.f32.mrf.mxu0
      %v988 = vadd.f32 0.0, %v987
      %v989 = vpop.f32.mrf.mxu0
      %v990 = vpop.f32.mrf.mxu0
      %v991 = vpop.f32.mrf.mxu0
      %992 = vdwg.mxu0
      %v993 = vmul.f32 %v298, 0.35355338
      %v994 = vmul.f32 %v344, 0.35355338
      %v995 = vmul.f32 %v390, 0.35355338
      %v996 = vmul.f32 %v436, 0.35355338
      %v997 = vmul.f32 %v482, 0.35355338
      %v998 = vmul.f32 %v528, 0.35355338
      %v999 = vmul.f32 %v574, 0.35355338
      %v1000 = vmul.f32 %v620, 0.35355338
      %v1001 = vmul.f32 %v666, 0.35355338
      %v1002 = vmul.f32 %v712, 0.35355338
      %v1003 = vmul.f32 %v758, 0.35355338
      %v1004 = vmul.f32 %v804, 0.35355338
      %v1005 = vmul.f32 %v850, 0.35355338
      %v1006 = vmul.f32 %v896, 0.35355338
      %v1007 = vmul.f32 %v942, 0.35355338
      %v1008 = vmul.f32 %v988, 0.35355338
      %vm1009 = vcmask 9216
      %v1010 = vsel %vm1009, %v993, -inf
      %1011 = vmax.xlane.f32.xlu0 %v1010
      %v1012 = vpop.xlane.xlu0 %1011
      %v1013 = vsel %vm1009, %v994, -inf
      %1014 = vmax.xlane.f32.xlu0 %v1013
      %v1015 = vpop.xlane.xlu0 %1014
      %v1016 = vsel %vm1009, %v995, -inf
      %1017 = vmax.xlane.f32.xlu0 %v1016
      %v1018 = vpop.xlane.xlu0 %1017
      %v1019 = vsel %vm1009, %v996, -inf
      %1020 = vmax.xlane.f32.xlu0 %v1019
      %v1021 = vpop.xlane.xlu0 %1020
      %v1022 = vsel %vm1009, %v997, -inf
      %1023 = vmax.xlane.f32.xlu0 %v1022
      %v1024 = vpop.xlane.xlu0 %1023
      %v1025 = vsel %vm1009, %v998, -inf
      %1026 = vmax.xlane.f32.xlu0 %v1025
      %v1027 = vpop.xlane.xlu0 %1026
      %v1028 = vsel %vm1009, %v999, -inf
      %1029 = vmax.xlane.f32.xlu0 %v1028
      %v1030 = vpop.xlane.xlu0 %1029
      %v1031 = vsel %vm1009, %v1000, -inf
      %1032 = vmax.xlane.f32.xlu0 %v1031
      %v1033 = vpop.xlane.xlu0 %1032
      %v1034 = vsel %vm1009, %v1001, -inf
      %1035 = vmax.xlane.f32.xlu0 %v1034
      %v1036 = vpop.xlane.xlu0 %1035
      %v1037 = vsel %vm1009, %v1002, -inf
      %1038 = vmax.xlane.f32.xlu0 %v1037
      %v1039 = vpop.xlane.xlu0 %1038
      %v1040 = vsel %vm1009, %v1003, -inf
      %1041 = vmax.xlane.f32.xlu0 %v1040
      %v1042 = vpop.xlane.xlu0 %1041
      %v1043 = vsel %vm1009, %v1004, -inf
      %1044 = vmax.xlane.f32.xlu0 %v1043
      %v1045 = vpop.xlane.xlu0 %1044
      %v1046 = vsel %vm1009, %v1005, -inf
      %1047 = vmax.xlane.f32.xlu0 %v1046
      %v1048 = vpop.xlane.xlu0 %1047
      %v1049 = vsel %vm1009, %v1006, -inf
      %1050 = vmax.xlane.f32.xlu0 %v1049
      %v1051 = vpop.xlane.xlu0 %1050
      %v1052 = vsel %vm1009, %v1007, -inf
      %1053 = vmax.xlane.f32.xlu0 %v1052
      %v1054 = vpop.xlane.xlu0 %1053
      %v1055 = vsel %vm1009, %v1008, -inf
      %1056 = vmax.xlane.f32.xlu0 %v1055
      %v1057 = vpop.xlane.xlu0 %1056
      %v1058 = vsub.f32 %v993, %v1012
      %v1059 = vsub.f32 %v994, %v1015
      %v1060 = vsub.f32 %v995, %v1018
      %v1061 = vsub.f32 %v996, %v1021
      %v1062 = vsub.f32 %v997, %v1024
      %v1063 = vsub.f32 %v998, %v1027
      %v1064 = vsub.f32 %v999, %v1030
      %v1065 = vsub.f32 %v1000, %v1033
      %v1066 = vsub.f32 %v1001, %v1036
      %v1067 = vsub.f32 %v1002, %v1039
      %v1068 = vsub.f32 %v1003, %v1042
      %v1069 = vsub.f32 %v1004, %v1045
      %v1070 = vsub.f32 %v1005, %v1048
      %v1071 = vsub.f32 %v1006, %v1051
      %v1072 = vsub.f32 %v1007, %v1054
      %v1073 = vsub.f32 %v1008, %v1057
      %v1074 = vmul.f32 %v1058, 1.442695
      %v1075 = vpow.pop %v1074
      %v1076 = vmul.f32 %v1059, 1.442695
      %v1077 = vpow.pop %v1076
      %v1078 = vmul.f32 %v1060, 1.442695
      %v1079 = vpow.pop %v1078
      %v1080 = vmul.f32 %v1061, 1.442695
      %v1081 = vpow.pop %v1080
      %v1082 = vmul.f32 %v1062, 1.442695
      %v1083 = vpow.pop %v1082
      %v1084 = vmul.f32 %v1063, 1.442695
      %v1085 = vpow.pop %v1084
      %v1086 = vmul.f32 %v1064, 1.442695
      %v1087 = vpow.pop %v1086
      %v1088 = vmul.f32 %v1065, 1.442695
      %v1089 = vpow.pop %v1088
      %v1090 = vmul.f32 %v1066, 1.442695
      %v1091 = vpow.pop %v1090
      %v1092 = vmul.f32 %v1067, 1.442695
      %v1093 = vpow.pop %v1092
      %v1094 = vmul.f32 %v1068, 1.442695
      %v1095 = vpow.pop %v1094
      %v1096 = vmul.f32 %v1069, 1.442695
      %v1097 = vpow.pop %v1096
      %v1098 = vmul.f32 %v1070, 1.442695
      %v1099 = vpow.pop %v1098
      %v1100 = vmul.f32 %v1071, 1.442695
      %v1101 = vpow.pop %v1100
      %v1102 = vmul.f32 %v1072, 1.442695
      %v1103 = vpow.pop %v1102
      %v1104 = vmul.f32 %v1073, 1.442695
      %v1105 = vpow.pop %v1104
      %v1106 = vsel %vm1009, %v1075, 0.0
      %1107 = vadd.xlane.f32.xlu0 %v1106
      %v1108 = vpop.xlane.xlu0 %1107
      %v1109 = vsel %vm1009, %v1077, 0.0
      %1110 = vadd.xlane.f32.xlu0 %v1109
      %v1111 = vpop.xlane.xlu0 %1110
      %v1112 = vsel %vm1009, %v1079, 0.0
      %1113 = vadd.xlane.f32.xlu0 %v1112
      %v1114 = vpop.xlane.xlu0 %1113
      %v1115 = vsel %vm1009, %v1081, 0.0
      %1116 = vadd.xlane.f32.xlu0 %v1115
      %v1117 = vpop.xlane.xlu0 %1116
      %v1118 = vsel %vm1009, %v1083, 0.0
      %1119 = vadd.xlane.f32.xlu0 %v1118
      %v1120 = vpop.xlane.xlu0 %1119
      %v1121 = vsel %vm1009, %v1085, 0.0
      %1122 = vadd.xlane.f32.xlu0 %v1121
      %v1123 = vpop.xlane.xlu0 %1122
      %v1124 = vsel %vm1009, %v1087, 0.0
      %1125 = vadd.xlane.f32.xlu0 %v1124
      %v1126 = vpop.xlane.xlu0 %1125
      %v1127 = vsel %vm1009, %v1089, 0.0
      %1128 = vadd.xlane.f32.xlu0 %v1127
      %v1129 = vpop.xlane.xlu0 %1128
      %v1130 = vsel %vm1009, %v1091, 0.0
      %1131 = vadd.xlane.f32.xlu0 %v1130
      %v1132 = vpop.xlane.xlu0 %1131
      %v1133 = vsel %vm1009, %v1093, 0.0
      %1134 = vadd.xlane.f32.xlu0 %v1133
      %v1135 = vpop.xlane.xlu0 %1134
      %v1136 = vsel %vm1009, %v1095, 0.0
      %1137 = vadd.xlane.f32.xlu0 %v1136
      %v1138 = vpop.xlane.xlu0 %1137
      %v1139 = vsel %vm1009, %v1097, 0.0
      %1140 = vadd.xlane.f32.xlu0 %v1139
      %v1141 = vpop.xlane.xlu0 %1140
      %v1142 = vsel %vm1009, %v1099, 0.0
      %1143 = vadd.xlane.f32.xlu0 %v1142
      %v1144 = vpop.xlane.xlu0 %1143
      %v1145 = vsel %vm1009, %v1101, 0.0
      %1146 = vadd.xlane.f32.xlu0 %v1145
      %v1147 = vpop.xlane.xlu0 %1146
      %v1148 = vsel %vm1009, %v1103, 0.0
      %1149 = vadd.xlane.f32.xlu0 %v1148
      %v1150 = vpop.xlane.xlu0 %1149
      %v1151 = vsel %vm1009, %v1105, 0.0
      %1152 = vadd.xlane.f32.xlu0 %v1151
      %v1153 = vpop.xlane.xlu0 %1152
      %v1154 = vrcp.pop %v1108
      %v1155 = vrcp.pop %v1111
      %v1156 = vrcp.pop %v1114
      %v1157 = vrcp.pop %v1117
      %v1158 = vrcp.pop %v1120
      %v1159 = vrcp.pop %v1123
      %v1160 = vrcp.pop %v1126
      %v1161 = vrcp.pop %v1129
      %v1162 = vrcp.pop %v1132
      %v1163 = vrcp.pop %v1135
      %v1164 = vrcp.pop %v1138
      %v1165 = vrcp.pop %v1141
      %v1166 = vrcp.pop %v1144
      %v1167 = vrcp.pop %v1147
      %v1168 = vrcp.pop %v1150
      %v1169 = vrcp.pop %v1153
      %v1170 = vmul.f32 %v1075, %v1154
      %v1171 = vmul.f32 %v1077, %v1155
      %v1172 = vmul.f32 %v1079, %v1156
      %v1173 = vmul.f32 %v1081, %v1157
      %v1174 = vmul.f32 %v1083, %v1158
      %v1175 = vmul.f32 %v1085, %v1159
      %v1176 = vmul.f32 %v1087, %v1160
      %v1177 = vmul.f32 %v1089, %v1161
      %v1178 = vmul.f32 %v1091, %v1162
      %v1179 = vmul.f32 %v1093, %v1163
      %v1180 = vmul.f32 %v1095, %v1164
      %v1181 = vmul.f32 %v1097, %v1165
      %v1182 = vmul.f32 %v1099, %v1166
      %v1183 = vmul.f32 %v1101, %v1167
      %v1184 = vmul.f32 %v1103, %v1168
      %v1185 = vmul.f32 %v1105, %v1169
      %v1186 = vpack.c.bf16 %v1170, %v1170
      %v1187 = vpack.c.bf16 %v1171, %v1171
      %v1188 = vpack.c.bf16 %v1172, %v1172
      %v1189 = vpack.c.bf16 %v1173, %v1173
      %v1190 = vpack.c.bf16 %v1174, %v1174
      %v1191 = vpack.c.bf16 %v1175, %v1175
      %v1192 = vpack.c.bf16 %v1176, %v1176
      %v1193 = vpack.c.bf16 %v1177, %v1177
      %v1194 = vpack.c.bf16 %v1178, %v1178
      %v1195 = vpack.c.bf16 %v1179, %v1179
      %v1196 = vpack.c.bf16 %v1180, %v1180
      %v1197 = vpack.c.bf16 %v1181, %v1181
      %v1198 = vpack.c.bf16 %v1182, %v1182
      %v1199 = vpack.c.bf16 %v1183, %v1183
      %v1200 = vpack.c.bf16 %v1184, %v1184
      %v1201 = vpack.c.bf16 %v1185, %v1185
      %vm1202 = vcmask 15360
      %v1204 = vsel %vm1202, %v1186, 0
      %vm1206 = vcmask 1040384
      %v1208 = vsel %vm1206, %v240, 0
      %1210 = vmatprep.subr.bf16.mxu0 0
      %1211 = vmatpush1.bf16.msra.mxu0 0
      %1212 = vmatprep.subr.bf16.mxu0 0
      %1213 = vmatpush1.bf16.msra.mxu0 0
      %1214 = vmatprep.subr.bf16.mxu0 0
      %1215 = vmatpush1.bf16.msra.mxu0 0
      %1216 = vmatprep.subr.bf16.mxu0 0
      %1217 = vmatpush1.bf16.msra.mxu0 0
      %1218 = vmatprep.subr.bf16.mxu0 0
      %1219 = vmatpush1.bf16.msra.mxu0 0
      %1220 = vmatprep.subr.bf16.mxu0 0
      %1221 = vmatpush1.bf16.msra.mxu0 0
      %1222 = vmatprep.subr.bf16.mxu0 0
      %1223 = vmatpush1.bf16.msra.mxu0 0
      %1224 = vmatprep.subr.bf16.mxu0 0
      %1225 = vmatpush1.bf16.msra.mxu0 %v1208
      %1226 = vmatprep.subr.bf16.mxu0 0
      %1227 = vmatpush2.bf16.msra.mxu0 0
      %1228 = vmatprep.subr.bf16.mxu0 0
      %1229 = vmatpush2.bf16.msra.mxu0 0
      %1230 = vmatprep.subr.bf16.mxu0 0
      %1231 = vmatpush2.bf16.msra.mxu0 0
      %1232 = vmatprep.subr.bf16.mxu0 0
      %1233 = vmatpush2.bf16.msra.mxu0 0
      %1234 = vmatprep.subr.bf16.mxu0 0
      %1235 = vmatpush2.bf16.msra.mxu0 0
      %1236 = vmatprep.subr.bf16.mxu0 0
      %1237 = vmatpush2.bf16.msra.mxu0 0
      %1238 = vmatprep.subr.bf16.mxu0 0
      %1239 = vmatpush2.bf16.msra.mxu0 0
      %1240 = vmatprep.subr.bf16.mxu0 0
      %1241 = vmatpush2.bf16.msra.mxu0 0
      %1242 = vmatprep.mubr.bf16.mxu0 0
      %1243 = vmatmul.mubr.bf16.gmra.mxu0 %v1204
      %v1244 = vpop.f32.mrf.mxu0
      %v1245 = vadd.f32 0.0, %v1244
      %v1246 = vpop.f32.mrf.mxu0
      %v1247 = vpop.f32.mrf.mxu0
      %v1248 = vpop.f32.mrf.mxu0
      %1249 = vdwg.mxu0
      %v1251 = vsel %vm1202, %v1187, 0
      %v1254 = vsel %vm1206, %v241, 0
      %1256 = vmatprep.subr.bf16.mxu0 0
      %1257 = vmatpush1.bf16.msra.mxu0 0
      %1258 = vmatprep.subr.bf16.mxu0 0
      %1259 = vmatpush1.bf16.msra.mxu0 0
      %1260 = vmatprep.subr.bf16.mxu0 0
      %1261 = vmatpush1.bf16.msra.mxu0 0
      %1262 = vmatprep.subr.bf16.mxu0 0
      %1263 = vmatpush1.bf16.msra.mxu0 0
      %1264 = vmatprep.subr.bf16.mxu0 0
      %1265 = vmatpush1.bf16.msra.mxu0 0
      %1266 = vmatprep.subr.bf16.mxu0 0
      %1267 = vmatpush1.bf16.msra.mxu0 0
      %1268 = vmatprep.subr.bf16.mxu0 0
      %1269 = vmatpush1.bf16.msra.mxu0 0
      %1270 = vmatprep.subr.bf16.mxu0 0
      %1271 = vmatpush1.bf16.msra.mxu0 %v1254
      %1272 = vmatprep.subr.bf16.mxu0 0
      %1273 = vmatpush2.bf16.msra.mxu0 0
      %1274 = vmatprep.subr.bf16.mxu0 0
      %1275 = vmatpush2.bf16.msra.mxu0 0
      %1276 = vmatprep.subr.bf16.mxu0 0
      %1277 = vmatpush2.bf16.msra.mxu0 0
      %1278 = vmatprep.subr.bf16.mxu0 0
      %1279 = vmatpush2.bf16.msra.mxu0 0
      %1280 = vmatprep.subr.bf16.mxu0 0
      %1281 = vmatpush2.bf16.msra.mxu0 0
      %1282 = vmatprep.subr.bf16.mxu0 0
      %1283 = vmatpush2.bf16.msra.mxu0 0
      %1284 = vmatprep.subr.bf16.mxu0 0
      %1285 = vmatpush2.bf16.msra.mxu0 0
      %1286 = vmatprep.subr.bf16.mxu0 0
      %1287 = vmatpush2.bf16.msra.mxu0 0
      %1288 = vmatprep.mubr.bf16.mxu0 0
      %1289 = vmatmul.mubr.bf16.gmra.mxu0 %v1251
      %v1290 = vpop.f32.mrf.mxu0
      %v1291 = vadd.f32 0.0, %v1290
      %v1292 = vpop.f32.mrf.mxu0
      %v1293 = vpop.f32.mrf.mxu0
      %v1294 = vpop.f32.mrf.mxu0
      %1295 = vdwg.mxu0
      %v1297 = vsel %vm1202, %v1188, 0
      %v1300 = vsel %vm1206, %v242, 0
      %1302 = vmatprep.subr.bf16.mxu0 0
      %1303 = vmatpush1.bf16.msra.mxu0 0
      %1304 = vmatprep.subr.bf16.mxu0 0
      %1305 = vmatpush1.bf16.msra.mxu0 0
      %1306 = vmatprep.subr.bf16.mxu0 0
      %1307 = vmatpush1.bf16.msra.mxu0 0
      %1308 = vmatprep.subr.bf16.mxu0 0
      %1309 = vmatpush1.bf16.msra.mxu0 0
      %1310 = vmatprep.subr.bf16.mxu0 0
      %1311 = vmatpush1.bf16.msra.mxu0 0
      %1312 = vmatprep.subr.bf16.mxu0 0
      %1313 = vmatpush1.bf16.msra.mxu0 0
      %1314 = vmatprep.subr.bf16.mxu0 0
      %1315 = vmatpush1.bf16.msra.mxu0 0
      %1316 = vmatprep.subr.bf16.mxu0 0
      %1317 = vmatpush1.bf16.msra.mxu0 %v1300
      %1318 = vmatprep.subr.bf16.mxu0 0
      %1319 = vmatpush2.bf16.msra.mxu0 0
      %1320 = vmatprep.subr.bf16.mxu0 0
      %1321 = vmatpush2.bf16.msra.mxu0 0
      %1322 = vmatprep.subr.bf16.mxu0 0
      %1323 = vmatpush2.bf16.msra.mxu0 0
      %1324 = vmatprep.subr.bf16.mxu0 0
      %1325 = vmatpush2.bf16.msra.mxu0 0
      %1326 = vmatprep.subr.bf16.mxu0 0
      %1327 = vmatpush2.bf16.msra.mxu0 0
      %1328 = vmatprep.subr.bf16.mxu0 0
      %1329 = vmatpush2.bf16.msra.mxu0 0
      %1330 = vmatprep.subr.bf16.mxu0 0
      %1331 = vmatpush2.bf16.msra.mxu0 0
      %1332 = vmatprep.subr.bf16.mxu0 0
      %1333 = vmatpush2.bf16.msra.mxu0 0
      %1334 = vmatprep.mubr.bf16.mxu0 0
      %1335 = vmatmul.mubr.bf16.gmra.mxu0 %v1297
      %v1336 = vpop.f32.mrf.mxu0
      %v1337 = vadd.f32 0.0, %v1336
      %v1338 = vpop.f32.mrf.mxu0
      %v1339 = vpop.f32.mrf.mxu0
      %v1340 = vpop.f32.mrf.mxu0
      %1341 = vdwg.mxu0
      %v1343 = vsel %vm1202, %v1189, 0
      %v1346 = vsel %vm1206, %v243, 0
      %1348 = vmatprep.subr.bf16.mxu0 0
      %1349 = vmatpush1.bf16.msra.mxu0 0
      %1350 = vmatprep.subr.bf16.mxu0 0
      %1351 = vmatpush1.bf16.msra.mxu0 0
      %1352 = vmatprep.subr.bf16.mxu0 0
      %1353 = vmatpush1.bf16.msra.mxu0 0
      %1354 = vmatprep.subr.bf16.mxu0 0
      %1355 = vmatpush1.bf16.msra.mxu0 0
      %1356 = vmatprep.subr.bf16.mxu0 0
      %1357 = vmatpush1.bf16.msra.mxu0 0
      %1358 = vmatprep.subr.bf16.mxu0 0
      %1359 = vmatpush1.bf16.msra.mxu0 0
      %1360 = vmatprep.subr.bf16.mxu0 0
      %1361 = vmatpush1.bf16.msra.mxu0 0
      %1362 = vmatprep.subr.bf16.mxu0 0
      %1363 = vmatpush1.bf16.msra.mxu0 %v1346
      %1364 = vmatprep.subr.bf16.mxu0 0
      %1365 = vmatpush2.bf16.msra.mxu0 0
      %1366 = vmatprep.subr.bf16.mxu0 0
      %1367 = vmatpush2.bf16.msra.mxu0 0
      %1368 = vmatprep.subr.bf16.mxu0 0
      %1369 = vmatpush2.bf16.msra.mxu0 0
      %1370 = vmatprep.subr.bf16.mxu0 0
      %1371 = vmatpush2.bf16.msra.mxu0 0
      %1372 = vmatprep.subr.bf16.mxu0 0
      %1373 = vmatpush2.bf16.msra.mxu0 0
      %1374 = vmatprep.subr.bf16.mxu0 0
      %1375 = vmatpush2.bf16.msra.mxu0 0
      %1376 = vmatprep.subr.bf16.mxu0 0
      %1377 = vmatpush2.bf16.msra.mxu0 0
      %1378 = vmatprep.subr.bf16.mxu0 0
      %1379 = vmatpush2.bf16.msra.mxu0 0
      %1380 = vmatprep.mubr.bf16.mxu0 0
      %1381 = vmatmul.mubr.bf16.gmra.mxu0 %v1343
      %v1382 = vpop.f32.mrf.mxu0
      %v1383 = vadd.f32 0.0, %v1382
      %v1384 = vpop.f32.mrf.mxu0
      %v1385 = vpop.f32.mrf.mxu0
      %v1386 = vpop.f32.mrf.mxu0
      %1387 = vdwg.mxu0
      %v1389 = vsel %vm1202, %v1190, 0
      %v1392 = vsel %vm1206, %v244, 0
      %1394 = vmatprep.subr.bf16.mxu0 0
      %1395 = vmatpush1.bf16.msra.mxu0 0
      %1396 = vmatprep.subr.bf16.mxu0 0
      %1397 = vmatpush1.bf16.msra.mxu0 0
      %1398 = vmatprep.subr.bf16.mxu0 0
      %1399 = vmatpush1.bf16.msra.mxu0 0
      %1400 = vmatprep.subr.bf16.mxu0 0
      %1401 = vmatpush1.bf16.msra.mxu0 0
      %1402 = vmatprep.subr.bf16.mxu0 0
      %1403 = vmatpush1.bf16.msra.mxu0 0
      %1404 = vmatprep.subr.bf16.mxu0 0
      %1405 = vmatpush1.bf16.msra.mxu0 0
      %1406 = vmatprep.subr.bf16.mxu0 0
      %1407 = vmatpush1.bf16.msra.mxu0 0
      %1408 = vmatprep.subr.bf16.mxu0 0
      %1409 = vmatpush1.bf16.msra.mxu0 %v1392
      %1410 = vmatprep.subr.bf16.mxu0 0
      %1411 = vmatpush2.bf16.msra.mxu0 0
      %1412 = vmatprep.subr.bf16.mxu0 0
      %1413 = vmatpush2.bf16.msra.mxu0 0
      %1414 = vmatprep.subr.bf16.mxu0 0
      %1415 = vmatpush2.bf16.msra.mxu0 0
      %1416 = vmatprep.subr.bf16.mxu0 0
      %1417 = vmatpush2.bf16.msra.mxu0 0
      %1418 = vmatprep.subr.bf16.mxu0 0
      %1419 = vmatpush2.bf16.msra.mxu0 0
      %1420 = vmatprep.subr.bf16.mxu0 0
      %1421 = vmatpush2.bf16.msra.mxu0 0
      %1422 = vmatprep.subr.bf16.mxu0 0
      %1423 = vmatpush2.bf16.msra.mxu0 0
      %1424 = vmatprep.subr.bf16.mxu0 0
      %1425 = vmatpush2.bf16.msra.mxu0 0
      %1426 = vmatprep.mubr.bf16.mxu0 0
      %1427 = vmatmul.mubr.bf16.gmra.mxu0 %v1389
      %v1428 = vpop.f32.mrf.mxu0
      %v1429 = vadd.f32 0.0, %v1428
      %v1430 = vpop.f32.mrf.mxu0
      %v1431 = vpop.f32.mrf.mxu0
      %v1432 = vpop.f32.mrf.mxu0
      %1433 = vdwg.mxu0
      %v1435 = vsel %vm1202, %v1191, 0
      %v1438 = vsel %vm1206, %v245, 0
      %1440 = vmatprep.subr.bf16.mxu0 0
      %1441 = vmatpush1.bf16.msra.mxu0 0
      %1442 = vmatprep.subr.bf16.mxu0 0
      %1443 = vmatpush1.bf16.msra.mxu0 0
      %1444 = vmatprep.subr.bf16.mxu0 0
      %1445 = vmatpush1.bf16.msra.mxu0 0
      %1446 = vmatprep.subr.bf16.mxu0 0
      %1447 = vmatpush1.bf16.msra.mxu0 0
      %1448 = vmatprep.subr.bf16.mxu0 0
      %1449 = vmatpush1.bf16.msra.mxu0 0
      %1450 = vmatprep.subr.bf16.mxu0 0
      %1451 = vmatpush1.bf16.msra.mxu0 0
      %1452 = vmatprep.subr.bf16.mxu0 0
      %1453 = vmatpush1.bf16.msra.mxu0 0
      %1454 = vmatprep.subr.bf16.mxu0 0
      %1455 = vmatpush1.bf16.msra.mxu0 %v1438
      %1456 = vmatprep.subr.bf16.mxu0 0
      %1457 = vmatpush2.bf16.msra.mxu0 0
      %1458 = vmatprep.subr.bf16.mxu0 0
      %1459 = vmatpush2.bf16.msra.mxu0 0
      %1460 = vmatprep.subr.bf16.mxu0 0
      %1461 = vmatpush2.bf16.msra.mxu0 0
      %1462 = vmatprep.subr.bf16.mxu0 0
      %1463 = vmatpush2.bf16.msra.mxu0 0
      %1464 = vmatprep.subr.bf16.mxu0 0
      %1465 = vmatpush2.bf16.msra.mxu0 0
      %1466 = vmatprep.subr.bf16.mxu0 0
      %1467 = vmatpush2.bf16.msra.mxu0 0
      %1468 = vmatprep.subr.bf16.mxu0 0
      %1469 = vmatpush2.bf16.msra.mxu0 0
      %1470 = vmatprep.subr.bf16.mxu0 0
      %1471 = vmatpush2.bf16.msra.mxu0 0
      %1472 = vmatprep.mubr.bf16.mxu0 0
      %1473 = vmatmul.mubr.bf16.gmra.mxu0 %v1435
      %v1474 = vpop.f32.mrf.mxu0
      %v1475 = vadd.f32 0.0, %v1474
      %v1476 = vpop.f32.mrf.mxu0
      %v1477 = vpop.f32.mrf.mxu0
      %v1478 = vpop.f32.mrf.mxu0
      %1479 = vdwg.mxu0
      %v1481 = vsel %vm1202, %v1192, 0
      %v1484 = vsel %vm1206, %v246, 0
      %1486 = vmatprep.subr.bf16.mxu0 0
      %1487 = vmatpush1.bf16.msra.mxu0 0
      %1488 = vmatprep.subr.bf16.mxu0 0
      %1489 = vmatpush1.bf16.msra.mxu0 0
      %1490 = vmatprep.subr.bf16.mxu0 0
      %1491 = vmatpush1.bf16.msra.mxu0 0
      %1492 = vmatprep.subr.bf16.mxu0 0
      %1493 = vmatpush1.bf16.msra.mxu0 0
      %1494 = vmatprep.subr.bf16.mxu0 0
      %1495 = vmatpush1.bf16.msra.mxu0 0
      %1496 = vmatprep.subr.bf16.mxu0 0
      %1497 = vmatpush1.bf16.msra.mxu0 0
      %1498 = vmatprep.subr.bf16.mxu0 0
      %1499 = vmatpush1.bf16.msra.mxu0 0
      %1500 = vmatprep.subr.bf16.mxu0 0
      %1501 = vmatpush1.bf16.msra.mxu0 %v1484
      %1502 = vmatprep.subr.bf16.mxu0 0
      %1503 = vmatpush2.bf16.msra.mxu0 0
      %1504 = vmatprep.subr.bf16.mxu0 0
      %1505 = vmatpush2.bf16.msra.mxu0 0
      %1506 = vmatprep.subr.bf16.mxu0 0
      %1507 = vmatpush2.bf16.msra.mxu0 0
      %1508 = vmatprep.subr.bf16.mxu0 0
      %1509 = vmatpush2.bf16.msra.mxu0 0
      %1510 = vmatprep.subr.bf16.mxu0 0
      %1511 = vmatpush2.bf16.msra.mxu0 0
      %1512 = vmatprep.subr.bf16.mxu0 0
      %1513 = vmatpush2.bf16.msra.mxu0 0
      %1514 = vmatprep.subr.bf16.mxu0 0
      %1515 = vmatpush2.bf16.msra.mxu0 0
      %1516 = vmatprep.subr.bf16.mxu0 0
      %1517 = vmatpush2.bf16.msra.mxu0 0
      %1518 = vmatprep.mubr.bf16.mxu0 0
      %1519 = vmatmul.mubr.bf16.gmra.mxu0 %v1481
      %v1520 = vpop.f32.mrf.mxu0
      %v1521 = vadd.f32 0.0, %v1520
      %v1522 = vpop.f32.mrf.mxu0
      %v1523 = vpop.f32.mrf.mxu0
      %v1524 = vpop.f32.mrf.mxu0
      %1525 = vdwg.mxu0
      %v1527 = vsel %vm1202, %v1193, 0
      %v1530 = vsel %vm1206, %v247, 0
      %1532 = vmatprep.subr.bf16.mxu0 0
      %1533 = vmatpush1.bf16.msra.mxu0 0
      %1534 = vmatprep.subr.bf16.mxu0 0
      %1535 = vmatpush1.bf16.msra.mxu0 0
      %1536 = vmatprep.subr.bf16.mxu0 0
      %1537 = vmatpush1.bf16.msra.mxu0 0
      %1538 = vmatprep.subr.bf16.mxu0 0
      %1539 = vmatpush1.bf16.msra.mxu0 0
      %1540 = vmatprep.subr.bf16.mxu0 0
      %1541 = vmatpush1.bf16.msra.mxu0 0
      %1542 = vmatprep.subr.bf16.mxu0 0
      %1543 = vmatpush1.bf16.msra.mxu0 0
      %1544 = vmatprep.subr.bf16.mxu0 0
      %1545 = vmatpush1.bf16.msra.mxu0 0
      %1546 = vmatprep.subr.bf16.mxu0 0
      %1547 = vmatpush1.bf16.msra.mxu0 %v1530
      %1548 = vmatprep.subr.bf16.mxu0 0
      %1549 = vmatpush2.bf16.msra.mxu0 0
      %1550 = vmatprep.subr.bf16.mxu0 0
      %1551 = vmatpush2.bf16.msra.mxu0 0
      %1552 = vmatprep.subr.bf16.mxu0 0
      %1553 = vmatpush2.bf16.msra.mxu0 0
      %1554 = vmatprep.subr.bf16.mxu0 0
      %1555 = vmatpush2.bf16.msra.mxu0 0
      %1556 = vmatprep.subr.bf16.mxu0 0
      %1557 = vmatpush2.bf16.msra.mxu0 0
      %1558 = vmatprep.subr.bf16.mxu0 0
      %1559 = vmatpush2.bf16.msra.mxu0 0
      %1560 = vmatprep.subr.bf16.mxu0 0
      %1561 = vmatpush2.bf16.msra.mxu0 0
      %1562 = vmatprep.subr.bf16.mxu0 0
      %1563 = vmatpush2.bf16.msra.mxu0 0
      %1564 = vmatprep.mubr.bf16.mxu0 0
      %1565 = vmatmul.mubr.bf16.gmra.mxu0 %v1527
      %v1566 = vpop.f32.mrf.mxu0
      %v1567 = vadd.f32 0.0, %v1566
      %v1568 = vpop.f32.mrf.mxu0
      %v1569 = vpop.f32.mrf.mxu0
      %v1570 = vpop.f32.mrf.mxu0
      %1571 = vdwg.mxu0
      %v1573 = vsel %vm1202, %v1194, 0
      %v1576 = vsel %vm1206, %v248, 0
      %1578 = vmatprep.subr.bf16.mxu0 0
      %1579 = vmatpush1.bf16.msra.mxu0 0
      %1580 = vmatprep.subr.bf16.mxu0 0
      %1581 = vmatpush1.bf16.msra.mxu0 0
      %1582 = vmatprep.subr.bf16.mxu0 0
      %1583 = vmatpush1.bf16.msra.mxu0 0
      %1584 = vmatprep.subr.bf16.mxu0 0
      %1585 = vmatpush1.bf16.msra.mxu0 0
      %1586 = vmatprep.subr.bf16.mxu0 0
      %1587 = vmatpush1.bf16.msra.mxu0 0
      %1588 = vmatprep.subr.bf16.mxu0 0
      %1589 = vmatpush1.bf16.msra.mxu0 0
      %1590 = vmatprep.subr.bf16.mxu0 0
      %1591 = vmatpush1.bf16.msra.mxu0 0
      %1592 = vmatprep.subr.bf16.mxu0 0
      %1593 = vmatpush1.bf16.msra.mxu0 %v1576
      %1594 = vmatprep.subr.bf16.mxu0 0
      %1595 = vmatpush2.bf16.msra.mxu0 0
      %1596 = vmatprep.subr.bf16.mxu0 0
      %1597 = vmatpush2.bf16.msra.mxu0 0
      %1598 = vmatprep.subr.bf16.mxu0 0
      %1599 = vmatpush2.bf16.msra.mxu0 0
      %1600 = vmatprep.subr.bf16.mxu0 0
      %1601 = vmatpush2.bf16.msra.mxu0 0
      %1602 = vmatprep.subr.bf16.mxu0 0
      %1603 = vmatpush2.bf16.msra.mxu0 0
      %1604 = vmatprep.subr.bf16.mxu0 0
      %1605 = vmatpush2.bf16.msra.mxu0 0
      %1606 = vmatprep.subr.bf16.mxu0 0
      %1607 = vmatpush2.bf16.msra.mxu0 0
      %1608 = vmatprep.subr.bf16.mxu0 0
      %1609 = vmatpush2.bf16.msra.mxu0 0
      %1610 = vmatprep.mubr.bf16.mxu0 0
      %1611 = vmatmul.mubr.bf16.gmra.mxu0 %v1573
      %v1612 = vpop.f32.mrf.mxu0
      %v1613 = vadd.f32 0.0, %v1612
      %v1614 = vpop.f32.mrf.mxu0
      %v1615 = vpop.f32.mrf.mxu0
      %v1616 = vpop.f32.mrf.mxu0
      %1617 = vdwg.mxu0
      %v1619 = vsel %vm1202, %v1195, 0
      %v1622 = vsel %vm1206, %v249, 0
      %1624 = vmatprep.subr.bf16.mxu0 0
      %1625 = vmatpush1.bf16.msra.mxu0 0
      %1626 = vmatprep.subr.bf16.mxu0 0
      %1627 = vmatpush1.bf16.msra.mxu0 0
      %1628 = vmatprep.subr.bf16.mxu0 0
      %1629 = vmatpush1.bf16.msra.mxu0 0
      %1630 = vmatprep.subr.bf16.mxu0 0
      %1631 = vmatpush1.bf16.msra.mxu0 0
      %1632 = vmatprep.subr.bf16.mxu0 0
      %1633 = vmatpush1.bf16.msra.mxu0 0
      %1634 = vmatprep.subr.bf16.mxu0 0
      %1635 = vmatpush1.bf16.msra.mxu0 0
      %1636 = vmatprep.subr.bf16.mxu0 0
      %1637 = vmatpush1.bf16.msra.mxu0 0
      %1638 = vmatprep.subr.bf16.mxu0 0
      %1639 = vmatpush1.bf16.msra.mxu0 %v1622
      %1640 = vmatprep.subr.bf16.mxu0 0
      %1641 = vmatpush2.bf16.msra.mxu0 0
      %1642 = vmatprep.subr.bf16.mxu0 0
      %1643 = vmatpush2.bf16.msra.mxu0 0
      %1644 = vmatprep.subr.bf16.mxu0 0
      %1645 = vmatpush2.bf16.msra.mxu0 0
      %1646 = vmatprep.subr.bf16.mxu0 0
      %1647 = vmatpush2.bf16.msra.mxu0 0
      %1648 = vmatprep.subr.bf16.mxu0 0
      %1649 = vmatpush2.bf16.msra.mxu0 0
      %1650 = vmatprep.subr.bf16.mxu0 0
      %1651 = vmatpush2.bf16.msra.mxu0 0
      %1652 = vmatprep.subr.bf16.mxu0 0
      %1653 = vmatpush2.bf16.msra.mxu0 0
      %1654 = vmatprep.subr.bf16.mxu0 0
      %1655 = vmatpush2.bf16.msra.mxu0 0
      %1656 = vmatprep.mubr.bf16.mxu0 0
      %1657 = vmatmul.mubr.bf16.gmra.mxu0 %v1619
      %v1658 = vpop.f32.mrf.mxu0
      %v1659 = vadd.f32 0.0, %v1658
      %v1660 = vpop.f32.mrf.mxu0
      %v1661 = vpop.f32.mrf.mxu0
      %v1662 = vpop.f32.mrf.mxu0
      %1663 = vdwg.mxu0
      %v1665 = vsel %vm1202, %v1196, 0
      %v1668 = vsel %vm1206, %v250, 0
      %1670 = vmatprep.subr.bf16.mxu0 0
      %1671 = vmatpush1.bf16.msra.mxu0 0
      %1672 = vmatprep.subr.bf16.mxu0 0
      %1673 = vmatpush1.bf16.msra.mxu0 0
      %1674 = vmatprep.subr.bf16.mxu0 0
      %1675 = vmatpush1.bf16.msra.mxu0 0
      %1676 = vmatprep.subr.bf16.mxu0 0
      %1677 = vmatpush1.bf16.msra.mxu0 0
      %1678 = vmatprep.subr.bf16.mxu0 0
      %1679 = vmatpush1.bf16.msra.mxu0 0
      %1680 = vmatprep.subr.bf16.mxu0 0
      %1681 = vmatpush1.bf16.msra.mxu0 0
      %1682 = vmatprep.subr.bf16.mxu0 0
      %1683 = vmatpush1.bf16.msra.mxu0 0
      %1684 = vmatprep.subr.bf16.mxu0 0
      %1685 = vmatpush1.bf16.msra.mxu0 %v1668
      %1686 = vmatprep.subr.bf16.mxu0 0
      %1687 = vmatpush2.bf16.msra.mxu0 0
      %1688 = vmatprep.subr.bf16.mxu0 0
      %1689 = vmatpush2.bf16.msra.mxu0 0
      %1690 = vmatprep.subr.bf16.mxu0 0
      %1691 = vmatpush2.bf16.msra.mxu0 0
      %1692 = vmatprep.subr.bf16.mxu0 0
      %1693 = vmatpush2.bf16.msra.mxu0 0
      %1694 = vmatprep.subr.bf16.mxu0 0
      %1695 = vmatpush2.bf16.msra.mxu0 0
      %1696 = vmatprep.subr.bf16.mxu0 0
      %1697 = vmatpush2.bf16.msra.mxu0 0
      %1698 = vmatprep.subr.bf16.mxu0 0
      %1699 = vmatpush2.bf16.msra.mxu0 0
      %1700 = vmatprep.subr.bf16.mxu0 0
      %1701 = vmatpush2.bf16.msra.mxu0 0
      %1702 = vmatprep.mubr.bf16.mxu0 0
      %1703 = vmatmul.mubr.bf16.gmra.mxu0 %v1665
      %v1704 = vpop.f32.mrf.mxu0
      %v1705 = vadd.f32 0.0, %v1704
      %v1706 = vpop.f32.mrf.mxu0
      %v1707 = vpop.f32.mrf.mxu0
      %v1708 = vpop.f32.mrf.mxu0
      %1709 = vdwg.mxu0
      %v1711 = vsel %vm1202, %v1197, 0
      %v1714 = vsel %vm1206, %v251, 0
      %1716 = vmatprep.subr.bf16.mxu0 0
      %1717 = vmatpush1.bf16.msra.mxu0 0
      %1718 = vmatprep.subr.bf16.mxu0 0
      %1719 = vmatpush1.bf16.msra.mxu0 0
      %1720 = vmatprep.subr.bf16.mxu0 0
      %1721 = vmatpush1.bf16.msra.mxu0 0
      %1722 = vmatprep.subr.bf16.mxu0 0
      %1723 = vmatpush1.bf16.msra.mxu0 0
      %1724 = vmatprep.subr.bf16.mxu0 0
      %1725 = vmatpush1.bf16.msra.mxu0 0
      %1726 = vmatprep.subr.bf16.mxu0 0
      %1727 = vmatpush1.bf16.msra.mxu0 0
      %1728 = vmatprep.subr.bf16.mxu0 0
      %1729 = vmatpush1.bf16.msra.mxu0 0
      %1730 = vmatprep.subr.bf16.mxu0 0
      %1731 = vmatpush1.bf16.msra.mxu0 %v1714
      %1732 = vmatprep.subr.bf16.mxu0 0
      %1733 = vmatpush2.bf16.msra.mxu0 0
      %1734 = vmatprep.subr.bf16.mxu0 0
      %1735 = vmatpush2.bf16.msra.mxu0 0
      %1736 = vmatprep.subr.bf16.mxu0 0
      %1737 = vmatpush2.bf16.msra.mxu0 0
      %1738 = vmatprep.subr.bf16.mxu0 0
      %1739 = vmatpush2.bf16.msra.mxu0 0
      %1740 = vmatprep.subr.bf16.mxu0 0
      %1741 = vmatpush2.bf16.msra.mxu0 0
      %1742 = vmatprep.subr.bf16.mxu0 0
      %1743 = vmatpush2.bf16.msra.mxu0 0
      %1744 = vmatprep.subr.bf16.mxu0 0
      %1745 = vmatpush2.bf16.msra.mxu0 0
      %1746 = vmatprep.subr.bf16.mxu0 0
      %1747 = vmatpush2.bf16.msra.mxu0 0
      %1748 = vmatprep.mubr.bf16.mxu0 0
      %1749 = vmatmul.mubr.bf16.gmra.mxu0 %v1711
      %v1750 = vpop.f32.mrf.mxu0
      %v1751 = vadd.f32 0.0, %v1750
      %v1752 = vpop.f32.mrf.mxu0
      %v1753 = vpop.f32.mrf.mxu0
      %v1754 = vpop.f32.mrf.mxu0
      %1755 = vdwg.mxu0
      %v1757 = vsel %vm1202, %v1198, 0
      %v1760 = vsel %vm1206, %v252, 0
      %1762 = vmatprep.subr.bf16.mxu0 0
      %1763 = vmatpush1.bf16.msra.mxu0 0
      %1764 = vmatprep.subr.bf16.mxu0 0
      %1765 = vmatpush1.bf16.msra.mxu0 0
      %1766 = vmatprep.subr.bf16.mxu0 0
      %1767 = vmatpush1.bf16.msra.mxu0 0
      %1768 = vmatprep.subr.bf16.mxu0 0
      %1769 = vmatpush1.bf16.msra.mxu0 0
      %1770 = vmatprep.subr.bf16.mxu0 0
      %1771 = vmatpush1.bf16.msra.mxu0 0
      %1772 = vmatprep.subr.bf16.mxu0 0
      %1773 = vmatpush1.bf16.msra.mxu0 0
      %1774 = vmatprep.subr.bf16.mxu0 0
      %1775 = vmatpush1.bf16.msra.mxu0 0
      %1776 = vmatprep.subr.bf16.mxu0 0
      %1777 = vmatpush1.bf16.msra.mxu0 %v1760
      %1778 = vmatprep.subr.bf16.mxu0 0
      %1779 = vmatpush2.bf16.msra.mxu0 0
      %1780 = vmatprep.subr.bf16.mxu0 0
      %1781 = vmatpush2.bf16.msra.mxu0 0
      %1782 = vmatprep.subr.bf16.mxu0 0
      %1783 = vmatpush2.bf16.msra.mxu0 0
      %1784 = vmatprep.subr.bf16.mxu0 0
      %1785 = vmatpush2.bf16.msra.mxu0 0
      %1786 = vmatprep.subr.bf16.mxu0 0
      %1787 = vmatpush2.bf16.msra.mxu0 0
      %1788 = vmatprep.subr.bf16.mxu0 0
      %1789 = vmatpush2.bf16.msra.mxu0 0
      %1790 = vmatprep.subr.bf16.mxu0 0
      %1791 = vmatpush2.bf16.msra.mxu0 0
      %1792 = vmatprep.subr.bf16.mxu0 0
      %1793 = vmatpush2.bf16.msra.mxu0 0
      %1794 = vmatprep.mubr.bf16.mxu0 0
      %1795 = vmatmul.mubr.bf16.gmra.mxu0 %v1757
      %v1796 = vpop.f32.mrf.mxu0
      %v1797 = vadd.f32 0.0, %v1796
      %v1798 = vpop.f32.mrf.mxu0
      %v1799 = vpop.f32.mrf.mxu0
      %v1800 = vpop.f32.mrf.mxu0
      %1801 = vdwg.mxu0
      %v1803 = vsel %vm1202, %v1199, 0
      %v1806 = vsel %vm1206, %v253, 0
      %1808 = vmatprep.subr.bf16.mxu0 0
      %1809 = vmatpush1.bf16.msra.mxu0 0
      %1810 = vmatprep.subr.bf16.mxu0 0
      %1811 = vmatpush1.bf16.msra.mxu0 0
      %1812 = vmatprep.subr.bf16.mxu0 0
      %1813 = vmatpush1.bf16.msra.mxu0 0
      %1814 = vmatprep.subr.bf16.mxu0 0
      %1815 = vmatpush1.bf16.msra.mxu0 0
      %1816 = vmatprep.subr.bf16.mxu0 0
      %1817 = vmatpush1.bf16.msra.mxu0 0
      %1818 = vmatprep.subr.bf16.mxu0 0
      %1819 = vmatpush1.bf16.msra.mxu0 0
      %1820 = vmatprep.subr.bf16.mxu0 0
      %1821 = vmatpush1.bf16.msra.mxu0 0
      %1822 = vmatprep.subr.bf16.mxu0 0
      %1823 = vmatpush1.bf16.msra.mxu0 %v1806
      %1824 = vmatprep.subr.bf16.mxu0 0
      %1825 = vmatpush2.bf16.msra.mxu0 0
      %1826 = vmatprep.subr.bf16.mxu0 0
      %1827 = vmatpush2.bf16.msra.mxu0 0
      %1828 = vmatprep.subr.bf16.mxu0 0
      %1829 = vmatpush2.bf16.msra.mxu0 0
      %1830 = vmatprep.subr.bf16.mxu0 0
      %1831 = vmatpush2.bf16.msra.mxu0 0
      %1832 = vmatprep.subr.bf16.mxu0 0
      %1833 = vmatpush2.bf16.msra.mxu0 0
      %1834 = vmatprep.subr.bf16.mxu0 0
      %1835 = vmatpush2.bf16.msra.mxu0 0
      %1836 = vmatprep.subr.bf16.mxu0 0
      %1837 = vmatpush2.bf16.msra.mxu0 0
      %1838 = vmatprep.subr.bf16.mxu0 0
      %1839 = vmatpush2.bf16.msra.mxu0 0
      %1840 = vmatprep.mubr.bf16.mxu0 0
      %1841 = vmatmul.mubr.bf16.gmra.mxu0 %v1803
      %v1842 = vpop.f32.mrf.mxu0
      %v1843 = vadd.f32 0.0, %v1842
      %v1844 = vpop.f32.mrf.mxu0
      %v1845 = vpop.f32.mrf.mxu0
      %v1846 = vpop.f32.mrf.mxu0
      %1847 = vdwg.mxu0
      %v1849 = vsel %vm1202, %v1200, 0
      %v1852 = vsel %vm1206, %v254, 0
      %1854 = vmatprep.subr.bf16.mxu0 0
      %1855 = vmatpush1.bf16.msra.mxu0 0
      %1856 = vmatprep.subr.bf16.mxu0 0
      %1857 = vmatpush1.bf16.msra.mxu0 0
      %1858 = vmatprep.subr.bf16.mxu0 0
      %1859 = vmatpush1.bf16.msra.mxu0 0
      %1860 = vmatprep.subr.bf16.mxu0 0
      %1861 = vmatpush1.bf16.msra.mxu0 0
      %1862 = vmatprep.subr.bf16.mxu0 0
      %1863 = vmatpush1.bf16.msra.mxu0 0
      %1864 = vmatprep.subr.bf16.mxu0 0
      %1865 = vmatpush1.bf16.msra.mxu0 0
      %1866 = vmatprep.subr.bf16.mxu0 0
      %1867 = vmatpush1.bf16.msra.mxu0 0
      %1868 = vmatprep.subr.bf16.mxu0 0
      %1869 = vmatpush1.bf16.msra.mxu0 %v1852
      %1870 = vmatprep.subr.bf16.mxu0 0
      %1871 = vmatpush2.bf16.msra.mxu0 0
      %1872 = vmatprep.subr.bf16.mxu0 0
      %1873 = vmatpush2.bf16.msra.mxu0 0
      %1874 = vmatprep.subr.bf16.mxu0 0
      %1875 = vmatpush2.bf16.msra.mxu0 0
      %1876 = vmatprep.subr.bf16.mxu0 0
      %1877 = vmatpush2.bf16.msra.mxu0 0
      %1878 = vmatprep.subr.bf16.mxu0 0
      %1879 = vmatpush2.bf16.msra.mxu0 0
      %1880 = vmatprep.subr.bf16.mxu0 0
      %1881 = vmatpush2.bf16.msra.mxu0 0
      %1882 = vmatprep.subr.bf16.mxu0 0
      %1883 = vmatpush2.bf16.msra.mxu0 0
      %1884 = vmatprep.subr.bf16.mxu0 0
      %1885 = vmatpush2.bf16.msra.mxu0 0
      %1886 = vmatprep.mubr.bf16.mxu0 0
      %1887 = vmatmul.mubr.bf16.gmra.mxu0 %v1849
      %v1888 = vpop.f32.mrf.mxu0
      %v1889 = vadd.f32 0.0, %v1888
      %v1890 = vpop.f32.mrf.mxu0
      %v1891 = vpop.f32.mrf.mxu0
      %v1892 = vpop.f32.mrf.mxu0
      %1893 = vdwg.mxu0
      %v1895 = vsel %vm1202, %v1201, 0
      %v1898 = vsel %vm1206, %v255, 0
      %1900 = vmatprep.subr.bf16.mxu0 0
      %1901 = vmatpush1.bf16.msra.mxu0 0
      %1902 = vmatprep.subr.bf16.mxu0 0
      %1903 = vmatpush1.bf16.msra.mxu0 0
      %1904 = vmatprep.subr.bf16.mxu0 0
      %1905 = vmatpush1.bf16.msra.mxu0 0
      %1906 = vmatprep.subr.bf16.mxu0 0
      %1907 = vmatpush1.bf16.msra.mxu0 0
      %1908 = vmatprep.subr.bf16.mxu0 0
      %1909 = vmatpush1.bf16.msra.mxu0 0
      %1910 = vmatprep.subr.bf16.mxu0 0
      %1911 = vmatpush1.bf16.msra.mxu0 0
      %1912 = vmatprep.subr.bf16.mxu0 0
      %1913 = vmatpush1.bf16.msra.mxu0 0
      %1914 = vmatprep.subr.bf16.mxu0 0
      %1915 = vmatpush1.bf16.msra.mxu0 %v1898
      %1916 = vmatprep.subr.bf16.mxu0 0
      %1917 = vmatpush2.bf16.msra.mxu0 0
      %1918 = vmatprep.subr.bf16.mxu0 0
      %1919 = vmatpush2.bf16.msra.mxu0 0
      %1920 = vmatprep.subr.bf16.mxu0 0
      %1921 = vmatpush2.bf16.msra.mxu0 0
      %1922 = vmatprep.subr.bf16.mxu0 0
      %1923 = vmatpush2.bf16.msra.mxu0 0
      %1924 = vmatprep.subr.bf16.mxu0 0
      %1925 = vmatpush2.bf16.msra.mxu0 0
      %1926 = vmatprep.subr.bf16.mxu0 0
      %1927 = vmatpush2.bf16.msra.mxu0 0
      %1928 = vmatprep.subr.bf16.mxu0 0
      %1929 = vmatpush2.bf16.msra.mxu0 0
      %1930 = vmatprep.subr.bf16.mxu0 0
      %1931 = vmatpush2.bf16.msra.mxu0 0
      %1932 = vmatprep.mubr.bf16.mxu0 0
      %1933 = vmatmul.mubr.bf16.gmra.mxu0 %v1895
      %v1934 = vpop.f32.mrf.mxu0
      %v1935 = vadd.f32 0.0, %v1934
      %v1936 = vpop.f32.mrf.mxu0
      %v1937 = vpop.f32.mrf.mxu0
      %v1938 = vpop.f32.mrf.mxu0
      %1939 = vdwg.mxu0
      %v1940 = vpack.c.bf16 %v1245, %v1245
      %v1941 = vpack.c.bf16 %v1291, %v1291
      %v1942 = vpack.c.bf16 %v1337, %v1337
      %v1943 = vpack.c.bf16 %v1383, %v1383
      %v1944 = vpack.c.bf16 %v1429, %v1429
      %v1945 = vpack.c.bf16 %v1475, %v1475
      %v1946 = vpack.c.bf16 %v1521, %v1521
      %v1947 = vpack.c.bf16 %v1567, %v1567
      %v1948 = vpack.c.bf16 %v1613, %v1613
      %v1949 = vpack.c.bf16 %v1659, %v1659
      %v1950 = vpack.c.bf16 %v1705, %v1705
      %v1951 = vpack.c.bf16 %v1751, %v1751
      %v1952 = vpack.c.bf16 %v1797, %v1797
      %v1953 = vpack.c.bf16 %v1843, %v1843
      %v1954 = vpack.c.bf16 %v1889, %v1889
      %v1955 = vpack.c.bf16 %v1935, %v1935
      %vm1956 = vcmask 57344
      %1957 = vst.msk [vmem:[%s205] sm:$0x1] %vm1956, %v1940
      %1958 = vst.msk [vmem:[%s205 + $0x1] sm:$0x1] %vm1956, %v1941
      %1959 = vst.msk [vmem:[%s205 + $0x2] sm:$0x1] %vm1956, %v1942
      %1960 = vst.msk [vmem:[%s205 + $0x3] sm:$0x1] %vm1956, %v1943
      %1961 = vst.msk [vmem:[%s205 + $0x4] sm:$0x1] %vm1956, %v1944
      %1962 = vst.msk [vmem:[%s205 + $0x5] sm:$0x1] %vm1956, %v1945
      %1963 = vst.msk [vmem:[%s205 + $0x6] sm:$0x1] %vm1956, %v1946
      %1964 = vst.msk [vmem:[%s205 + $0x7] sm:$0x1] %vm1956, %v1947
      %1965 = vst.msk [vmem:[%s205 + $0x8] sm:$0x1] %vm1956, %v1948
      %1966 = vst.msk [vmem:[%s205 + $0x9] sm:$0x1] %vm1956, %v1949
      %1967 = vst.msk [vmem:[%s205 + $0xa] sm:$0x1] %vm1956, %v1950
      %1968 = vst.msk [vmem:[%s205 + $0xb] sm:$0x1] %vm1956, %v1951
      %1969 = vst.msk [vmem:[%s205 + $0xc] sm:$0x1] %vm1956, %v1952
      %1970 = vst.msk [vmem:[%s205 + $0xd] sm:$0x1] %vm1956, %v1953
      %1971 = vst.msk [vmem:[%s205 + $0xe] sm:$0x1] %vm1956, %v1954
      %1972 = vst.msk [vmem:[%s205 + $0xf] sm:$0x1] %vm1956, %v1955
      %s1973 = smul.u32 16, %s14
      %p1974 = scmp.lt.s32.totalorder %s1973, 31
      %s1975 = scalar_select %p1974, %s1973, 31
      %s1976 = scalar_lea.vmem %s3, %s1975
      // Predicated region
      $region33: #{gpt_forward.13} parent=31 // pred_check
        %p1977 = pneg %p110
      $region34: #{gpt_forward.13} parent=31 // pred_check_branch
        %1979 = sbr.rel (%p1977) target = $region36
      $region35: #{gpt_forward.13} parent=31 // pred_region
        %s1980 = smul.u32 16, %s14
      $region36: #{gpt_forward.13} parent=31 // pred_fallthru
        _
    $region32: #{gpt_forward.13} parent=5 // pred_fallthru
      _
    %p1981 = scmp.le.s32.totalorder 2, %s9
    // Predicated region
    $region37: #{gpt_forward.13} parent=5 // pred_check
      %p1982 = pneg %p1981
    $region38: #{gpt_forward.13} parent=5 // pred_check_branch
      %1984 = sbr.rel (%p1982) target = $region40
    $region39: #{gpt_forward.13} parent=5 // pred_region
      %s1985 = ssub.s32 %s9, 2
      // Predicated region
      $region41: #{gpt_forward.13} parent=39 // pred_check
        %p1986 = pneg %p116
      $region42: #{gpt_forward.13} parent=39 // pred_check_branch
        %1988 = sbr.rel (%p1986) target = $region44
      $region43: #{gpt_forward.13} parent=39 // pred_region
        %s1989 = smul.u32 16, %s15
        %p1990 = scmp.lt.s32.totalorder %s1989, 31
        %s1991 = scalar_select %p1990, %s1989, 31
        %s1992 = scalar_lea.vmem %s3, %s1991
      $region44: #{gpt_forward.13} parent=39 // pred_fallthru
        _
    $region40: #{gpt_forward.13} parent=5 // pred_fallthru
      _
  $region6: #{gpt_forward.13} parent=0 // loop_footer
    %s13 = sadd.s32 1, %s9
  $region7: #{gpt_forward.13} parent=0 // loop_footer_branch
    %8 = sbr.rel target = $region3
  $region8: #{gpt_forward.13} parent=0 // loop_exit
    _

// kernel: gpt_forward.16
$region0: #{gpt_forward.16}
  #allocation0 [shape = 'u32[]', space=smem, size = 0x4, offset = 0x4, fixed_abs, tag = 'smem constant byte address 0x4 - core index']
  #allocation1 [shape = 'u32[144,128]{1,0:T(1,128)}', space=vmem, size = 0x12000, scoped, tag = 'internal scratch']
  #allocation2 [shape = 'f32[16,128]{1,0:T(8,128)}', space=vmem, size = 0x2000, scoped, tag = 'scratch operand']
  %s0 = inlined_call_operand.vmem [shape: bf16[16,128], index: 0, kind: input, shape index: {}]
  %s1 = inlined_call_operand.vmem [shape: bf16[128,128], index: 1, kind: input, shape index: {}]
  %s2 = inlined_call_operand.vmem [shape: f32[1,128], index: 2, kind: input, shape index: {}]
  %s3 = inlined_call_operand.vmem [shape: bf16[16,128], index: 3, kind: input, shape index: {}]
  %s4 = inlined_call_operand.vmem [shape: f32[1,128], index: 4, kind: input, shape index: {}]
  %s5 = inlined_call_operand.vmem [shape: f32[1,128], index: 5, kind: input, shape index: {}]
  %s6 = inlined_call_operand.vmem [shape: bf16[16,128], index: 6, kind: output, shape index: {}]
  %s7 = sld [smem:[#allocation0]]
  $region42: #{gpt_forward.16} parent=0
    _
  %s9 = ssub.s32 1, %s7
  %s10 = scalar_select 0, %s9, %s7
  // Predicated region
  $region2: #{gpt_forward.16} parent=0 // pred_check
    _
  $region3: #{gpt_forward.16} parent=0 // pred_check_branch
    %12 = sbr.rel (0) target = $region5
  $region4: #{gpt_forward.16} parent=0 // pred_region
    _
  $region5: #{gpt_forward.16} parent=0 // pred_fallthru
    _
  // Predicated region
  $region6: #{gpt_forward.16} parent=0 // pred_check
    _
  $region7: #{gpt_forward.16} parent=0 // pred_check_branch
    %14 = sbr.rel (0) target = $region9
  $region8: #{gpt_forward.16} parent=0 // pred_region
    _
  $region9: #{gpt_forward.16} parent=0 // pred_fallthru
    _
  // Predicated region
  $region10: #{gpt_forward.16} parent=0 // pred_check
    _
  $region11: #{gpt_forward.16} parent=0 // pred_check_branch
    %16 = sbr.rel (0) target = $region13
  $region12: #{gpt_forward.16} parent=0 // pred_region
    _
  $region13: #{gpt_forward.16} parent=0 // pred_fallthru
    _
  // Predicated region
  $region14: #{gpt_forward.16} parent=0 // pred_check
    _
  $region15: #{gpt_forward.16} parent=0 // pred_check_branch
    %18 = sbr.rel (0) target = $region17
  $region16: #{gpt_forward.16} parent=0 // pred_region
    _
  $region17: #{gpt_forward.16} parent=0 // pred_fallthru
    _
  // Predicated region
  $region18: #{gpt_forward.16} parent=0 // pred_check
    _
  $region19: #{gpt_forward.16} parent=0 // pred_check_branch
    %20 = sbr.rel (0) target = $region21
  $region20: #{gpt_forward.16} parent=0 // pred_region
    _
  $region21: #{gpt_forward.16} parent=0 // pred_fallthru
    _
  // Predicated region
  $region22: #{gpt_forward.16} parent=0 // pred_check
    _
  $region23: #{gpt_forward.16} parent=0 // pred_check_branch
    %22 = sbr.rel (0) target = $region25
  $region24: #{gpt_forward.16} parent=0 // pred_region
    _
  $region25: #{gpt_forward.16} parent=0 // pred_fallthru
    _
  %p24 = scmp.eq.s32.totalorder 0, 0
  // Predicated region
  $region26: #{gpt_forward.16} parent=0 // pred_check
    %p25 = pneg %p24
  $region27: #{gpt_forward.16} parent=0 // pred_check_branch
    %27 = sbr.rel (%p25) target = $region29
  $region28: #{gpt_forward.16} parent=0 // pred_region
    %28 = vst [vmem:[#allocation2] sm:$0xff] 0.0
    %29 = vst [vmem:[#allocation2 + $0x8] sm:$0xff] 0.0
  $region29: #{gpt_forward.16} parent=0 // pred_fallthru
    _
  %v30 = vld [vmem:[#allocation2] sm:$0xff]
  %v31 = vld [vmem:[#allocation2 + $0x8] sm:$0xff]
  %v32 = vld [vmem:[%s0] sm:$0xf]
  %v33 = vld [vmem:[%s0 + $0x4] sm:$0xf]
  %v34 = vld [vmem:[%s1] sm:$0xf]
  %v35 = vld [vmem:[%s1 + $0x4] sm:$0xf]
  %v36 = vld [vmem:[%s1 + $0x8] sm:$0xf]
  %v37 = vld [vmem:[%s1 + $0xc] sm:$0xf]
  %v38 = vld [vmem:[%s1 + $0x10] sm:$0xf]
  %v39 = vld [vmem:[%s1 + $0x14] sm:$0xf]
  %v40 = vld [vmem:[%s1 + $0x18] sm:$0xf]
  %v41 = vld [vmem:[%s1 + $0x1c] sm:$0xf]
  %v42 = vld [vmem:[%s1 + $0x20] sm:$0xf]
  %v43 = vld [vmem:[%s1 + $0x24] sm:$0xf]
  %v44 = vld [vmem:[%s1 + $0x28] sm:$0xf]
  %v45 = vld [vmem:[%s1 + $0x2c] sm:$0xf]
  %v46 = vld [vmem:[%s1 + $0x30] sm:$0xf]
  %v47 = vld [vmem:[%s1 + $0x34] sm:$0xf]
  %v48 = vld [vmem:[%s1 + $0x38] sm:$0xf]
  %v49 = vld [vmem:[%s1 + $0x3c] sm:$0xf]
  %v52 = vunpack.c.l.b16 %v32
  %v53 = vunpack.c.l.b16 %v33
  %v54 = vpack.c.b16 %v53, %v52
  %v72 = vunpack.c.l.b16 %v34
  %v73 = vunpack.c.l.b16 %v35
  %v74 = vunpack.c.l.b16 %v36
  %v75 = vunpack.c.l.b16 %v37
  %v76 = vunpack.c.l.b16 %v38
  %v77 = vunpack.c.l.b16 %v39
  %v78 = vunpack.c.l.b16 %v40
  %v79 = vunpack.c.l.b16 %v41
  %v80 = vunpack.c.l.b16 %v42
  %v81 = vunpack.c.l.b16 %v43
  %v82 = vunpack.c.l.b16 %v44
  %v83 = vunpack.c.l.b16 %v45
  %v84 = vunpack.c.l.b16 %v46
  %v85 = vunpack.c.l.b16 %v47
  %v86 = vunpack.c.l.b16 %v48
  %v87 = vunpack.c.l.b16 %v49
  %v88 = vpack.c.b16 %v73, %v72
  %v89 = vpack.c.b16 %v75, %v74
  %v90 = vpack.c.b16 %v77, %v76
  %v91 = vpack.c.b16 %v79, %v78
  %v92 = vpack.c.b16 %v81, %v80
  %v93 = vpack.c.b16 %v83, %v82
  %v94 = vpack.c.b16 %v85, %v84
  %v95 = vpack.c.b16 %v87, %v86
  %104 = vmatprep.subr.bf16.mxu0 0
  %105 = vmatpush1.bf16.msra.mxu0 %v95
  %106 = vmatprep.subr.bf16.mxu0 0
  %107 = vmatpush1.bf16.msra.mxu0 %v94
  %108 = vmatprep.subr.bf16.mxu0 0
  %109 = vmatpush1.bf16.msra.mxu0 %v93
  %110 = vmatprep.subr.bf16.mxu0 0
  %111 = vmatpush1.bf16.msra.mxu0 %v92
  %112 = vmatprep.subr.bf16.mxu0 0
  %113 = vmatpush1.bf16.msra.mxu0 %v91
  %114 = vmatprep.subr.bf16.mxu0 0
  %115 = vmatpush1.bf16.msra.mxu0 %v90
  %116 = vmatprep.subr.bf16.mxu0 0
  %117 = vmatpush1.bf16.msra.mxu0 %v89
  %118 = vmatprep.subr.bf16.mxu0 0
  %119 = vmatpush1.bf16.msra.mxu0 %v88
  %120 = vmatprep.subr.bf16.mxu0 0
  %121 = vmatpush2.bf16.msra.mxu0 0
  %122 = vmatprep.subr.bf16.mxu0 0
  %123 = vmatpush2.bf16.msra.mxu0 0
  %124 = vmatprep.subr.bf16.mxu0 0
  %125 = vmatpush2.bf16.msra.mxu0 0
  %126 = vmatprep.subr.bf16.mxu0 0
  %127 = vmatpush2.bf16.msra.mxu0 0
  %128 = vmatprep.subr.bf16.mxu0 0
  %129 = vmatpush2.bf16.msra.mxu0 0
  %130 = vmatprep.subr.bf16.mxu0 0
  %131 = vmatpush2.bf16.msra.mxu0 0
  %132 = vmatprep.subr.bf16.mxu0 0
  %133 = vmatpush2.bf16.msra.mxu0 0
  %134 = vmatprep.subr.bf16.mxu0 0
  %135 = vmatpush2.bf16.msra.mxu0 0
  %136 = vmatprep.mubr.bf16.mxu0 0
  %137 = vmatmul.mubr.bf16.gmra.mxu0 %v54
  %v138 = vpop.f32.mrf.mxu0
  %v139 = vadd.f32 0.0, %v138
  %v140 = vpop.f32.mrf.mxu0
  %v141 = vpop.f32.mrf.mxu0
  %v142 = vadd.f32 0.0, %v141
  %v143 = vpop.f32.mrf.mxu0
  %144 = vdwg.mxu0
  %v145 = vadd.f32 %v30, %v139
  %v146 = vadd.f32 %v31, %v142
  %147 = vst [vmem:[#allocation2] sm:$0xff] %v145
  %148 = vst [vmem:[#allocation2 + $0x8] sm:$0xff] %v146
  // Predicated region
  $region30: #{gpt_forward.16} parent=0 // pred_check
    %p149 = pneg %p24
  $region31: #{gpt_forward.16} parent=0 // pred_check_branch
    %151 = sbr.rel (%p149) target = $region33
  $region32: #{gpt_forward.16} parent=0 // pred_region
    %v152 = vld [vmem:[#allocation2] sm:$0xff]
    %v153 = vld [vmem:[#allocation2 + $0x8] sm:$0xff]
    %v154 = vld [vmem:[%s2] sm:$0x1]
    %v156 = vlaneseq
    %v157 = vshrl.u32 %v156, 7
    %v158 = vsub.s32 0, %v157
    %v159 = vrot.slane %v154, %v158
    %v161 = vadd.f32 %v152, %v159
    %v162 = vadd.f32 %v153, %v159
    %v163 = vld [vmem:[%s3] sm:$0xf]
    %v164 = vld [vmem:[%s3 + $0x4] sm:$0xf]
    %v165 = vunpack.c.l.bf16 %v163
    %v166 = vunpack.c.l.bf16 %v164
    %v167 = vadd.f32 %v161, %v165
    %v168 = vadd.f32 %v162, %v166
    %v169 = vld [vmem:[%s4] sm:$0x1]
    %v170 = vld [vmem:[%s5] sm:$0x1]
    %v171 = vlaneseq
    %v172 = vand.u32 %v171, 127
    %vm173 = vcmp.lt.s32.totalorder %v172, 32
    %v174 = vsel %vm173, 1, 0
    %v175 = vcvt.s32.f32 %v174
    %v176 = vmul.f32 %v167, %v175
    %v177 = vmul.f32 %v168, %v175
    %178 = vadd.xlane.f32.xlu0 %v176
    %v179 = vpop.xlane.xlu0 %178
    %180 = vadd.xlane.f32.xlu0 %v177
    %v181 = vpop.xlane.xlu0 %180
    %v182 = vmul.f32 %v179, 0.03125
    %v183 = vmul.f32 %v181, 0.03125
    %v184 = vsub.f32 %v176, %v182
    %v185 = vsub.f32 %v177, %v183
    %v186 = vmul.f32 %v184, %v175
    %v187 = vmul.f32 %v185, %v175
    %v188 = vmul.f32 %v186, %v186
    %v189 = vmul.f32 %v187, %v187
    %190 = vadd.xlane.f32.xlu0 %v188
    %v191 = vpop.xlane.xlu0 %190
    %192 = vadd.xlane.f32.xlu0 %v189
    %v193 = vpop.xlane.xlu0 %192
    %v194 = vmul.f32 %v191, 0.03125
    %v195 = vmul.f32 %v193, 0.03125
    %v196 = vadd.f32 %v194, 1e-05
    %v197 = vadd.f32 %v195, 1e-05
    %v198 = vrsqrt.pop %v196
    %v199 = vrsqrt.pop %v197
    %v200 = vmul.f32 %v186, %v198
    %v201 = vmul.f32 %v187, %v199
    %v203 = vlaneseq
    %v204 = vshrl.u32 %v203, 7
    %v205 = vsub.s32 0, %v204
    %v206 = vrot.slane %v169, %v205
    %v208 = vmul.f32 %v200, %v206
    %v209 = vmul.f32 %v201, %v206
    %v211 = vlaneseq
    %v212 = vshrl.u32 %v211, 7
    %v213 = vsub.s32 0, %v212
    %v214 = vrot.slane %v170, %v213
    %v216 = vadd.f32 %v208, %v214
    %v217 = vadd.f32 %v209, %v214
    %v218 = vpack.c.bf16 %v217, %v216
    %v220 = vunpack.c.l.b16 %v218
    %v221 = vunpack.c.h.b16 %v218
    %v222 = vpack.c.b16 %v220, %v220
    %v223 = vpack.c.b16 %v221, %v221
    %226 = vst [vmem:[%s6] sm:$0xf] %v222
    %227 = vst [vmem:[%s6 + $0x4] sm:$0xf] %v223
  $region33: #{gpt_forward.16} parent=0 // pred_fallthru
    _
  // Predicated region
  $region34: #{gpt_forward.16} parent=0 // pred_check
    _
  $region35: #{gpt_forward.16} parent=0 // pred_check_branch
    %229 = sbr.rel (0) target = $region37
  $region36: #{gpt_forward.16} parent=0 // pred_region
    _
  $region37: #{gpt_forward.16} parent=0 // pred_fallthru
    _
  // Predicated region
  $region38: #{gpt_forward.16} parent=0 // pred_check
    _
  $region39: #{gpt_forward.16} parent=0 // pred_check_branch
    %231 = sbr.rel (0) target = $region41
  $region40: #{gpt_forward.16} parent=0 // pred_region
    _
  $region41: #{gpt_forward.16} parent=0 // pred_fallthru
    _

// kernel: gpt_forward.23
$region0: #{gpt_forward.23}
  #allocation0 [shape = 'u32[]', space=smem, size = 0x4, offset = 0x4, fixed_abs, tag = 'smem constant byte address 0x4 - core index']
  #allocation1 [shape = 'u32[144,128]{1,0:T(1,128)}', space=vmem, size = 0x12000, scoped, tag = 'internal scratch']
  #allocation2 [shape = 'f32[16,128]{1,0:T(8,128)}', space=vmem, size = 0x2000, scoped, tag = 'scratch operand']
  %s0 = inlined_call_operand.vmem [shape: bf16[16,128], index: 0, kind: input, shape index: {}]
  %s1 = inlined_call_operand.vmem [shape: bf16[128,128], index: 1, kind: input, shape index: {}]
  %s2 = inlined_call_operand.vmem [shape: f32[1,128], index: 2, kind: input, shape index: {}]
  %s3 = inlined_call_operand.vmem [shape: f32[16,128], index: 3, kind: output, shape index: {}]
  %s4 = sld [smem:[#allocation0]]
  $region30: #{gpt_forward.23} parent=0
    _
  %s6 = ssub.s32 1, %s4
  %s7 = scalar_select 0, %s6, %s4
  // Predicated region
  $region2: #{gpt_forward.23} parent=0 // pred_check
    _
  $region3: #{gpt_forward.23} parent=0 // pred_check_branch
    %9 = sbr.rel (0) target = $region5
  $region4: #{gpt_forward.23} parent=0 // pred_region
    _
  $region5: #{gpt_forward.23} parent=0 // pred_fallthru
    _
  // Predicated region
  $region6: #{gpt_forward.23} parent=0 // pred_check
    _
  $region7: #{gpt_forward.23} parent=0 // pred_check_branch
    %11 = sbr.rel (0) target = $region9
  $region8: #{gpt_forward.23} parent=0 // pred_region
    _
  $region9: #{gpt_forward.23} parent=0 // pred_fallthru
    _
  // Predicated region
  $region10: #{gpt_forward.23} parent=0 // pred_check
    _
  $region11: #{gpt_forward.23} parent=0 // pred_check_branch
    %13 = sbr.rel (0) target = $region13
  $region12: #{gpt_forward.23} parent=0 // pred_region
    _
  $region13: #{gpt_forward.23} parent=0 // pred_fallthru
    _
  %p15 = scmp.eq.s32.totalorder 0, 0
  // Predicated region
  $region14: #{gpt_forward.23} parent=0 // pred_check
    %p16 = pneg %p15
  $region15: #{gpt_forward.23} parent=0 // pred_check_branch
    %18 = sbr.rel (%p16) target = $region17
  $region16: #{gpt_forward.23} parent=0 // pred_region
    %19 = vst [vmem:[#allocation2] sm:$0xff] 0.0
    %20 = vst [vmem:[#allocation2 + $0x8] sm:$0xff] 0.0
  $region17: #{gpt_forward.23} parent=0 // pred_fallthru
    _
  %v21 = vld [vmem:[#allocation2] sm:$0xff]
  %v22 = vld [vmem:[#allocation2 + $0x8] sm:$0xff]
  %v23 = vld [vmem:[%s0] sm:$0xf]
  %v24 = vld [vmem:[%s0 + $0x4] sm:$0xf]
  %v25 = vld [vmem:[%s1] sm:$0xf]
  %v26 = vld [vmem:[%s1 + $0x4] sm:$0xf]
  %v27 = vld [vmem:[%s1 + $0x8] sm:$0xf]
  %v28 = vld [vmem:[%s1 + $0xc] sm:$0xf]
  %v29 = vld [vmem:[%s1 + $0x10] sm:$0xf]
  %v30 = vld [vmem:[%s1 + $0x14] sm:$0xf]
  %v31 = vld [vmem:[%s1 + $0x18] sm:$0xf]
  %v32 = vld [vmem:[%s1 + $0x1c] sm:$0xf]
  %v33 = vld [vmem:[%s1 + $0x20] sm:$0xf]
  %v34 = vld [vmem:[%s1 + $0x24] sm:$0xf]
  %v35 = vld [vmem:[%s1 + $0x28] sm:$0xf]
  %v36 = vld [vmem:[%s1 + $0x2c] sm:$0xf]
  %v37 = vld [vmem:[%s1 + $0x30] sm:$0xf]
  %v38 = vld [vmem:[%s1 + $0x34] sm:$0xf]
  %v39 = vld [vmem:[%s1 + $0x38] sm:$0xf]
  %v40 = vld [vmem:[%s1 + $0x3c] sm:$0xf]
  %v43 = vunpack.c.l.b16 %v23
  %v44 = vunpack.c.l.b16 %v24
  %v45 = vpack.c.b16 %v44, %v43
  %v63 = vunpack.c.l.b16 %v25
  %v64 = vunpack.c.l.b16 %v26
  %v65 = vunpack.c.l.b16 %v27
  %v66 = vunpack.c.l.b16 %v28
  %v67 = vunpack.c.l.b16 %v29
  %v68 = vunpack.c.l.b16 %v30
  %v69 = vunpack.c.l.b16 %v31
  %v70 = vunpack.c.l.b16 %v32
  %v71 = vunpack.c.l.b16 %v33
  %v72 = vunpack.c.l.b16 %v34
  %v73 = vunpack.c.l.b16 %v35
  %v74 = vunpack.c.l.b16 %v36
  %v75 = vunpack.c.l.b16 %v37
  %v76 = vunpack.c.l.b16 %v38
  %v77 = vunpack.c.l.b16 %v39
  %v78 = vunpack.c.l.b16 %v40
  %v79 = vpack.c.b16 %v64, %v63
  %v80 = vpack.c.b16 %v66, %v65
  %v81 = vpack.c.b16 %v68, %v67
  %v82 = vpack.c.b16 %v70, %v69
  %v83 = vpack.c.b16 %v72, %v71
  %v84 = vpack.c.b16 %v74, %v73
  %v85 = vpack.c.b16 %v76, %v75
  %v86 = vpack.c.b16 %v78, %v77
  %95 = vmatprep.subr.bf16.mxu0 0
  %96 = vmatpush1.bf16.msra.mxu0 %v86
  %97 = vmatprep.subr.bf16.mxu0 0
  %98 = vmatpush1.bf16.msra.mxu0 %v85
  %99 = vmatprep.subr.bf16.mxu0 0
  %100 = vmatpush1.bf16.msra.mxu0 %v84
  %101 = vmatprep.subr.bf16.mxu0 0
  %102 = vmatpush1.bf16.msra.mxu0 %v83
  %103 = vmatprep.subr.bf16.mxu0 0
  %104 = vmatpush1.bf16.msra.mxu0 %v82
  %105 = vmatprep.subr.bf16.mxu0 0
  %106 = vmatpush1.bf16.msra.mxu0 %v81
  %107 = vmatprep.subr.bf16.mxu0 0
  %108 = vmatpush1.bf16.msra.mxu0 %v80
  %109 = vmatprep.subr.bf16.mxu0 0
  %110 = vmatpush1.bf16.msra.mxu0 %v79
  %111 = vmatprep.subr.bf16.mxu0 0
  %112 = vmatpush2.bf16.msra.mxu0 0
  %113 = vmatprep.subr.bf16.mxu0 0
  %114 = vmatpush2.bf16.msra.mxu0 0
  %115 = vmatprep.subr.bf16.mxu0 0
  %116 = vmatpush2.bf16.msra.mxu0 0
  %117 = vmatprep.subr.bf16.mxu0 0
  %118 = vmatpush2.bf16.msra.mxu0 0
  %119 = vmatprep.subr.bf16.mxu0 0
  %120 = vmatpush2.bf16.msra.mxu0 0
  %121 = vmatprep.subr.bf16.mxu0 0
  %122 = vmatpush2.bf16.msra.mxu0 0
  %123 = vmatprep.subr.bf16.mxu0 0
  %124 = vmatpush2.bf16.msra.mxu0 0
  %125 = vmatprep.subr.bf16.mxu0 0
  %126 = vmatpush2.bf16.msra.mxu0 0
  %127 = vmatprep.mubr.bf16.mxu0 0
  %128 = vmatmul.mubr.bf16.gmra.mxu0 %v45
  %v129 = vpop.f32.mrf.mxu0
  %v130 = vadd.f32 0.0, %v129
  %v131 = vpop.f32.mrf.mxu0
  %v132 = vpop.f32.mrf.mxu0
  %v133 = vadd.f32 0.0, %v132
  %v134 = vpop.f32.mrf.mxu0
  %135 = vdwg.mxu0
  %v136 = vadd.f32 %v21, %v130
  %v137 = vadd.f32 %v22, %v133
  %138 = vst [vmem:[#allocation2] sm:$0xff] %v136
  %139 = vst [vmem:[#allocation2 + $0x8] sm:$0xff] %v137
  // Predicated region
  $region18: #{gpt_forward.23} parent=0 // pred_check
    %p140 = pneg %p15
  $region19: #{gpt_forward.23} parent=0 // pred_check_branch
    %142 = sbr.rel (%p140) target = $region21
  $region20: #{gpt_forward.23} parent=0 // pred_region
    %v143 = vld [vmem:[#allocation2] sm:$0xff]
    %v144 = vld [vmem:[#allocation2 + $0x8] sm:$0xff]
    %v145 = vld [vmem:[%s2] sm:$0x1]
    %v147 = vlaneseq
    %v148 = vshrl.u32 %v147, 7
    %v149 = vsub.s32 0, %v148
    %v150 = vrot.slane %v145, %v149
    %v152 = vadd.f32 %v143, %v150
    %v153 = vadd.f32 %v144, %v150
    %154 = vst [vmem:[%s3] sm:$0xff] %v152
    %155 = vst [vmem:[%s3 + $0x8] sm:$0xff] %v153
  $region21: #{gpt_forward.23} parent=0 // pred_fallthru
    _
  // Predicated region
  $region22: #{gpt_forward.23} parent=0 // pred_check
    _
  $region23: #{gpt_forward.23} parent=0 // pred_check_branch
    %157 = sbr.rel (0) target = $region25
  $region24: #{gpt_forward.23} parent=0 // pred_region
    _
  $region25: #{gpt_forward.23} parent=0 // pred_fallthru
    _
  // Predicated region
  $region26: #{gpt_forward.23} parent=0 // pred_check
    _
  $region27: #{gpt_forward.23} parent=0 // pred_check_branch
    %159 = sbr.rel (0) target = $region29
  $region28: #{gpt_forward.23} parent=0 // pred_region
    _
  $region29: #{gpt_forward.23} parent=0 // pred_fallthru
    _

// kernel: gpt_forward.22
$region0: #{gpt_forward.22}
  #allocation0 [shape = 'u32[]', space=smem, size = 0x4, offset = 0x4, fixed_abs, tag = 'smem constant byte address 0x4 - core index']
  #allocation1 [shape = 'u32[144,128]{1,0:T(1,128)}', space=vmem, size = 0x12000, scoped, tag = 'internal scratch']
  %s0 = inlined_call_operand.vmem [shape: bf16[16,128], index: 0, kind: input, shape index: {}]
  %s1 = inlined_call_operand.vmem [shape: f32[1,128], index: 1, kind: input, shape index: {}]
  %s2 = inlined_call_operand.vmem [shape: f32[1,128], index: 2, kind: input, shape index: {}]
  %s3 = inlined_call_operand.vmem [shape: bf16[16,128], index: 3, kind: output, shape index: {}]
  %s4 = sld [smem:[#allocation0]]
  $region22: #{gpt_forward.22} parent=0
    _
  %s6 = ssub.s32 1, %s4
  %s7 = scalar_select 0, %s6, %s4
  // Predicated region
  $region2: #{gpt_forward.22} parent=0 // pred_check
    _
  $region3: #{gpt_forward.22} parent=0 // pred_check_branch
    %9 = sbr.rel (0) target = $region5
  $region4: #{gpt_forward.22} parent=0 // pred_region
    _
  $region5: #{gpt_forward.22} parent=0 // pred_fallthru
    _
  // Predicated region
  $region6: #{gpt_forward.22} parent=0 // pred_check
    _
  $region7: #{gpt_forward.22} parent=0 // pred_check_branch
    %11 = sbr.rel (0) target = $region9
  $region8: #{gpt_forward.22} parent=0 // pred_region
    _
  $region9: #{gpt_forward.22} parent=0 // pred_fallthru
    _
  // Predicated region
  $region10: #{gpt_forward.22} parent=0 // pred_check
    _
  $region11: #{gpt_forward.22} parent=0 // pred_check_branch
    %13 = sbr.rel (0) target = $region13
  $region12: #{gpt_forward.22} parent=0 // pred_region
    _
  $region13: #{gpt_forward.22} parent=0 // pred_fallthru
    _
  %v14 = vld [vmem:[%s0] sm:$0xf]
  %v15 = vld [vmem:[%s0 + $0x4] sm:$0xf]
  %v16 = vunpack.c.l.bf16 %v14
  %v17 = vunpack.c.l.bf16 %v15
  %v18 = vld [vmem:[%s1] sm:$0x1]
  %v19 = vld [vmem:[%s2] sm:$0x1]
  %v20 = vlaneseq
  %v21 = vand.u32 %v20, 127
  %vm22 = vcmp.lt.s32.totalorder %v21, 32
  %v23 = vsel %vm22, 1, 0
  %v24 = vcvt.s32.f32 %v23
  %v25 = vmul.f32 %v16, %v24
  %v26 = vmul.f32 %v17, %v24
  %27 = vadd.xlane.f32.xlu0 %v25
  %v28 = vpop.xlane.xlu0 %27
  %29 = vadd.xlane.f32.xlu0 %v26
  %v30 = vpop.xlane.xlu0 %29
  %v31 = vmul.f32 %v28, 0.03125
  %v32 = vmul.f32 %v30, 0.03125
  %v33 = vsub.f32 %v25, %v31
  %v34 = vsub.f32 %v26, %v32
  %v35 = vmul.f32 %v33, %v24
  %v36 = vmul.f32 %v34, %v24
  %v37 = vmul.f32 %v35, %v35
  %v38 = vmul.f32 %v36, %v36
  %39 = vadd.xlane.f32.xlu0 %v37
  %v40 = vpop.xlane.xlu0 %39
  %41 = vadd.xlane.f32.xlu0 %v38
  %v42 = vpop.xlane.xlu0 %41
  %v43 = vmul.f32 %v40, 0.03125
  %v44 = vmul.f32 %v42, 0.03125
  %v45 = vadd.f32 %v43, 1e-05
  %v46 = vadd.f32 %v44, 1e-05
  %v47 = vrsqrt.pop %v45
  %v48 = vrsqrt.pop %v46
  %v49 = vmul.f32 %v35, %v47
  %v50 = vmul.f32 %v36, %v48
  %v52 = vlaneseq
  %v53 = vshrl.u32 %v52, 7
  %v54 = vsub.s32 0, %v53
  %v55 = vrot.slane %v18, %v54
  %v57 = vmul.f32 %v49, %v55
  %v58 = vmul.f32 %v50, %v55
  %v60 = vlaneseq
  %v61 = vshrl.u32 %v60, 7
  %v62 = vsub.s32 0, %v61
  %v63 = vrot.slane %v19, %v62
  %v65 = vadd.f32 %v57, %v63
  %v66 = vadd.f32 %v58, %v63
  %v67 = vpack.c.bf16 %v66, %v65
  %v69 = vunpack.c.l.b16 %v67
  %v70 = vunpack.c.h.b16 %v67
  %v71 = vpack.c.b16 %v69, %v69
  %v72 = vpack.c.b16 %v70, %v70
  %75 = vst [vmem:[%s3] sm:$0xf] %v71
  %76 = vst [vmem:[%s3 + $0x4] sm:$0xf] %v72
  // Predicated region
  $region14: #{gpt_forward.22} parent=0 // pred_check
    _
  $region15: #{gpt_forward.22} parent=0 // pred_check_branch
    %78 = sbr.rel (0) target = $region17
  $region16: #{gpt_forward.22} parent=0 // pred_region
    _
  $region17: #{gpt_forward.22} parent=0 // pred_fallthru
    _
  // Predicated region
  $region18: #{gpt_forward.22} parent=0 // pred_check
    _
  $region19: #{gpt_forward.22} parent=0 // pred_check_branch
    %80 = sbr.rel (0) target = $region21
  $region20: #{gpt_forward.22} parent=0 // pred_region
    _
  $region21: #{gpt_forward.22} parent=0 // pred_fallthru
    _

</llo_original>
